<compile_context>
chip_gen: v6e
topology: v6e:2x2x1
jax: 0.10.0
libtpu: 0.0.40
codegen_flags: <defaults>
</compile_context>

<pallas_src>
import jax
import jax.numpy as jnp
from jax.experimental import pallas as pl
from jax.experimental.pallas import tpu as pltpu


LANE = 128      # pad conv output-channel dim to a full lane width
SUBLANE = 8     # pad contraction (K) dims to a sublane multiple


# ----------------------------- Pallas kernels ------------------------------

def _conv_pool_kernel(p_ref, w_ref, b_ref, o_ref):
    """Fused conv (im2col matmul over the 4 pool phases) + bias + ReLU + pool.

    p_ref: (1, 4, M, Kp)   w_ref: (Kp, OCp)   b_ref: (1, OCp)   o_ref: (1, M, OCp)
    """
    w = w_ref[...]
    y0 = jnp.dot(p_ref[0, 0], w, preferred_element_type=jnp.float32)
    y1 = jnp.dot(p_ref[0, 1], w, preferred_element_type=jnp.float32)
    y2 = jnp.dot(p_ref[0, 2], w, preferred_element_type=jnp.float32)
    y3 = jnp.dot(p_ref[0, 3], w, preferred_element_type=jnp.float32)
    y = jnp.maximum(jnp.maximum(y0, y1), jnp.maximum(y2, y3))
    y = jnp.maximum(y + b_ref[...], 0.0)
    o_ref[0] = y.astype(o_ref.dtype)


def _dual_conv_pool_add_kernel(p_ref, w1_ref, b1_ref, w2_ref, b2_ref, o_ref):
    """Both C2 branches on shared patches: (conv+ReLU+pool) x2, then add."""
    def branch(w, b):
        y0 = jnp.dot(p_ref[0, 0], w, preferred_element_type=jnp.float32)
        y1 = jnp.dot(p_ref[0, 1], w, preferred_element_type=jnp.float32)
        y2 = jnp.dot(p_ref[0, 2], w, preferred_element_type=jnp.float32)
        y3 = jnp.dot(p_ref[0, 3], w, preferred_element_type=jnp.float32)
        y = jnp.maximum(jnp.maximum(y0, y1), jnp.maximum(y2, y3))
        return jnp.maximum(y + b, 0.0)

    out = branch(w1_ref[...], b1_ref[...]) + branch(w2_ref[...], b2_ref[...])
    o_ref[0] = out.astype(o_ref.dtype)


def _tail_kernel(x_ref, w3_ref, b3_ref, w4_ref, b4_ref, w5_ref, b5_ref, o_ref):
    """Fused C3 (5x5 conv over 5x5 input == matmul) + F4 (linear+ReLU)
    + F5 (linear+log_softmax)."""
    h = jnp.dot(x_ref[...], w3_ref[...], preferred_element_type=jnp.float32) + b3_ref[...]
    h = jnp.maximum(h, 0.0)
    h = jnp.dot(h, w4_ref[...], preferred_element_type=jnp.float32) + b4_ref[...]
    h = jnp.maximum(h, 0.0)
    y = jnp.dot(h, w5_ref[...], preferred_element_type=jnp.float32) + b5_ref[...]
    m = jnp.max(y, axis=-1, keepdims=True)
    lse = jnp.log(jnp.sum(jnp.exp(y - m), axis=-1, keepdims=True)) + m
    o_ref[...] = (y - lse).astype(o_ref.dtype)


# ----------------------------- Pallas wrappers ------------------------------

def _full_spec(shape):
    nd = len(shape)
    return pl.BlockSpec(shape, lambda: (0,) * nd)


_GRID_PARAMS = pltpu.CompilerParams(
    dimension_semantics=("parallel",),          # shard batch across TCs on v7x
    vmem_limit_bytes=32 * 1024 * 1024,
)
_NOGRID_PARAMS = pltpu.CompilerParams(vmem_limit_bytes=32 * 1024 * 1024)


def conv_relu_pool(patches, w, b):
    N, P, M, Kp = patches.shape
    OCp = w.shape[1]
    return pl.pallas_call(
        _conv_pool_kernel,
        out_shape=jax.ShapeDtypeStruct((N, M, OCp), patches.dtype),
        grid=(N,),
        in_specs=[
            pl.BlockSpec((1, P, M, Kp), lambda i: (i, 0, 0, 0)),
            pl.BlockSpec((Kp, OCp), lambda i: (0, 0)),
            pl.BlockSpec((1, OCp), lambda i: (0, 0)),
        ],
        out_specs=pl.BlockSpec((1, M, OCp), lambda i: (i, 0, 0)),
        compiler_params=_GRID_PARAMS,
    )(patches, w, b)


def dual_conv_relu_pool_add(patches, w1, b1, w2, b2):
    N, P, M, Kp = patches.shape
    OCp = w1.shape[1]
    return pl.pallas_call(
        _dual_conv_pool_add_kernel,
        out_shape=jax.ShapeDtypeStruct((N, M, OCp), patches.dtype),
        grid=(N,),
        in_specs=[
            pl.BlockSpec((1, P, M, Kp), lambda i: (i, 0, 0, 0)),
            pl.BlockSpec((Kp, OCp), lambda i: (0, 0)),
            pl.BlockSpec((1, OCp), lambda i: (0, 0)),
            pl.BlockSpec((Kp, OCp), lambda i: (0, 0)),
            pl.BlockSpec((1, OCp), lambda i: (0, 0)),
        ],
        out_specs=pl.BlockSpec((1, M, OCp), lambda i: (i, 0, 0)),
        compiler_params=_GRID_PARAMS,
    )(patches, w1, b1, w2, b2)


def tail_fused(x, w3, b3, w4, b4, w5, b5):
    N = x.shape[0]
    NC = w5.shape[1]
    args = (x, w3, b3, w4, b4, w5, b5)
    return pl.pallas_call(
        _tail_kernel,
        out_shape=jax.ShapeDtypeStruct((N, NC), x.dtype),
        in_specs=[_full_spec(a.shape) for a in args],
        out_specs=_full_spec((N, NC)),
        compiler_params=_NOGRID_PARAMS,
    )(*args)


# ------------------------------ JAX glue code -------------------------------

def _round_up(x, m):
    return ((x + m - 1) // m) * m


def _pool_phase_patches(x, kh, kw, k_pad):
    """x: (N,H,W,C) NHWC -> (N, 4, PH*PW, k_pad) im2col patches, one slab per
    2x2-maxpool phase; stride-1 valid conv; columns ordered (kh, kw, c)."""
    N, H, W, C = x.shape
    oh, ow = H - kh + 1, W - kw + 1
    ph, pw = oh // 2, ow // 2
    phases = []
    for di in (0, 1):
        for dj in (0, 1):
            cols = [
                x[:, di + ki: di + ki + 2 * ph: 2, dj + kj: dj + kj + 2 * pw: 2, :]
                for ki in range(kh) for kj in range(kw)
            ]
            p = jnp.stack(cols, axis=3)                   # (N, PH, PW, KH*KW, C)
            phases.append(p.reshape(N, ph * pw, kh * kw * C))
    patches = jnp.stack(phases, axis=1)                   # (N, 4, PH*PW, K)
    K = kh * kw * C
    if k_pad > K:
        patches = jnp.pad(patches, ((0, 0), (0, 0), (0, 0), (0, k_pad - K)))
    return patches, (N, ph, pw)


def _prep_conv_w(w_ochw, k_pad, oc_pad):
    OC, C, KH, KW = w_ochw.shape
    w2d = jnp.transpose(w_ochw, (2, 3, 1, 0)).reshape(KH * KW * C, OC)  # (K, OC), cols (kh,kw,c)
    return jnp.pad(w2d, ((0, k_pad - KH * KW * C), (0, oc_pad - OC)))


def _prep_bias(b, oc_pad):
    return jnp.pad(b, (0, oc_pad - b.shape[0])).reshape(1, oc_pad)


# ------------------------------- Parameters ---------------------------------

def _uniform(key, shape, fan_in):
    bound = 1.0 / jnp.sqrt(jnp.float32(fan_in))
    return jax.random.uniform(key, shape, jnp.float32, -bound, bound)


def init_params(key):
    ks = jax.random.split(key, 12)
    p = {}
    p["c1_w"] = _uniform(ks[0], (6, 1, 5, 5), 1 * 25)
    p["c1_b"] = _uniform(ks[1], (6,), 1 * 25)
    p["c21_w"] = _uniform(ks[2], (16, 6, 5, 5), 6 * 25)
    p["c21_b"] = _uniform(ks[3], (16,), 6 * 25)
    p["c22_w"] = _uniform(ks[4], (16, 6, 5, 5), 6 * 25)
    p["c22_b"] = _uniform(ks[5], (16,), 6 * 25)
    p["c3_w"] = _uniform(ks[6], (120, 16, 5, 5), 16 * 25)
    p["c3_b"] = _uniform(ks[7], (120,), 16 * 25)
    p["f4_w"] = _uniform(ks[8], (120, 84), 120)   # stored (in, out) for x @ w
    p["f4_b"] = _uniform(ks[9], (84,), 120)
    p["f5_w"] = _uniform(ks[10], (84, 10), 84)
    p["f5_b"] = _uniform(ks[11], (10,), 84)
    return p


# ------------------------------- Forward pass --------------------------------

@jax.jit
def lenet5_forward(params, img_nchw):
    """img_nchw: (N, 1, 32, 32) float32 -> (N, 10) log-probabilities."""
    x = jnp.transpose(img_nchw, (0, 2, 3, 1)).astype(jnp.float32)   # NCHW -> NHWC
    N = x.shape[0]

    # ---- C1: conv(1->6, 5x5) + ReLU + 2x2 maxpool (one fused kernel) ----
    k1 = _round_up(25 * 1, SUBLANE)                                  # 25 -> 32
    p1, (_, ph1, pw1) = _pool_phase_patches(x, 5, 5, k1)             # (N,4,196,32)
    w1 = _prep_conv_w(params["c1_w"], k1, LANE)                      # (32,128)
    b1 = _prep_bias(params["c1_b"], LANE)
    y1 = conv_relu_pool(p1, w1, b1)                                  # (N,196,128)
    x1 = y1.reshape(N, ph1, pw1, LANE)[..., :6]                      # (N,14,14,6)

    # ---- C2_1 + C2_2: shared patches, both convs + ReLU + pool + add ----
    k2 = _round_up(25 * 6, SUBLANE)                                  # 150 -> 160
    p2, (_, ph2, pw2) = _pool_phase_patches(x1, 5, 5, k2)            # (N,4,25,160)
    w21 = _prep_conv_w(params["c21_w"], k2, LANE)
    b21 = _prep_bias(params["c21_b"], LANE)
    w22 = _prep_conv_w(params["c22_w"], k2, LANE)
    b22 = _prep_bias(params["c22_b"], LANE)
    y2 = dual_conv_relu_pool_add(p2, w21, b21, w22, b22)             # (N,25,128)
    s = y2[..., :16].reshape(N, ph2 * pw2 * 16)                      # (N,400) in (h,w,c) order

    # ---- Tail: C3 (16->120 conv over full 5x5) + F4 + F5 (one fused kernel) ----
    w3 = _prep_conv_w(params["c3_w"], 400, LANE)                     # (400,128)
    b3 = _prep_bias(params["c3_b"], LANE)
    w4 = jnp.pad(params["f4_w"], ((0, LANE - 120), (0, LANE - 84)))  # (128,128)
    b4 = _prep_bias(params["f4_b"], LANE)
    w5 = jnp.pad(params["f5_w"], ((0, LANE - 84), (0, 0)))           # (128,10)
    b5 = params["f5_b"].reshape(1, 10)
    return tail_fused(s, w3, b3, w4, b4, w5, b5)                     # (N,10)


# ------------------------------ Pure-JAX reference ---------------------------

def _reference_forward(params, img_nchw):
    hp = jax.lax.Precision.HIGHEST
    x = jnp.transpose(img_nchw, (0, 2, 3, 1))

    def conv_relu(x, w, b):
        OC, C, KH, KW = w.shape
        N, H, W, _ = x.shape
        oh, ow = H - KH + 1, W - KW + 1
        cols = [x[:, i:i + oh, j:j + ow, :] for i in range(KH) for j in range(KW)]
        p = jnp.stack(cols, axis=3).reshape(N * oh * ow, KH * KW * C)
        w2 = jnp.transpose(w, (2, 3, 1, 0)).reshape(KH * KW * C, OC)
        y = jnp.maximum(jnp.dot(p, w2, precision=hp) + b, 0.0)
        return y.reshape(N, oh, ow, OC)

    def pool(x):
        return jnp.maximum(jnp.maximum(x[:, 0::2, 0::2, :], x[:, 0::2, 1::2, :]),
                           jnp.maximum(x[:, 1::2, 0::2, :], x[:, 1::2, 1::2, :]))

    h = pool(conv_relu(x, params["c1_w"], params["c1_b"]))
    b1 = pool(conv_relu(h, params["c21_w"], params["c21_b"]))
    b2 = pool(conv_relu(h, params["c22_w"], params["c22_b"]))
    s = b1 + b2
    c3 = conv_relu(s, params["c3_w"], params["c3_b"]).reshape(img_nchw.shape[0], 120)
    f4 = jnp.maximum(jnp.dot(c3, params["f4_w"], precision=hp) + params["f4_b"], 0.0)
    y = jnp.dot(f4, params["f5_w"], precision=hp) + params["f5_b"]
    return jax.nn.log_softmax(y, axis=-1)


# --------------------------------- Driver ------------------------------------

if __name__ == "__main__":
    # LeNet5 requires 32x32 single-channel input for the flatten-to-120 to hold.
    root = jax.random.PRNGKey(0)
    k_img, k_par = jax.random.split(root)
    img = jax.random.normal(k_img, (2, 1, 32, 32), dtype=jnp.float32)
    params = init_params(k_par)

    out = jax.block_until_ready(lenet5_forward(params, img))

    assert out.shape == (2, 10), out.shape
    # log-softmax rows must exponentiate-sum to ~1
    assert bool(jnp.allclose(jnp.exp(out).sum(axis=-1), 1.0, atol=1e-4))
    # match the pure-JAX reference
    ref = _reference_forward(params, img)
    assert bool(jnp.allclose(out, ref, atol=1e-2)), float(jnp.abs(out - ref).max())

    print("KERNEL_OK")
</pallas_src>

<mosaic_0001>
module attributes {stable_mosaic.version = 11 : i64} {
  func.func @_conv_pool_kernel(%arg0: i32, %arg1: memref<1x4x196x32xf32, #tpu.memory_space<vmem>>, %arg2: memref<32x128xf32, #tpu.memory_space<vmem>>, %arg3: memref<1x128xf32, #tpu.memory_space<vmem>>, %arg4: memref<1x196x128xf32, #tpu.memory_space<vmem>>) attributes {dimension_semantics = [#tpu.dimension_semantics<parallel>], iteration_bounds = array<i64: 2>, scalar_prefetch = 0 : i64, scratch_operands = 0 : i64, tpu.core_type = #tpu.core_type<tc>, window_params = [{transform_indices = @transform_0, window_bounds = array<i64: 1, 4, 196, 32>}, {pipeline_mode = #tpu.pipeline_mode<synchronous>, transform_indices = @transform_1, window_bounds = array<i64: 32, 128>}, {pipeline_mode = #tpu.pipeline_mode<synchronous>, transform_indices = @transform_2, window_bounds = array<i64: 1, 128>}, {transform_indices = @transform_3, window_bounds = array<i64: 1, 196, 128>}]} {
    %c0 = arith.constant 0 : index
    %c0_0 = arith.constant 0 : index
    %0 = vector.load %arg2[%c0, %c0_0] : memref<32x128xf32, #tpu.memory_space<vmem>>, vector<32x128xf32>
    %c0_1 = arith.constant 0 : index
    %c0_2 = arith.constant 0 : index
    %c0_3 = arith.constant 0 : index
    %c0_4 = arith.constant 0 : index
    %1 = vector.load %arg1[%c0_1, %c0_2, %c0_3, %c0_4] : memref<1x4x196x32xf32, #tpu.memory_space<vmem>>, vector<1x1x196x32xf32>
    %2 = vector.shape_cast %1 : vector<1x1x196x32xf32> to vector<196x32xf32>
    %cst = arith.constant dense<0.000000e+00> : vector<196x128xf32>
    %3 = tpu.matmul %2, %0, %cst {dimension_numbers = #tpu.dot_dimension_numbers<[1], [0], [0], [1], [0, 0, 1, 1], [], []>} : vector<196x32xf32>, vector<32x128xf32>, vector<196x128xf32> -> vector<196x128xf32>
    %c0_5 = arith.constant 0 : index
    %c1 = arith.constant 1 : index
    %c0_6 = arith.constant 0 : index
    %c0_7 = arith.constant 0 : index
    %4 = vector.load %arg1[%c0_5, %c1, %c0_6, %c0_7] : memref<1x4x196x32xf32, #tpu.memory_space<vmem>>, vector<1x1x196x32xf32>
    %5 = vector.shape_cast %4 : vector<1x1x196x32xf32> to vector<196x32xf32>
    %cst_8 = arith.constant dense<0.000000e+00> : vector<196x128xf32>
    %6 = tpu.matmul %5, %0, %cst_8 {dimension_numbers = #tpu.dot_dimension_numbers<[1], [0], [0], [1], [0, 0, 1, 1], [], []>} : vector<196x32xf32>, vector<32x128xf32>, vector<196x128xf32> -> vector<196x128xf32>
    %c0_9 = arith.constant 0 : index
    %c2 = arith.constant 2 : index
    %c0_10 = arith.constant 0 : index
    %c0_11 = arith.constant 0 : index
    %7 = vector.load %arg1[%c0_9, %c2, %c0_10, %c0_11] : memref<1x4x196x32xf32, #tpu.memory_space<vmem>>, vector<1x1x196x32xf32>
    %8 = vector.shape_cast %7 : vector<1x1x196x32xf32> to vector<196x32xf32>
    %cst_12 = arith.constant dense<0.000000e+00> : vector<196x128xf32>
    %9 = tpu.matmul %8, %0, %cst_12 {dimension_numbers = #tpu.dot_dimension_numbers<[1], [0], [0], [1], [0, 0, 1, 1], [], []>} : vector<196x32xf32>, vector<32x128xf32>, vector<196x128xf32> -> vector<196x128xf32>
    %c0_13 = arith.constant 0 : index
    %c3 = arith.constant 3 : index
    %c0_14 = arith.constant 0 : index
    %c0_15 = arith.constant 0 : index
    %10 = vector.load %arg1[%c0_13, %c3, %c0_14, %c0_15] : memref<1x4x196x32xf32, #tpu.memory_space<vmem>>, vector<1x1x196x32xf32>
    %11 = vector.shape_cast %10 : vector<1x1x196x32xf32> to vector<196x32xf32>
    %cst_16 = arith.constant dense<0.000000e+00> : vector<196x128xf32>
    %12 = tpu.matmul %11, %0, %cst_16 {dimension_numbers = #tpu.dot_dimension_numbers<[1], [0], [0], [1], [0, 0, 1, 1], [], []>} : vector<196x32xf32>, vector<32x128xf32>, vector<196x128xf32> -> vector<196x128xf32>
    %13 = arith.maximumf %3, %6 : vector<196x128xf32>
    %14 = arith.maximumf %9, %12 : vector<196x128xf32>
    %15 = arith.maximumf %13, %14 : vector<196x128xf32>
    %c0_17 = arith.constant 0 : index
    %c0_18 = arith.constant 0 : index
    %16 = vector.load %arg3[%c0_17, %c0_18] : memref<1x128xf32, #tpu.memory_space<vmem>>, vector<1x128xf32>
    %17 = vector.broadcast %16 : vector<1x128xf32> to vector<196x128xf32>
    %18 = arith.addf %15, %17 : vector<196x128xf32>
    %cst_19 = arith.constant 0.000000e+00 : f32
    %19 = vector.broadcast %cst_19 : f32 to vector<196x128xf32>
    %20 = arith.maximumf %18, %19 : vector<196x128xf32>
    %c0_20 = arith.constant 0 : index
    %c0_21 = arith.constant 0 : index
    %c0_22 = arith.constant 0 : index
    %21 = vector.load %arg4[%c0_20, %c0_21, %c0_22] : memref<1x196x128xf32, #tpu.memory_space<vmem>>, vector<1x196x128xf32>
    %22 = vector.shape_cast %21 : vector<1x196x128xf32> to vector<196x128xf32>
    %23 = vector.shape_cast %20 : vector<196x128xf32> to vector<1x196x128xf32>
    tpu.vector_store %arg4[%c0_20, %c0_21, %c0_22], %23 {strides = array<i32>} : memref<1x196x128xf32, #tpu.memory_space<vmem>>, vector<1x196x128xf32>,
    return
  }
  func.func @transform_0(%arg0: i32) -> (i32, i32, i32, i32) {
    %c0_i32 = arith.constant 0 : i32
    %c0_i32_0 = arith.constant 0 : i32
    %c0_i32_1 = arith.constant 0 : i32
    %c0_i32_2 = arith.constant 0 : i32
    return %arg0, %c0_i32, %c0_i32_0, %c0_i32_1 : i32, i32, i32, i32
  }
  func.func @transform_1(%arg0: i32) -> (i32, i32) {
    %c0_i32 = arith.constant 0 : i32
    %c0_i32_0 = arith.constant 0 : i32
    %c0_i32_1 = arith.constant 0 : i32
    return %c0_i32, %c0_i32_0 : i32, i32
  }
  func.func @transform_2(%arg0: i32) -> (i32, i32) {
    %c0_i32 = arith.constant 0 : i32
    %c0_i32_0 = arith.constant 0 : i32
    %c0_i32_1 = arith.constant 0 : i32
    return %c0_i32, %c0_i32_0 : i32, i32
  }
  func.func @transform_3(%arg0: i32) -> (i32, i32, i32) {
    %c0_i32 = arith.constant 0 : i32
    %c0_i32_0 = arith.constant 0 : i32
    %c0_i32_1 = arith.constant 0 : i32
    return %arg0, %c0_i32, %c0_i32_0 : i32, i32, i32
  }
}

module attributes {stable_mosaic.version = 11 : i64} {
  func.func @_dual_conv_pool_add_kernel(%arg0: i32, %arg1: memref<1x4x25x152xf32, #tpu.memory_space<vmem>>, %arg2: memref<152x128xf32, #tpu.memory_space<vmem>>, %arg3: memref<1x128xf32, #tpu.memory_space<vmem>>, %arg4: memref<152x128xf32, #tpu.memory_space<vmem>>, %arg5: memref<1x128xf32, #tpu.memory_space<vmem>>, %arg6: memref<1x25x128xf32, #tpu.memory_space<vmem>>) attributes {dimension_semantics = [#tpu.dimension_semantics<parallel>], iteration_bounds = array<i64: 2>, scalar_prefetch = 0 : i64, scratch_operands = 0 : i64, tpu.core_type = #tpu.core_type<tc>, window_params = [{transform_indices = @transform_0, window_bounds = array<i64: 1, 4, 25, 152>}, {pipeline_mode = #tpu.pipeline_mode<synchronous>, transform_indices = @transform_1, window_bounds = array<i64: 152, 128>}, {pipeline_mode = #tpu.pipeline_mode<synchronous>, transform_indices = @transform_2, window_bounds = array<i64: 1, 128>}, {pipeline_mode = #tpu.pipeline_mode<synchronous>, transform_indices = @transform_3, window_bounds = array<i64: 152, 128>}, {pipeline_mode = #tpu.pipeline_mode<synchronous>, transform_indices = @transform_4, window_bounds = array<i64: 1, 128>}, {transform_indices = @transform_5, window_bounds = array<i64: 1, 25, 128>}]} {
    %c0 = arith.constant 0 : index
    %c0_0 = arith.constant 0 : index
    %0 = vector.load %arg2[%c0, %c0_0] : memref<152x128xf32, #tpu.memory_space<vmem>>, vector<152x128xf32>
    %c0_1 = arith.constant 0 : index
    %c0_2 = arith.constant 0 : index
    %1 = vector.load %arg3[%c0_1, %c0_2] : memref<1x128xf32, #tpu.memory_space<vmem>>, vector<1x128xf32>
    %c0_3 = arith.constant 0 : index
    %c0_4 = arith.constant 0 : index
    %c0_5 = arith.constant 0 : index
    %c0_6 = arith.constant 0 : index
    %2 = vector.load %arg1[%c0_3, %c0_4, %c0_5, %c0_6] : memref<1x4x25x152xf32, #tpu.memory_space<vmem>>, vector<1x1x25x152xf32>
    %3 = vector.shape_cast %2 : vector<1x1x25x152xf32> to vector<25x152xf32>
    %cst = arith.constant dense<0.000000e+00> : vector<25x128xf32>
    %4 = tpu.matmul %3, %0, %cst {dimension_numbers = #tpu.dot_dimension_numbers<[1], [0], [0], [1], [0, 0, 1, 1], [], []>} : vector<25x152xf32>, vector<152x128xf32>, vector<25x128xf32> -> vector<25x128xf32>
    %c0_7 = arith.constant 0 : index
    %c1 = arith.constant 1 : index
    %c0_8 = arith.constant 0 : index
    %c0_9 = arith.constant 0 : index
    %5 = vector.load %arg1[%c0_7, %c1, %c0_8, %c0_9] : memref<1x4x25x152xf32, #tpu.memory_space<vmem>>, vector<1x1x25x152xf32>
    %6 = vector.shape_cast %5 : vector<1x1x25x152xf32> to vector<25x152xf32>
    %cst_10 = arith.constant dense<0.000000e+00> : vector<25x128xf32>
    %7 = tpu.matmul %6, %0, %cst_10 {dimension_numbers = #tpu.dot_dimension_numbers<[1], [0], [0], [1], [0, 0, 1, 1], [], []>} : vector<25x152xf32>, vector<152x128xf32>, vector<25x128xf32> -> vector<25x128xf32>
    %c0_11 = arith.constant 0 : index
    %c2 = arith.constant 2 : index
    %c0_12 = arith.constant 0 : index
    %c0_13 = arith.constant 0 : index
    %8 = vector.load %arg1[%c0_11, %c2, %c0_12, %c0_13] : memref<1x4x25x152xf32, #tpu.memory_space<vmem>>, vector<1x1x25x152xf32>
    %9 = vector.shape_cast %8 : vector<1x1x25x152xf32> to vector<25x152xf32>
    %cst_14 = arith.constant dense<0.000000e+00> : vector<25x128xf32>
    %10 = tpu.matmul %9, %0, %cst_14 {dimension_numbers = #tpu.dot_dimension_numbers<[1], [0], [0], [1], [0, 0, 1, 1], [], []>} : vector<25x152xf32>, vector<152x128xf32>, vector<25x128xf32> -> vector<25x128xf32>
    %c0_15 = arith.constant 0 : index
    %c3 = arith.constant 3 : index
    %c0_16 = arith.constant 0 : index
    %c0_17 = arith.constant 0 : index
    %11 = vector.load %arg1[%c0_15, %c3, %c0_16, %c0_17] : memref<1x4x25x152xf32, #tpu.memory_space<vmem>>, vector<1x1x25x152xf32>
    %12 = vector.shape_cast %11 : vector<1x1x25x152xf32> to vector<25x152xf32>
    %cst_18 = arith.constant dense<0.000000e+00> : vector<25x128xf32>
    %13 = tpu.matmul %12, %0, %cst_18 {dimension_numbers = #tpu.dot_dimension_numbers<[1], [0], [0], [1], [0, 0, 1, 1], [], []>} : vector<25x152xf32>, vector<152x128xf32>, vector<25x128xf32> -> vector<25x128xf32>
    %14 = arith.maximumf %4, %7 : vector<25x128xf32>
    %15 = arith.maximumf %10, %13 : vector<25x128xf32>
    %16 = arith.maximumf %14, %15 : vector<25x128xf32>
    %17 = vector.broadcast %1 : vector<1x128xf32> to vector<25x128xf32>
    %18 = arith.addf %16, %17 : vector<25x128xf32>
    %cst_19 = arith.constant 0.000000e+00 : f32
    %19 = vector.broadcast %cst_19 : f32 to vector<25x128xf32>
    %20 = arith.maximumf %18, %19 : vector<25x128xf32>
    %c0_20 = arith.constant 0 : index
    %c0_21 = arith.constant 0 : index
    %21 = vector.load %arg4[%c0_20, %c0_21] : memref<152x128xf32, #tpu.memory_space<vmem>>, vector<152x128xf32>
    %c0_22 = arith.constant 0 : index
    %c0_23 = arith.constant 0 : index
    %22 = vector.load %arg5[%c0_22, %c0_23] : memref<1x128xf32, #tpu.memory_space<vmem>>, vector<1x128xf32>
    %c0_24 = arith.constant 0 : index
    %c0_25 = arith.constant 0 : index
    %c0_26 = arith.constant 0 : index
    %c0_27 = arith.constant 0 : index
    %23 = vector.load %arg1[%c0_24, %c0_25, %c0_26, %c0_27] : memref<1x4x25x152xf32, #tpu.memory_space<vmem>>, vector<1x1x25x152xf32>
    %24 = vector.shape_cast %23 : vector<1x1x25x152xf32> to vector<25x152xf32>
    %cst_28 = arith.constant dense<0.000000e+00> : vector<25x128xf32>
    %25 = tpu.matmul %24, %21, %cst_28 {dimension_numbers = #tpu.dot_dimension_numbers<[1], [0], [0], [1], [0, 0, 1, 1], [], []>} : vector<25x152xf32>, vector<152x128xf32>, vector<25x128xf32> -> vector<25x128xf32>
    %c0_29 = arith.constant 0 : index
    %c1_30 = arith.constant 1 : index
    %c0_31 = arith.constant 0 : index
    %c0_32 = arith.constant 0 : index
    %26 = vector.load %arg1[%c0_29, %c1_30, %c0_31, %c0_32] : memref<1x4x25x152xf32, #tpu.memory_space<vmem>>, vector<1x1x25x152xf32>
    %27 = vector.shape_cast %26 : vector<1x1x25x152xf32> to vector<25x152xf32>
    %cst_33 = arith.constant dense<0.000000e+00> : vector<25x128xf32>
    %28 = tpu.matmul %27, %21, %cst_33 {dimension_numbers = #tpu.dot_dimension_numbers<[1], [0], [0], [1], [0, 0, 1, 1], [], []>} : vector<25x152xf32>, vector<152x128xf32>, vector<25x128xf32> -> vector<25x128xf32>
    %c0_34 = arith.constant 0 : index
    %c2_35 = arith.constant 2 : index
    %c0_36 = arith.constant 0 : index
    %c0_37 = arith.constant 0 : index
    %29 = vector.load %arg1[%c0_34, %c2_35, %c0_36, %c0_37] : memref<1x4x25x152xf32, #tpu.memory_space<vmem>>, vector<1x1x25x152xf32>
    %30 = vector.shape_cast %29 : vector<1x1x25x152xf32> to vector<25x152xf32>
    %cst_38 = arith.constant dense<0.000000e+00> : vector<25x128xf32>
    %31 = tpu.matmul %30, %21, %cst_38 {dimension_numbers = #tpu.dot_dimension_numbers<[1], [0], [0], [1], [0, 0, 1, 1], [], []>} : vector<25x152xf32>, vector<152x128xf32>, vector<25x128xf32> -> vector<25x128xf32>
    %c0_39 = arith.constant 0 : index
    %c3_40 = arith.constant 3 : index
    %c0_41 = arith.constant 0 : index
    %c0_42 = arith.constant 0 : index
    %32 = vector.load %arg1[%c0_39, %c3_40, %c0_41, %c0_42] : memref<1x4x25x152xf32, #tpu.memory_space<vmem>>, vector<1x1x25x152xf32>
    %33 = vector.shape_cast %32 : vector<1x1x25x152xf32> to vector<25x152xf32>
    %cst_43 = arith.constant dense<0.000000e+00> : vector<25x128xf32>
    %34 = tpu.matmul %33, %21, %cst_43 {dimension_numbers = #tpu.dot_dimension_numbers<[1], [0], [0], [1], [0, 0, 1, 1], [], []>} : vector<25x152xf32>, vector<152x128xf32>, vector<25x128xf32> -> vector<25x128xf32>
    %35 = arith.maximumf %25, %28 : vector<25x128xf32>
    %36 = arith.maximumf %31, %34 : vector<25x128xf32>
    %37 = arith.maximumf %35, %36 : vector<25x128xf32>
    %38 = vector.broadcast %22 : vector<1x128xf32> to vector<25x128xf32>
    %39 = arith.addf %37, %38 : vector<25x128xf32>
    %cst_44 = arith.constant 0.000000e+00 : f32
    %40 = vector.broadcast %cst_44 : f32 to vector<25x128xf32>
    %41 = arith.maximumf %39, %40 : vector<25x128xf32>
    %42 = arith.addf %20, %41 : vector<25x128xf32>
    %c0_45 = arith.constant 0 : index
    %c0_46 = arith.constant 0 : index
    %c0_47 = arith.constant 0 : index
    %43 = vector.load %arg6[%c0_45, %c0_46, %c0_47] : memref<1x25x128xf32, #tpu.memory_space<vmem>>, vector<1x25x128xf32>
    %44 = vector.shape_cast %43 : vector<1x25x128xf32> to vector<25x128xf32>
    %45 = vector.shape_cast %42 : vector<25x128xf32> to vector<1x25x128xf32>
    tpu.vector_store %arg6[%c0_45, %c0_46, %c0_47], %45 {strides = array<i32>} : memref<1x25x128xf32, #tpu.memory_space<vmem>>, vector<1x25x128xf32>,
    return
  }
  func.func @transform_0(%arg0: i32) -> (i32, i32, i32, i32) {
    %c0_i32 = arith.constant 0 : i32
    %c0_i32_0 = arith.constant 0 : i32
    %c0_i32_1 = arith.constant 0 : i32
    %c0_i32_2 = arith.constant 0 : i32
    return %arg0, %c0_i32, %c0_i32_0, %c0_i32_1 : i32, i32, i32, i32
  }
  func.func @transform_1(%arg0: i32) -> (i32, i32) {
    %c0_i32 = arith.constant 0 : i32
    %c0_i32_0 = arith.constant 0 : i32
    %c0_i32_1 = arith.constant 0 : i32
    return %c0_i32, %c0_i32_0 : i32, i32
  }
  func.func @transform_2(%arg0: i32) -> (i32, i32) {
    %c0_i32 = arith.constant 0 : i32
    %c0_i32_0 = arith.constant 0 : i32
    %c0_i32_1 = arith.constant 0 : i32
    return %c0_i32, %c0_i32_0 : i32, i32
  }
  func.func @transform_3(%arg0: i32) -> (i32, i32) {
    %c0_i32 = arith.constant 0 : i32
    %c0_i32_0 = arith.constant 0 : i32
    %c0_i32_1 = arith.constant 0 : i32
    return %c0_i32, %c0_i32_0 : i32, i32
  }
  func.func @transform_4(%arg0: i32) -> (i32, i32) {
    %c0_i32 = arith.constant 0 : i32
    %c0_i32_0 = arith.constant 0 : i32
    %c0_i32_1 = arith.constant 0 : i32
    return %c0_i32, %c0_i32_0 : i32, i32
  }
  func.func @transform_5(%arg0: i32) -> (i32, i32, i32) {
    %c0_i32 = arith.constant 0 : i32
    %c0_i32_0 = arith.constant 0 : i32
    %c0_i32_1 = arith.constant 0 : i32
    return %arg0, %c0_i32, %c0_i32_0 : i32, i32, i32
  }
}

module attributes {stable_mosaic.version = 11 : i64} {
  func.func @_tail_kernel(%arg0: memref<2x400xf32, #tpu.memory_space<vmem>>, %arg1: memref<400x128xf32, #tpu.memory_space<vmem>>, %arg2: memref<1x128xf32, #tpu.memory_space<vmem>>, %arg3: memref<128x128xf32, #tpu.memory_space<vmem>>, %arg4: memref<1x128xf32, #tpu.memory_space<vmem>>, %arg5: memref<128x10xf32, #tpu.memory_space<vmem>>, %arg6: memref<1x10xf32, #tpu.memory_space<vmem>>, %arg7: memref<2x10xf32, #tpu.memory_space<vmem>>) attributes {dimension_semantics = [], scalar_prefetch = 0 : i64, scratch_operands = 0 : i64, tpu.core_type = #tpu.core_type<tc>} {
    %c0 = arith.constant 0 : index
    %c0_0 = arith.constant 0 : index
    %0 = vector.load %arg0[%c0, %c0_0] : memref<2x400xf32, #tpu.memory_space<vmem>>, vector<2x400xf32>
    %c0_1 = arith.constant 0 : index
    %c0_2 = arith.constant 0 : index
    %1 = vector.load %arg1[%c0_1, %c0_2] : memref<400x128xf32, #tpu.memory_space<vmem>>, vector<400x128xf32>
    %cst = arith.constant dense<0.000000e+00> : vector<2x128xf32>
    %2 = tpu.matmul %0, %1, %cst {dimension_numbers = #tpu.dot_dimension_numbers<[1], [0], [0], [1], [0, 0, 1, 1], [], []>} : vector<2x400xf32>, vector<400x128xf32>, vector<2x128xf32> -> vector<2x128xf32>
    %c0_3 = arith.constant 0 : index
    %c0_4 = arith.constant 0 : index
    %3 = vector.load %arg2[%c0_3, %c0_4] : memref<1x128xf32, #tpu.memory_space<vmem>>, vector<1x128xf32>
    %4 = vector.broadcast %3 : vector<1x128xf32> to vector<2x128xf32>
    %5 = arith.addf %2, %4 : vector<2x128xf32>
    %cst_5 = arith.constant 0.000000e+00 : f32
    %6 = vector.broadcast %cst_5 : f32 to vector<2x128xf32>
    %7 = arith.maximumf %5, %6 : vector<2x128xf32>
    %c0_6 = arith.constant 0 : index
    %c0_7 = arith.constant 0 : index
    %8 = vector.load %arg3[%c0_6, %c0_7] : memref<128x128xf32, #tpu.memory_space<vmem>>, vector<128x128xf32>
    %cst_8 = arith.constant dense<0.000000e+00> : vector<2x128xf32>
    %9 = tpu.matmul %7, %8, %cst_8 {dimension_numbers = #tpu.dot_dimension_numbers<[1], [0], [0], [1], [0, 0, 1, 1], [], []>} : vector<2x128xf32>, vector<128x128xf32>, vector<2x128xf32> -> vector<2x128xf32>
    %c0_9 = arith.constant 0 : index
    %c0_10 = arith.constant 0 : index
    %10 = vector.load %arg4[%c0_9, %c0_10] : memref<1x128xf32, #tpu.memory_space<vmem>>, vector<1x128xf32>
    %11 = vector.broadcast %10 : vector<1x128xf32> to vector<2x128xf32>
    %12 = arith.addf %9, %11 : vector<2x128xf32>
    %cst_11 = arith.constant 0.000000e+00 : f32
    %13 = vector.broadcast %cst_11 : f32 to vector<2x128xf32>
    %14 = arith.maximumf %12, %13 : vector<2x128xf32>
    %c0_12 = arith.constant 0 : index
    %c0_13 = arith.constant 0 : index
    %15 = vector.load %arg5[%c0_12, %c0_13] : memref<128x10xf32, #tpu.memory_space<vmem>>, vector<128x10xf32>
    %cst_14 = arith.constant dense<0.000000e+00> : vector<2x10xf32>
    %16 = tpu.matmul %14, %15, %cst_14 {dimension_numbers = #tpu.dot_dimension_numbers<[1], [0], [0], [1], [0, 0, 1, 1], [], []>} : vector<2x128xf32>, vector<128x10xf32>, vector<2x10xf32> -> vector<2x10xf32>
    %c0_15 = arith.constant 0 : index
    %c0_16 = arith.constant 0 : index
    %17 = vector.load %arg6[%c0_15, %c0_16] : memref<1x10xf32, #tpu.memory_space<vmem>>, vector<1x10xf32>
    %18 = vector.broadcast %17 : vector<1x10xf32> to vector<2x10xf32>
    %19 = arith.addf %16, %18 : vector<2x10xf32>
    %cst_17 = arith.constant dense<0xFF800000> : vector<2xf32>
    %20 = vector.multi_reduction <maximumf>, %19, %cst_17 [1] : vector<2x10xf32> to vector<2xf32>
    %21 = vector.shape_cast %20 : vector<2xf32> to vector<2x1xf32>
    %22 = vector.broadcast %21 : vector<2x1xf32> to vector<2x10xf32>
    %23 = arith.subf %19, %22 : vector<2x10xf32>
    %24 = math.exp %23 : vector<2x10xf32>
    %cst_18 = arith.constant dense<0.000000e+00> : vector<2xf32>
    %25 = vector.multi_reduction <add>, %24, %cst_18 [1] : vector<2x10xf32> to vector<2xf32>
    %26 = vector.shape_cast %25 : vector<2xf32> to vector<2x1xf32>
    %27 = math.log %26 : vector<2x1xf32>
    %28 = arith.addf %27, %21 : vector<2x1xf32>
    %29 = vector.broadcast %28 : vector<2x1xf32> to vector<2x10xf32>
    %30 = arith.subf %19, %29 : vector<2x10xf32>
    %c0_19 = arith.constant 0 : index
    %c0_20 = arith.constant 0 : index
    %31 = vector.load %arg7[%c0_19, %c0_20] : memref<2x10xf32, #tpu.memory_space<vmem>>, vector<2x10xf32>
    tpu.vector_store %arg7[%c0_19, %c0_20], %30 {strides = array<i32>} : memref<2x10xf32, #tpu.memory_space<vmem>>, vector<2x10xf32>,
    return
  }
}

</mosaic_0001>

<llo_original>
// kernel: lenet5_forward.3
$region0: #{lenet5_forward.3}
  #allocation0 [shape = 'u32[]', space=smem, size = 0x4, offset = 0x4, fixed_abs, tag = 'smem constant byte address 0x4 - core index']
  #allocation1 [shape = 'u32[144,128]{1,0:T(1,128)}', space=vmem, size = 0x12000, scoped, tag = 'internal scratch']
  %s0 = inlined_call_operand.vmem [shape: f32[2,4,196,32], index: 0, kind: input, shape index: {}]
  %s1 = inlined_call_operand.vmem [shape: f32[32,128], index: 1, kind: input, shape index: {}]
  %s2 = inlined_call_operand.vmem [shape: f32[1,128], index: 2, kind: input, shape index: {}]
  %s3 = inlined_call_operand.vmem [shape: f32[2,196,128], index: 3, kind: output, shape index: {}]
  %s4 = sld [smem:[#allocation0]]
  $region45: #{lenet5_forward.3} parent=0
    _
  %s6 = ssub.s32 1, %s4
  %s7 = scalar_select 0, %s6, %s4
  loop: start=0, step=1, limit=4
  $region2: #{lenet5_forward.3} parent=0 // loop_pre_header
    _
  $region3: #{lenet5_forward.3} parent=0 // loop_header
    %s9 = sphi 0, %s13
    %p10 = scmp.ge.s32.totalorder %s9, 4
    %s19 = sphi 0, %s21
    %s22 = sphi 0, %s19
    %s23 = sphi 0, %s22
    %s39 = sphi 0, %s23
    %s43 = sphi 0, %s43
    %s45 = sphi 0, %s43
    %s46 = sphi 0, %s45
    %s60 = sphi 0, %s46
    %s64 = sphi 0, %s64
    %s66 = sphi 0, %s64
    %s67 = sphi 0, %s66
    %s81 = sphi 0, %s67
    %s87 = sphi 0, %s89
    %s90 = sphi 0, %s87
    %s91 = sphi 0, %s90
    %s107 = sphi 0, %s91
  $region4: #{lenet5_forward.3} parent=0 // loop_header_branch
    %12 = sbr.rel (%p10) target = $region8
  $region5: #{lenet5_forward.3} parent=0 // loop_body
    %s14 = ssub.s32 %s9, 1
    %s15 = ssub.s32 %s9, 2
    %s16 = sadd.s32 %s9, 1
    %s17 = ssub.s32 %s9, %s16
    %p18 = scmp.eq.s32.totalorder %s17, 0
    %s20 = sadd.s32 %s19, 1
    %s21 = scalar_select %p18, %s19, %s20
    %p24 = pneg %p18
    %p25 = scmp.eq.s32.totalorder %s9, 1
    %p26 = por %p24, %p25
    %p27 = scmp.ne.s32.totalorder %s19, %s22
    %p28 = scmp.eq.s32.totalorder %s9, 0
    %p29 = por %p27, %p28
    %p30 = scmp.ne.s32.totalorder %s19, %s22
    %p31 = scmp.eq.s32.totalorder %s14, 1
    %p32 = por %p30, %p31
    %p33 = scmp.ne.s32.totalorder %s22, %s23
    %p34 = scmp.eq.s32.totalorder %s14, 0
    %p35 = por %p33, %p34
    %p36 = scmp.ne.s32.totalorder %s22, %s23
    %p37 = scmp.eq.s32.totalorder %s15, 1
    %p38 = por %p36, %p37
    %p40 = scmp.ne.s32.totalorder %s23, %s39
    %p41 = scmp.eq.s32.totalorder %s15, 0
    %p42 = por %p40, %p41
    %s44 = sadd.s32 %s43, 1
    %p47 = scmp.eq.s32.totalorder %s9, 1
    %p48 = scmp.ne.s32.totalorder %s43, %s45
    %p49 = scmp.eq.s32.totalorder %s9, 0
    %p50 = por %p48, %p49
    %p51 = scmp.ne.s32.totalorder %s43, %s45
    %p52 = scmp.eq.s32.totalorder %s14, 1
    %p53 = por %p51, %p52
    %p54 = scmp.ne.s32.totalorder %s45, %s46
    %p55 = scmp.eq.s32.totalorder %s14, 0
    %p56 = por %p54, %p55
    %p57 = scmp.ne.s32.totalorder %s45, %s46
    %p58 = scmp.eq.s32.totalorder %s15, 1
    %p59 = por %p57, %p58
    %p61 = scmp.ne.s32.totalorder %s46, %s60
    %p62 = scmp.eq.s32.totalorder %s15, 0
    %p63 = por %p61, %p62
    %s65 = sadd.s32 %s64, 1
    %p68 = scmp.eq.s32.totalorder %s9, 1
    %p69 = scmp.ne.s32.totalorder %s64, %s66
    %p70 = scmp.eq.s32.totalorder %s9, 0
    %p71 = por %p69, %p70
    %p72 = scmp.ne.s32.totalorder %s64, %s66
    %p73 = scmp.eq.s32.totalorder %s14, 1
    %p74 = por %p72, %p73
    %p75 = scmp.ne.s32.totalorder %s66, %s67
    %p76 = scmp.eq.s32.totalorder %s14, 0
    %p77 = por %p75, %p76
    %p78 = scmp.ne.s32.totalorder %s66, %s67
    %p79 = scmp.eq.s32.totalorder %s15, 1
    %p80 = por %p78, %p79
    %p82 = scmp.ne.s32.totalorder %s67, %s81
    %p83 = scmp.eq.s32.totalorder %s15, 0
    %p84 = por %p82, %p83
    %s85 = ssub.s32 %s9, %s16
    %p86 = scmp.eq.s32.totalorder %s85, 0
    %s88 = sadd.s32 %s87, 1
    %s89 = scalar_select %p86, %s87, %s88
    %p92 = pneg %p86
    %p93 = scmp.eq.s32.totalorder %s9, 1
    %p94 = por %p92, %p93
    %p95 = scmp.ne.s32.totalorder %s87, %s90
    %p96 = scmp.eq.s32.totalorder %s9, 0
    %p97 = por %p95, %p96
    %p98 = scmp.ne.s32.totalorder %s87, %s90
    %p99 = scmp.eq.s32.totalorder %s14, 1
    %p100 = por %p98, %p99
    %p101 = scmp.ne.s32.totalorder %s90, %s91
    %p102 = scmp.eq.s32.totalorder %s14, 0
    %p103 = por %p101, %p102
    %p104 = scmp.ne.s32.totalorder %s90, %s91
    %p105 = scmp.eq.s32.totalorder %s15, 1
    %p106 = por %p104, %p105
    %p108 = scmp.ne.s32.totalorder %s91, %s107
    %p109 = scmp.eq.s32.totalorder %s15, 0
    %p110 = por %p108, %p109
    %p111 = scmp.le.s32.totalorder 1, %s9
    %p112 = scmp.lt.s32.totalorder %s9, 3
    %p113 = pnand %p111, %p112
    %p114 = pneg %p113
    // Predicated region
    $region9: #{lenet5_forward.3} parent=5 // pred_check
      _
    $region10: #{lenet5_forward.3} parent=5 // pred_check_branch
      %116 = sbr.rel (%p113) target = $region12
    $region11: #{lenet5_forward.3} parent=5 // pred_region
      %s117 = ssub.s32 %s9, 1
      // Predicated region
      $region13: #{lenet5_forward.3} parent=11 // pred_check
        %p118 = pneg %p56
      $region14: #{lenet5_forward.3} parent=11 // pred_check_branch
        %120 = sbr.rel (%p118) target = $region16
      $region15: #{lenet5_forward.3} parent=11 // pred_region
        _
      $region16: #{lenet5_forward.3} parent=11 // pred_fallthru
        _
      // Predicated region
      $region17: #{lenet5_forward.3} parent=11 // pred_check
        %p121 = pneg %p77
      $region18: #{lenet5_forward.3} parent=11 // pred_check_branch
        %123 = sbr.rel (%p121) target = $region20
      $region19: #{lenet5_forward.3} parent=11 // pred_region
        _
      $region20: #{lenet5_forward.3} parent=11 // pred_fallthru
        _
    $region12: #{lenet5_forward.3} parent=5 // pred_fallthru
      _
    %p124 = scmp.lt.s32.totalorder %s9, 2
    // Predicated region
    $region21: #{lenet5_forward.3} parent=5 // pred_check
      %p125 = pneg %p124
    $region22: #{lenet5_forward.3} parent=5 // pred_check_branch
      %127 = sbr.rel (%p125) target = $region24
    $region23: #{lenet5_forward.3} parent=5 // pred_region
      // Predicated region
      $region25: #{lenet5_forward.3} parent=23 // pred_check
        %p128 = pneg %p29
      $region26: #{lenet5_forward.3} parent=23 // pred_check_branch
        %130 = sbr.rel (%p128) target = $region28
      $region27: #{lenet5_forward.3} parent=23 // pred_region
        %p131 = scmp.lt.s32.totalorder %s9, 1
        %s132 = scalar_select %p131, %s9, 1
        %s133 = smul.addr %s132, 100
        %s134 = smul.addr %s133, 8
        %s135 = scalar_lea.vmem %s0, %s134
      $region28: #{lenet5_forward.3} parent=23 // pred_fallthru
        _
    $region24: #{lenet5_forward.3} parent=5 // pred_fallthru
      _
    %p136 = scmp.le.s32.totalorder 1, %s9
    %p137 = scmp.lt.s32.totalorder %s9, 3
    %p138 = pnand %p136, %p137
    %p139 = pneg %p138
    // Predicated region
    $region29: #{lenet5_forward.3} parent=5 // pred_check
      _
    $region30: #{lenet5_forward.3} parent=5 // pred_check_branch
      %141 = sbr.rel (%p138) target = $region32
    $region31: #{lenet5_forward.3} parent=5 // pred_region
      %s142 = ssub.s32 %s9, 1
      %p143 = scmp.lt.s32.totalorder %s14, 1
      %s144 = scalar_select %p143, %s14, 1
      %s145 = smul.addr %s144, 100
      %s146 = smul.addr %s145, 8
      %s147 = scalar_lea.vmem %s0, %s146
      %p148 = pneg %p35
      %p149 = pneg %p32
      %p150 = pneg %p56
      %p151 = pneg %p53
      %p152 = pneg %p77
      %p153 = pneg %p74
      %p154 = pneg %p103
      %p155 = pneg %p100
      %p156 = scmp.lt.s32.totalorder %s14, 1
      %s157 = scalar_select %p156, %s14, 1
      %s158 = smul.addr %s157, 25
      %s159 = smul.addr %s158, 8
      %s160 = scalar_lea.vmem %s3, %s159
      %p161 = scmp.lt.s32.totalorder %s14, 1
      %s162 = scalar_select %p161, %s14, 1
      %s163 = smul.addr %s162, 100
      %s164 = smul.addr %s163, 8
      %s165 = scalar_lea.vmem %s0, %s164
      %p166 = scmp.lt.s32.totalorder %s14, 1
      %s167 = scalar_select %p166, %s14, 1
      %s168 = smul.addr %s167, 25
      %s169 = smul.addr %s168, 8
      %s170 = scalar_lea.vmem %s3, %s169
      %v171 = vld [vmem:[%s1] sm:$0xff]
      %v172 = vld [vmem:[%s1 + $0x8] sm:$0xff]
      %v173 = vld [vmem:[%s1 + $0x10] sm:$0xff]
      %v174 = vld [vmem:[%s1 + $0x18] sm:$0xff]
      %v175 = vld [vmem:[%s165] sm:$0xff]
      %v176 = vld [vmem:[%s165 + $0x8] sm:$0xff]
      %v177 = vld [vmem:[%s165 + $0x10] sm:$0xff]
      %v178 = vld [vmem:[%s165 + $0x18] sm:$0xff]
      %v179 = vld [vmem:[%s165 + $0x20] sm:$0xff]
      %v180 = vld [vmem:[%s165 + $0x28] sm:$0xff]
      %v181 = vld [vmem:[%s165 + $0x30] sm:$0xff]
      %v182 = vld [vmem:[%s165 + $0x38] sm:$0xff]
      %v183 = vld [vmem:[%s165 + $0x40] sm:$0xff]
      %v184 = vld [vmem:[%s165 + $0x48] sm:$0xff]
      %v185 = vld [vmem:[%s165 + $0x50] sm:$0xff]
      %v186 = vld [vmem:[%s165 + $0x58] sm:$0xff]
      %v187 = vld [vmem:[%s165 + $0x60] sm:$0xff]
      %v188 = vld [vmem:[%s165 + $0x68] sm:$0xff]
      %v189 = vld [vmem:[%s165 + $0x70] sm:$0xff]
      %v190 = vld [vmem:[%s165 + $0x78] sm:$0xff]
      %v191 = vld [vmem:[%s165 + $0x80] sm:$0xff]
      %v192 = vld [vmem:[%s165 + $0x88] sm:$0xff]
      %v193 = vld [vmem:[%s165 + $0x90] sm:$0xff]
      %v194 = vld [vmem:[%s165 + $0x98] sm:$0xff]
      %v195 = vld [vmem:[%s165 + $0xa0] sm:$0xff]
      %v196 = vld [vmem:[%s165 + $0xa8] sm:$0xff]
      %v197 = vld [vmem:[%s165 + $0xb0] sm:$0xff]
      %v198 = vld [vmem:[%s165 + $0xb8] sm:$0xff]
      %v199 = vld [vmem:[%s165 + $0xc0] sm:$0xf]
      %vm200 = vcmask 261120
      %v202 = vsel %vm200, %v175, 0
      %v205 = vsel %vm200, %v176, 0
      %v208 = vsel %vm200, %v177, 0
      %v211 = vsel %vm200, %v178, 0
      %v214 = vsel %vm200, %v179, 0
      %v217 = vsel %vm200, %v180, 0
      %v220 = vsel %vm200, %v181, 0
      %v223 = vsel %vm200, %v182, 0
      %v226 = vsel %vm200, %v183, 0
      %v229 = vsel %vm200, %v184, 0
      %v232 = vsel %vm200, %v185, 0
      %v235 = vsel %vm200, %v186, 0
      %v238 = vsel %vm200, %v187, 0
      %v241 = vsel %vm200, %v188, 0
      %v244 = vsel %vm200, %v189, 0
      %v247 = vsel %vm200, %v190, 0
      %v250 = vsel %vm200, %v191, 0
      %v253 = vsel %vm200, %v192, 0
      %v256 = vsel %vm200, %v193, 0
      %v259 = vsel %vm200, %v194, 0
      %v262 = vsel %vm200, %v195, 0
      %v265 = vsel %vm200, %v196, 0
      %v268 = vsel %vm200, %v197, 0
      %v271 = vsel %vm200, %v198, 0
      %v274 = vsel %vm200, %v199, 0
      %276 = vmatprep.subr.mxu0 0.0
      %277 = vmatpush1.msra.mxu0 0.0
      %278 = vmatprep.subr.mxu0 0.0
      %279 = vmatpush1.msra.mxu0 0.0
      %280 = vmatprep.subr.mxu0 0.0
      %281 = vmatpush1.msra.mxu0 0.0
      %282 = vmatprep.subr.mxu0 0.0
      %283 = vmatpush1.msra.mxu0 0.0
      %284 = vmatprep.subr.mxu0 0.0
      %285 = vmatpush1.msra.mxu0 0.0
      %286 = vmatprep.subr.mxu0 0.0
      %287 = vmatpush1.msra.mxu0 0.0
      %288 = vmatprep.subr.mxu0 0.0
      %289 = vmatpush1.msra.mxu0 0.0
      %290 = vmatprep.subr.mxu0 0.0
      %291 = vmatpush1.msra.mxu0 0.0
      %292 = vmatprep.subr.mxu0 0.0
      %293 = vmatpush1.msra.mxu0 0.0
      %294 = vmatprep.subr.mxu0 0.0
      %295 = vmatpush1.msra.mxu0 0.0
      %296 = vmatprep.subr.mxu0 0.0
      %297 = vmatpush1.msra.mxu0 0.0
      %298 = vmatprep.subr.mxu0 0.0
      %299 = vmatpush1.msra.mxu0 0.0
      %300 = vmatprep.subr.mxu0 0.0
      %301 = vmatpush1.msra.mxu0 %v174
      %302 = vmatprep.subr.mxu0 0.0
      %303 = vmatpush1.msra.mxu0 %v173
      %304 = vmatprep.subr.mxu0 0.0
      %305 = vmatpush1.msra.mxu0 %v172
      %306 = vmatprep.subr.mxu0 0.0
      %307 = vmatpush1.msra.mxu0 %v171
      %308 = vmatprep.subr.mxu0 0.0
      %309 = vmatpush2.msra.mxu0 0.0
      %310 = vmatprep.subr.mxu0 0.0
      %311 = vmatpush2.msra.mxu0 0.0
      %312 = vmatprep.subr.mxu0 0.0
      %313 = vmatpush2.msra.mxu0 0.0
      %314 = vmatprep.subr.mxu0 0.0
      %315 = vmatpush2.msra.mxu0 0.0
      %316 = vmatprep.subr.mxu0 0.0
      %317 = vmatpush2.msra.mxu0 0.0
      %318 = vmatprep.subr.mxu0 0.0
      %319 = vmatpush2.msra.mxu0 0.0
      %320 = vmatprep.subr.mxu0 0.0
      %321 = vmatpush2.msra.mxu0 0.0
      %322 = vmatprep.subr.mxu0 0.0
      %323 = vmatpush2.msra.mxu0 0.0
      %324 = vmatprep.subr.mxu0 0.0
      %325 = vmatpush2.msra.mxu0 0.0
      %326 = vmatprep.subr.mxu0 0.0
      %327 = vmatpush2.msra.mxu0 0.0
      %328 = vmatprep.subr.mxu0 0.0
      %329 = vmatpush2.msra.mxu0 0.0
      %330 = vmatprep.subr.mxu0 0.0
      %331 = vmatpush2.msra.mxu0 0.0
      %332 = vmatprep.subr.mxu0 0.0
      %333 = vmatpush2.msra.mxu0 0.0
      %334 = vmatprep.subr.mxu0 0.0
      %335 = vmatpush2.msra.mxu0 0.0
      %336 = vmatprep.subr.mxu0 0.0
      %337 = vmatpush2.msra.mxu0 0.0
      %338 = vmatprep.subr.mxu0 0.0
      %339 = vmatpush2.msra.mxu0 0.0
      %340 = vmatprep.mubr.f32.mxu0 0.0
      %341 = vmatmul.mubr.f32.gmra.mxu0 %v202
      %v342 = vpop.f32.mrf.mxu0
      %v343 = vadd.f32 0.0, %v342
      %v344 = vpop.f32.mrf.mxu0
      %345 = vmatprep.mubr.f32.mxu0 0.0
      %346 = vmatmul.mubr.f32.gmra.mxu0 %v205
      %v347 = vpop.f32.mrf.mxu0
      %v348 = vadd.f32 0.0, %v347
      %v349 = vpop.f32.mrf.mxu0
      %350 = vmatprep.mubr.f32.mxu0 0.0
      %351 = vmatmul.mubr.f32.gmra.mxu0 %v208
      %v352 = vpop.f32.mrf.mxu0
      %v353 = vadd.f32 0.0, %v352
      %v354 = vpop.f32.mrf.mxu0
      %355 = vmatprep.mubr.f32.mxu0 0.0
      %356 = vmatmul.mubr.f32.gmra.mxu0 %v211
      %v357 = vpop.f32.mrf.mxu0
      %v358 = vadd.f32 0.0, %v357
      %v359 = vpop.f32.mrf.mxu0
      %360 = vmatprep.mubr.f32.mxu0 0.0
      %361 = vmatmul.mubr.f32.gmra.mxu0 %v214
      %v362 = vpop.f32.mrf.mxu0
      %v363 = vadd.f32 0.0, %v362
      %v364 = vpop.f32.mrf.mxu0
      %365 = vmatprep.mubr.f32.mxu0 0.0
      %366 = vmatmul.mubr.f32.gmra.mxu0 %v217
      %v367 = vpop.f32.mrf.mxu0
      %v368 = vadd.f32 0.0, %v367
      %v369 = vpop.f32.mrf.mxu0
      %370 = vmatprep.mubr.f32.mxu0 0.0
      %371 = vmatmul.mubr.f32.gmra.mxu0 %v220
      %v372 = vpop.f32.mrf.mxu0
      %v373 = vadd.f32 0.0, %v372
      %v374 = vpop.f32.mrf.mxu0
      %375 = vmatprep.mubr.f32.mxu0 0.0
      %376 = vmatmul.mubr.f32.gmra.mxu0 %v223
      %v377 = vpop.f32.mrf.mxu0
      %v378 = vadd.f32 0.0, %v377
      %v379 = vpop.f32.mrf.mxu0
      %380 = vmatprep.mubr.f32.mxu0 0.0
      %381 = vmatmul.mubr.f32.gmra.mxu0 %v226
      %v382 = vpop.f32.mrf.mxu0
      %v383 = vadd.f32 0.0, %v382
      %v384 = vpop.f32.mrf.mxu0
      %385 = vmatprep.mubr.f32.mxu0 0.0
      %386 = vmatmul.mubr.f32.gmra.mxu0 %v229
      %v387 = vpop.f32.mrf.mxu0
      %v388 = vadd.f32 0.0, %v387
      %v389 = vpop.f32.mrf.mxu0
      %390 = vmatprep.mubr.f32.mxu0 0.0
      %391 = vmatmul.mubr.f32.gmra.mxu0 %v232
      %v392 = vpop.f32.mrf.mxu0
      %v393 = vadd.f32 0.0, %v392
      %v394 = vpop.f32.mrf.mxu0
      %395 = vmatprep.mubr.f32.mxu0 0.0
      %396 = vmatmul.mubr.f32.gmra.mxu0 %v235
      %v397 = vpop.f32.mrf.mxu0
      %v398 = vadd.f32 0.0, %v397
      %v399 = vpop.f32.mrf.mxu0
      %400 = vmatprep.mubr.f32.mxu0 0.0
      %401 = vmatmul.mubr.f32.gmra.mxu0 %v238
      %v402 = vpop.f32.mrf.mxu0
      %v403 = vadd.f32 0.0, %v402
      %v404 = vpop.f32.mrf.mxu0
      %405 = vmatprep.mubr.f32.mxu0 0.0
      %406 = vmatmul.mubr.f32.gmra.mxu0 %v241
      %v407 = vpop.f32.mrf.mxu0
      %v408 = vadd.f32 0.0, %v407
      %v409 = vpop.f32.mrf.mxu0
      %410 = vmatprep.mubr.f32.mxu0 0.0
      %411 = vmatmul.mubr.f32.gmra.mxu0 %v244
      %v412 = vpop.f32.mrf.mxu0
      %v413 = vadd.f32 0.0, %v412
      %v414 = vpop.f32.mrf.mxu0
      %415 = vmatprep.mubr.f32.mxu0 0.0
      %416 = vmatmul.mubr.f32.gmra.mxu0 %v247
      %v417 = vpop.f32.mrf.mxu0
      %v418 = vadd.f32 0.0, %v417
      %v419 = vpop.f32.mrf.mxu0
      %420 = vmatprep.mubr.f32.mxu0 0.0
      %421 = vmatmul.mubr.f32.gmra.mxu0 %v250
      %v422 = vpop.f32.mrf.mxu0
      %v423 = vadd.f32 0.0, %v422
      %v424 = vpop.f32.mrf.mxu0
      %425 = vmatprep.mubr.f32.mxu0 0.0
      %426 = vmatmul.mubr.f32.gmra.mxu0 %v253
      %v427 = vpop.f32.mrf.mxu0
      %v428 = vadd.f32 0.0, %v427
      %v429 = vpop.f32.mrf.mxu0
      %430 = vmatprep.mubr.f32.mxu0 0.0
      %431 = vmatmul.mubr.f32.gmra.mxu0 %v256
      %v432 = vpop.f32.mrf.mxu0
      %v433 = vadd.f32 0.0, %v432
      %v434 = vpop.f32.mrf.mxu0
      %435 = vmatprep.mubr.f32.mxu0 0.0
      %436 = vmatmul.mubr.f32.gmra.mxu0 %v259
      %v437 = vpop.f32.mrf.mxu0
      %v438 = vadd.f32 0.0, %v437
      %v439 = vpop.f32.mrf.mxu0
      %440 = vmatprep.mubr.f32.mxu0 0.0
      %441 = vmatmul.mubr.f32.gmra.mxu0 %v262
      %v442 = vpop.f32.mrf.mxu0
      %v443 = vadd.f32 0.0, %v442
      %v444 = vpop.f32.mrf.mxu0
      %445 = vmatprep.mubr.f32.mxu0 0.0
      %446 = vmatmul.mubr.f32.gmra.mxu0 %v265
      %v447 = vpop.f32.mrf.mxu0
      %v448 = vadd.f32 0.0, %v447
      %v449 = vpop.f32.mrf.mxu0
      %450 = vmatprep.mubr.f32.mxu0 0.0
      %451 = vmatmul.mubr.f32.gmra.mxu0 %v268
      %v452 = vpop.f32.mrf.mxu0
      %v453 = vadd.f32 0.0, %v452
      %v454 = vpop.f32.mrf.mxu0
      %455 = vmatprep.mubr.f32.mxu0 0.0
      %456 = vmatmul.mubr.f32.gmra.mxu0 %v271
      %v457 = vpop.f32.mrf.mxu0
      %v458 = vadd.f32 0.0, %v457
      %v459 = vpop.f32.mrf.mxu0
      %460 = vmatprep.mubr.f32.mxu0 0.0
      %461 = vmatmul.mubr.f32.gmra.mxu0 %v274
      %v462 = vpop.f32.mrf.mxu0
      %v463 = vadd.f32 0.0, %v462
      %v464 = vpop.f32.mrf.mxu0
      %465 = vdwg.mxu0
      %s466 = scalar_lea.vmem %s165, 200
      %v467 = vld [vmem:[%s466] sm:$0xff]
      %v468 = vld [vmem:[%s466 + $0x8] sm:$0xff]
      %v469 = vld [vmem:[%s466 + $0x10] sm:$0xff]
      %v470 = vld [vmem:[%s466 + $0x18] sm:$0xff]
      %v471 = vld [vmem:[%s466 + $0x20] sm:$0xff]
      %v472 = vld [vmem:[%s466 + $0x28] sm:$0xff]
      %v473 = vld [vmem:[%s466 + $0x30] sm:$0xff]
      %v474 = vld [vmem:[%s466 + $0x38] sm:$0xff]
      %v475 = vld [vmem:[%s466 + $0x40] sm:$0xff]
      %v476 = vld [vmem:[%s466 + $0x48] sm:$0xff]
      %v477 = vld [vmem:[%s466 + $0x50] sm:$0xff]
      %v478 = vld [vmem:[%s466 + $0x58] sm:$0xff]
      %v479 = vld [vmem:[%s466 + $0x60] sm:$0xff]
      %v480 = vld [vmem:[%s466 + $0x68] sm:$0xff]
      %v481 = vld [vmem:[%s466 + $0x70] sm:$0xff]
      %v482 = vld [vmem:[%s466 + $0x78] sm:$0xff]
      %v483 = vld [vmem:[%s466 + $0x80] sm:$0xff]
      %v484 = vld [vmem:[%s466 + $0x88] sm:$0xff]
      %v485 = vld [vmem:[%s466 + $0x90] sm:$0xff]
      %v486 = vld [vmem:[%s466 + $0x98] sm:$0xff]
      %v487 = vld [vmem:[%s466 + $0xa0] sm:$0xff]
      %v488 = vld [vmem:[%s466 + $0xa8] sm:$0xff]
      %v489 = vld [vmem:[%s466 + $0xb0] sm:$0xff]
      %v490 = vld [vmem:[%s466 + $0xb8] sm:$0xff]
      %v491 = vld [vmem:[%s466 + $0xc0] sm:$0xf]
      %v493 = vsel %vm200, %v467, 0
      %v496 = vsel %vm200, %v468, 0
      %v499 = vsel %vm200, %v469, 0
      %v502 = vsel %vm200, %v470, 0
      %v505 = vsel %vm200, %v471, 0
      %v508 = vsel %vm200, %v472, 0
      %v511 = vsel %vm200, %v473, 0
      %v514 = vsel %vm200, %v474, 0
      %v517 = vsel %vm200, %v475, 0
      %v520 = vsel %vm200, %v476, 0
      %v523 = vsel %vm200, %v477, 0
      %v526 = vsel %vm200, %v478, 0
      %v529 = vsel %vm200, %v479, 0
      %v532 = vsel %vm200, %v480, 0
      %v535 = vsel %vm200, %v481, 0
      %v538 = vsel %vm200, %v482, 0
      %v541 = vsel %vm200, %v483, 0
      %v544 = vsel %vm200, %v484, 0
      %v547 = vsel %vm200, %v485, 0
      %v550 = vsel %vm200, %v486, 0
      %v553 = vsel %vm200, %v487, 0
      %v556 = vsel %vm200, %v488, 0
      %v559 = vsel %vm200, %v489, 0
      %v562 = vsel %vm200, %v490, 0
      %v565 = vsel %vm200, %v491, 0
      %567 = vmatprep.subr.mxu0 0.0
      %568 = vmatpush1.msra.mxu0 0.0
      %569 = vmatprep.subr.mxu0 0.0
      %570 = vmatpush1.msra.mxu0 0.0
      %571 = vmatprep.subr.mxu0 0.0
      %572 = vmatpush1.msra.mxu0 0.0
      %573 = vmatprep.subr.mxu0 0.0
      %574 = vmatpush1.msra.mxu0 0.0
      %575 = vmatprep.subr.mxu0 0.0
      %576 = vmatpush1.msra.mxu0 0.0
      %577 = vmatprep.subr.mxu0 0.0
      %578 = vmatpush1.msra.mxu0 0.0
      %579 = vmatprep.subr.mxu0 0.0
      %580 = vmatpush1.msra.mxu0 0.0
      %581 = vmatprep.subr.mxu0 0.0
      %582 = vmatpush1.msra.mxu0 0.0
      %583 = vmatprep.subr.mxu0 0.0
      %584 = vmatpush1.msra.mxu0 0.0
      %585 = vmatprep.subr.mxu0 0.0
      %586 = vmatpush1.msra.mxu0 0.0
      %587 = vmatprep.subr.mxu0 0.0
      %588 = vmatpush1.msra.mxu0 0.0
      %589 = vmatprep.subr.mxu0 0.0
      %590 = vmatpush1.msra.mxu0 0.0
      %591 = vmatprep.subr.mxu0 0.0
      %592 = vmatpush1.msra.mxu0 %v174
      %593 = vmatprep.subr.mxu0 0.0
      %594 = vmatpush1.msra.mxu0 %v173
      %595 = vmatprep.subr.mxu0 0.0
      %596 = vmatpush1.msra.mxu0 %v172
      %597 = vmatprep.subr.mxu0 0.0
      %598 = vmatpush1.msra.mxu0 %v171
      %599 = vmatprep.subr.mxu0 0.0
      %600 = vmatpush2.msra.mxu0 0.0
      %601 = vmatprep.subr.mxu0 0.0
      %602 = vmatpush2.msra.mxu0 0.0
      %603 = vmatprep.subr.mxu0 0.0
      %604 = vmatpush2.msra.mxu0 0.0
      %605 = vmatprep.subr.mxu0 0.0
      %606 = vmatpush2.msra.mxu0 0.0
      %607 = vmatprep.subr.mxu0 0.0
      %608 = vmatpush2.msra.mxu0 0.0
      %609 = vmatprep.subr.mxu0 0.0
      %610 = vmatpush2.msra.mxu0 0.0
      %611 = vmatprep.subr.mxu0 0.0
      %612 = vmatpush2.msra.mxu0 0.0
      %613 = vmatprep.subr.mxu0 0.0
      %614 = vmatpush2.msra.mxu0 0.0
      %615 = vmatprep.subr.mxu0 0.0
      %616 = vmatpush2.msra.mxu0 0.0
      %617 = vmatprep.subr.mxu0 0.0
      %618 = vmatpush2.msra.mxu0 0.0
      %619 = vmatprep.subr.mxu0 0.0
      %620 = vmatpush2.msra.mxu0 0.0
      %621 = vmatprep.subr.mxu0 0.0
      %622 = vmatpush2.msra.mxu0 0.0
      %623 = vmatprep.subr.mxu0 0.0
      %624 = vmatpush2.msra.mxu0 0.0
      %625 = vmatprep.subr.mxu0 0.0
      %626 = vmatpush2.msra.mxu0 0.0
      %627 = vmatprep.subr.mxu0 0.0
      %628 = vmatpush2.msra.mxu0 0.0
      %629 = vmatprep.subr.mxu0 0.0
      %630 = vmatpush2.msra.mxu0 0.0
      %631 = vmatprep.mubr.f32.mxu0 0.0
      %632 = vmatmul.mubr.f32.gmra.mxu0 %v493
      %v633 = vpop.f32.mrf.mxu0
      %v634 = vadd.f32 0.0, %v633
      %v635 = vpop.f32.mrf.mxu0
      %636 = vmatprep.mubr.f32.mxu0 0.0
      %637 = vmatmul.mubr.f32.gmra.mxu0 %v496
      %v638 = vpop.f32.mrf.mxu0
      %v639 = vadd.f32 0.0, %v638
      %v640 = vpop.f32.mrf.mxu0
      %641 = vmatprep.mubr.f32.mxu0 0.0
      %642 = vmatmul.mubr.f32.gmra.mxu0 %v499
      %v643 = vpop.f32.mrf.mxu0
      %v644 = vadd.f32 0.0, %v643
      %v645 = vpop.f32.mrf.mxu0
      %646 = vmatprep.mubr.f32.mxu0 0.0
      %647 = vmatmul.mubr.f32.gmra.mxu0 %v502
      %v648 = vpop.f32.mrf.mxu0
      %v649 = vadd.f32 0.0, %v648
      %v650 = vpop.f32.mrf.mxu0
      %651 = vmatprep.mubr.f32.mxu0 0.0
      %652 = vmatmul.mubr.f32.gmra.mxu0 %v505
      %v653 = vpop.f32.mrf.mxu0
      %v654 = vadd.f32 0.0, %v653
      %v655 = vpop.f32.mrf.mxu0
      %656 = vmatprep.mubr.f32.mxu0 0.0
      %657 = vmatmul.mubr.f32.gmra.mxu0 %v508
      %v658 = vpop.f32.mrf.mxu0
      %v659 = vadd.f32 0.0, %v658
      %v660 = vpop.f32.mrf.mxu0
      %661 = vmatprep.mubr.f32.mxu0 0.0
      %662 = vmatmul.mubr.f32.gmra.mxu0 %v511
      %v663 = vpop.f32.mrf.mxu0
      %v664 = vadd.f32 0.0, %v663
      %v665 = vpop.f32.mrf.mxu0
      %666 = vmatprep.mubr.f32.mxu0 0.0
      %667 = vmatmul.mubr.f32.gmra.mxu0 %v514
      %v668 = vpop.f32.mrf.mxu0
      %v669 = vadd.f32 0.0, %v668
      %v670 = vpop.f32.mrf.mxu0
      %671 = vmatprep.mubr.f32.mxu0 0.0
      %672 = vmatmul.mubr.f32.gmra.mxu0 %v517
      %v673 = vpop.f32.mrf.mxu0
      %v674 = vadd.f32 0.0, %v673
      %v675 = vpop.f32.mrf.mxu0
      %676 = vmatprep.mubr.f32.mxu0 0.0
      %677 = vmatmul.mubr.f32.gmra.mxu0 %v520
      %v678 = vpop.f32.mrf.mxu0
      %v679 = vadd.f32 0.0, %v678
      %v680 = vpop.f32.mrf.mxu0
      %681 = vmatprep.mubr.f32.mxu0 0.0
      %682 = vmatmul.mubr.f32.gmra.mxu0 %v523
      %v683 = vpop.f32.mrf.mxu0
      %v684 = vadd.f32 0.0, %v683
      %v685 = vpop.f32.mrf.mxu0
      %686 = vmatprep.mubr.f32.mxu0 0.0
      %687 = vmatmul.mubr.f32.gmra.mxu0 %v526
      %v688 = vpop.f32.mrf.mxu0
      %v689 = vadd.f32 0.0, %v688
      %v690 = vpop.f32.mrf.mxu0
      %691 = vmatprep.mubr.f32.mxu0 0.0
      %692 = vmatmul.mubr.f32.gmra.mxu0 %v529
      %v693 = vpop.f32.mrf.mxu0
      %v694 = vadd.f32 0.0, %v693
      %v695 = vpop.f32.mrf.mxu0
      %696 = vmatprep.mubr.f32.mxu0 0.0
      %697 = vmatmul.mubr.f32.gmra.mxu0 %v532
      %v698 = vpop.f32.mrf.mxu0
      %v699 = vadd.f32 0.0, %v698
      %v700 = vpop.f32.mrf.mxu0
      %701 = vmatprep.mubr.f32.mxu0 0.0
      %702 = vmatmul.mubr.f32.gmra.mxu0 %v535
      %v703 = vpop.f32.mrf.mxu0
      %v704 = vadd.f32 0.0, %v703
      %v705 = vpop.f32.mrf.mxu0
      %706 = vmatprep.mubr.f32.mxu0 0.0
      %707 = vmatmul.mubr.f32.gmra.mxu0 %v538
      %v708 = vpop.f32.mrf.mxu0
      %v709 = vadd.f32 0.0, %v708
      %v710 = vpop.f32.mrf.mxu0
      %711 = vmatprep.mubr.f32.mxu0 0.0
      %712 = vmatmul.mubr.f32.gmra.mxu0 %v541
      %v713 = vpop.f32.mrf.mxu0
      %v714 = vadd.f32 0.0, %v713
      %v715 = vpop.f32.mrf.mxu0
      %716 = vmatprep.mubr.f32.mxu0 0.0
      %717 = vmatmul.mubr.f32.gmra.mxu0 %v544
      %v718 = vpop.f32.mrf.mxu0
      %v719 = vadd.f32 0.0, %v718
      %v720 = vpop.f32.mrf.mxu0
      %721 = vmatprep.mubr.f32.mxu0 0.0
      %722 = vmatmul.mubr.f32.gmra.mxu0 %v547
      %v723 = vpop.f32.mrf.mxu0
      %v724 = vadd.f32 0.0, %v723
      %v725 = vpop.f32.mrf.mxu0
      %726 = vmatprep.mubr.f32.mxu0 0.0
      %727 = vmatmul.mubr.f32.gmra.mxu0 %v550
      %v728 = vpop.f32.mrf.mxu0
      %v729 = vadd.f32 0.0, %v728
      %v730 = vpop.f32.mrf.mxu0
      %731 = vmatprep.mubr.f32.mxu0 0.0
      %732 = vmatmul.mubr.f32.gmra.mxu0 %v553
      %v733 = vpop.f32.mrf.mxu0
      %v734 = vadd.f32 0.0, %v733
      %v735 = vpop.f32.mrf.mxu0
      %736 = vmatprep.mubr.f32.mxu0 0.0
      %737 = vmatmul.mubr.f32.gmra.mxu0 %v556
      %v738 = vpop.f32.mrf.mxu0
      %v739 = vadd.f32 0.0, %v738
      %v740 = vpop.f32.mrf.mxu0
      %741 = vmatprep.mubr.f32.mxu0 0.0
      %742 = vmatmul.mubr.f32.gmra.mxu0 %v559
      %v743 = vpop.f32.mrf.mxu0
      %v744 = vadd.f32 0.0, %v743
      %v745 = vpop.f32.mrf.mxu0
      %746 = vmatprep.mubr.f32.mxu0 0.0
      %747 = vmatmul.mubr.f32.gmra.mxu0 %v562
      %v748 = vpop.f32.mrf.mxu0
      %v749 = vadd.f32 0.0, %v748
      %v750 = vpop.f32.mrf.mxu0
      %751 = vmatprep.mubr.f32.mxu0 0.0
      %752 = vmatmul.mubr.f32.gmra.mxu0 %v565
      %v753 = vpop.f32.mrf.mxu0
      %v754 = vadd.f32 0.0, %v753
      %v755 = vpop.f32.mrf.mxu0
      %756 = vdwg.mxu0
      %s757 = scalar_lea.vmem %s165, 400
      %v758 = vld [vmem:[%s757] sm:$0xff]
      %v759 = vld [vmem:[%s757 + $0x8] sm:$0xff]
      %v760 = vld [vmem:[%s757 + $0x10] sm:$0xff]
      %v761 = vld [vmem:[%s757 + $0x18] sm:$0xff]
      %v762 = vld [vmem:[%s757 + $0x20] sm:$0xff]
      %v763 = vld [vmem:[%s757 + $0x28] sm:$0xff]
      %v764 = vld [vmem:[%s757 + $0x30] sm:$0xff]
      %v765 = vld [vmem:[%s757 + $0x38] sm:$0xff]
      %v766 = vld [vmem:[%s757 + $0x40] sm:$0xff]
      %v767 = vld [vmem:[%s757 + $0x48] sm:$0xff]
      %v768 = vld [vmem:[%s757 + $0x50] sm:$0xff]
      %v769 = vld [vmem:[%s757 + $0x58] sm:$0xff]
      %v770 = vld [vmem:[%s757 + $0x60] sm:$0xff]
      %v771 = vld [vmem:[%s757 + $0x68] sm:$0xff]
      %v772 = vld [vmem:[%s757 + $0x70] sm:$0xff]
      %v773 = vld [vmem:[%s757 + $0x78] sm:$0xff]
      %v774 = vld [vmem:[%s757 + $0x80] sm:$0xff]
      %v775 = vld [vmem:[%s757 + $0x88] sm:$0xff]
      %v776 = vld [vmem:[%s757 + $0x90] sm:$0xff]
      %v777 = vld [vmem:[%s757 + $0x98] sm:$0xff]
      %v778 = vld [vmem:[%s757 + $0xa0] sm:$0xff]
      %v779 = vld [vmem:[%s757 + $0xa8] sm:$0xff]
      %v780 = vld [vmem:[%s757 + $0xb0] sm:$0xff]
      %v781 = vld [vmem:[%s757 + $0xb8] sm:$0xff]
      %v782 = vld [vmem:[%s757 + $0xc0] sm:$0xf]
      %v784 = vsel %vm200, %v758, 0
      %v787 = vsel %vm200, %v759, 0
      %v790 = vsel %vm200, %v760, 0
      %v793 = vsel %vm200, %v761, 0
      %v796 = vsel %vm200, %v762, 0
      %v799 = vsel %vm200, %v763, 0
      %v802 = vsel %vm200, %v764, 0
      %v805 = vsel %vm200, %v765, 0
      %v808 = vsel %vm200, %v766, 0
      %v811 = vsel %vm200, %v767, 0
      %v814 = vsel %vm200, %v768, 0
      %v817 = vsel %vm200, %v769, 0
      %v820 = vsel %vm200, %v770, 0
      %v823 = vsel %vm200, %v771, 0
      %v826 = vsel %vm200, %v772, 0
      %v829 = vsel %vm200, %v773, 0
      %v832 = vsel %vm200, %v774, 0
      %v835 = vsel %vm200, %v775, 0
      %v838 = vsel %vm200, %v776, 0
      %v841 = vsel %vm200, %v777, 0
      %v844 = vsel %vm200, %v778, 0
      %v847 = vsel %vm200, %v779, 0
      %v850 = vsel %vm200, %v780, 0
      %v853 = vsel %vm200, %v781, 0
      %v856 = vsel %vm200, %v782, 0
      %858 = vmatprep.subr.mxu0 0.0
      %859 = vmatpush1.msra.mxu0 0.0
      %860 = vmatprep.subr.mxu0 0.0
      %861 = vmatpush1.msra.mxu0 0.0
      %862 = vmatprep.subr.mxu0 0.0
      %863 = vmatpush1.msra.mxu0 0.0
      %864 = vmatprep.subr.mxu0 0.0
      %865 = vmatpush1.msra.mxu0 0.0
      %866 = vmatprep.subr.mxu0 0.0
      %867 = vmatpush1.msra.mxu0 0.0
      %868 = vmatprep.subr.mxu0 0.0
      %869 = vmatpush1.msra.mxu0 0.0
      %870 = vmatprep.subr.mxu0 0.0
      %871 = vmatpush1.msra.mxu0 0.0
      %872 = vmatprep.subr.mxu0 0.0
      %873 = vmatpush1.msra.mxu0 0.0
      %874 = vmatprep.subr.mxu0 0.0
      %875 = vmatpush1.msra.mxu0 0.0
      %876 = vmatprep.subr.mxu0 0.0
      %877 = vmatpush1.msra.mxu0 0.0
      %878 = vmatprep.subr.mxu0 0.0
      %879 = vmatpush1.msra.mxu0 0.0
      %880 = vmatprep.subr.mxu0 0.0
      %881 = vmatpush1.msra.mxu0 0.0
      %882 = vmatprep.subr.mxu0 0.0
      %883 = vmatpush1.msra.mxu0 %v174
      %884 = vmatprep.subr.mxu0 0.0
      %885 = vmatpush1.msra.mxu0 %v173
      %886 = vmatprep.subr.mxu0 0.0
      %887 = vmatpush1.msra.mxu0 %v172
      %888 = vmatprep.subr.mxu0 0.0
      %889 = vmatpush1.msra.mxu0 %v171
      %890 = vmatprep.subr.mxu0 0.0
      %891 = vmatpush2.msra.mxu0 0.0
      %892 = vmatprep.subr.mxu0 0.0
      %893 = vmatpush2.msra.mxu0 0.0
      %894 = vmatprep.subr.mxu0 0.0
      %895 = vmatpush2.msra.mxu0 0.0
      %896 = vmatprep.subr.mxu0 0.0
      %897 = vmatpush2.msra.mxu0 0.0
      %898 = vmatprep.subr.mxu0 0.0
      %899 = vmatpush2.msra.mxu0 0.0
      %900 = vmatprep.subr.mxu0 0.0
      %901 = vmatpush2.msra.mxu0 0.0
      %902 = vmatprep.subr.mxu0 0.0
      %903 = vmatpush2.msra.mxu0 0.0
      %904 = vmatprep.subr.mxu0 0.0
      %905 = vmatpush2.msra.mxu0 0.0
      %906 = vmatprep.subr.mxu0 0.0
      %907 = vmatpush2.msra.mxu0 0.0
      %908 = vmatprep.subr.mxu0 0.0
      %909 = vmatpush2.msra.mxu0 0.0
      %910 = vmatprep.subr.mxu0 0.0
      %911 = vmatpush2.msra.mxu0 0.0
      %912 = vmatprep.subr.mxu0 0.0
      %913 = vmatpush2.msra.mxu0 0.0
      %914 = vmatprep.subr.mxu0 0.0
      %915 = vmatpush2.msra.mxu0 0.0
      %916 = vmatprep.subr.mxu0 0.0
      %917 = vmatpush2.msra.mxu0 0.0
      %918 = vmatprep.subr.mxu0 0.0
      %919 = vmatpush2.msra.mxu0 0.0
      %920 = vmatprep.subr.mxu0 0.0
      %921 = vmatpush2.msra.mxu0 0.0
      %922 = vmatprep.mubr.f32.mxu0 0.0
      %923 = vmatmul.mubr.f32.gmra.mxu0 %v784
      %v924 = vpop.f32.mrf.mxu0
      %v925 = vadd.f32 0.0, %v924
      %v926 = vpop.f32.mrf.mxu0
      %927 = vmatprep.mubr.f32.mxu0 0.0
      %928 = vmatmul.mubr.f32.gmra.mxu0 %v787
      %v929 = vpop.f32.mrf.mxu0
      %v930 = vadd.f32 0.0, %v929
      %v931 = vpop.f32.mrf.mxu0
      %932 = vmatprep.mubr.f32.mxu0 0.0
      %933 = vmatmul.mubr.f32.gmra.mxu0 %v790
      %v934 = vpop.f32.mrf.mxu0
      %v935 = vadd.f32 0.0, %v934
      %v936 = vpop.f32.mrf.mxu0
      %937 = vmatprep.mubr.f32.mxu0 0.0
      %938 = vmatmul.mubr.f32.gmra.mxu0 %v793
      %v939 = vpop.f32.mrf.mxu0
      %v940 = vadd.f32 0.0, %v939
      %v941 = vpop.f32.mrf.mxu0
      %942 = vmatprep.mubr.f32.mxu0 0.0
      %943 = vmatmul.mubr.f32.gmra.mxu0 %v796
      %v944 = vpop.f32.mrf.mxu0
      %v945 = vadd.f32 0.0, %v944
      %v946 = vpop.f32.mrf.mxu0
      %947 = vmatprep.mubr.f32.mxu0 0.0
      %948 = vmatmul.mubr.f32.gmra.mxu0 %v799
      %v949 = vpop.f32.mrf.mxu0
      %v950 = vadd.f32 0.0, %v949
      %v951 = vpop.f32.mrf.mxu0
      %952 = vmatprep.mubr.f32.mxu0 0.0
      %953 = vmatmul.mubr.f32.gmra.mxu0 %v802
      %v954 = vpop.f32.mrf.mxu0
      %v955 = vadd.f32 0.0, %v954
      %v956 = vpop.f32.mrf.mxu0
      %957 = vmatprep.mubr.f32.mxu0 0.0
      %958 = vmatmul.mubr.f32.gmra.mxu0 %v805
      %v959 = vpop.f32.mrf.mxu0
      %v960 = vadd.f32 0.0, %v959
      %v961 = vpop.f32.mrf.mxu0
      %962 = vmatprep.mubr.f32.mxu0 0.0
      %963 = vmatmul.mubr.f32.gmra.mxu0 %v808
      %v964 = vpop.f32.mrf.mxu0
      %v965 = vadd.f32 0.0, %v964
      %v966 = vpop.f32.mrf.mxu0
      %967 = vmatprep.mubr.f32.mxu0 0.0
      %968 = vmatmul.mubr.f32.gmra.mxu0 %v811
      %v969 = vpop.f32.mrf.mxu0
      %v970 = vadd.f32 0.0, %v969
      %v971 = vpop.f32.mrf.mxu0
      %972 = vmatprep.mubr.f32.mxu0 0.0
      %973 = vmatmul.mubr.f32.gmra.mxu0 %v814
      %v974 = vpop.f32.mrf.mxu0
      %v975 = vadd.f32 0.0, %v974
      %v976 = vpop.f32.mrf.mxu0
      %977 = vmatprep.mubr.f32.mxu0 0.0
      %978 = vmatmul.mubr.f32.gmra.mxu0 %v817
      %v979 = vpop.f32.mrf.mxu0
      %v980 = vadd.f32 0.0, %v979
      %v981 = vpop.f32.mrf.mxu0
      %982 = vmatprep.mubr.f32.mxu0 0.0
      %983 = vmatmul.mubr.f32.gmra.mxu0 %v820
      %v984 = vpop.f32.mrf.mxu0
      %v985 = vadd.f32 0.0, %v984
      %v986 = vpop.f32.mrf.mxu0
      %987 = vmatprep.mubr.f32.mxu0 0.0
      %988 = vmatmul.mubr.f32.gmra.mxu0 %v823
      %v989 = vpop.f32.mrf.mxu0
      %v990 = vadd.f32 0.0, %v989
      %v991 = vpop.f32.mrf.mxu0
      %992 = vmatprep.mubr.f32.mxu0 0.0
      %993 = vmatmul.mubr.f32.gmra.mxu0 %v826
      %v994 = vpop.f32.mrf.mxu0
      %v995 = vadd.f32 0.0, %v994
      %v996 = vpop.f32.mrf.mxu0
      %997 = vmatprep.mubr.f32.mxu0 0.0
      %998 = vmatmul.mubr.f32.gmra.mxu0 %v829
      %v999 = vpop.f32.mrf.mxu0
      %v1000 = vadd.f32 0.0, %v999
      %v1001 = vpop.f32.mrf.mxu0
      %1002 = vmatprep.mubr.f32.mxu0 0.0
      %1003 = vmatmul.mubr.f32.gmra.mxu0 %v832
      %v1004 = vpop.f32.mrf.mxu0
      %v1005 = vadd.f32 0.0, %v1004
      %v1006 = vpop.f32.mrf.mxu0
      %1007 = vmatprep.mubr.f32.mxu0 0.0
      %1008 = vmatmul.mubr.f32.gmra.mxu0 %v835
      %v1009 = vpop.f32.mrf.mxu0
      %v1010 = vadd.f32 0.0, %v1009
      %v1011 = vpop.f32.mrf.mxu0
      %1012 = vmatprep.mubr.f32.mxu0 0.0
      %1013 = vmatmul.mubr.f32.gmra.mxu0 %v838
      %v1014 = vpop.f32.mrf.mxu0
      %v1015 = vadd.f32 0.0, %v1014
      %v1016 = vpop.f32.mrf.mxu0
      %1017 = vmatprep.mubr.f32.mxu0 0.0
      %1018 = vmatmul.mubr.f32.gmra.mxu0 %v841
      %v1019 = vpop.f32.mrf.mxu0
      %v1020 = vadd.f32 0.0, %v1019
      %v1021 = vpop.f32.mrf.mxu0
      %1022 = vmatprep.mubr.f32.mxu0 0.0
      %1023 = vmatmul.mubr.f32.gmra.mxu0 %v844
      %v1024 = vpop.f32.mrf.mxu0
      %v1025 = vadd.f32 0.0, %v1024
      %v1026 = vpop.f32.mrf.mxu0
      %1027 = vmatprep.mubr.f32.mxu0 0.0
      %1028 = vmatmul.mubr.f32.gmra.mxu0 %v847
      %v1029 = vpop.f32.mrf.mxu0
      %v1030 = vadd.f32 0.0, %v1029
      %v1031 = vpop.f32.mrf.mxu0
      %1032 = vmatprep.mubr.f32.mxu0 0.0
      %1033 = vmatmul.mubr.f32.gmra.mxu0 %v850
      %v1034 = vpop.f32.mrf.mxu0
      %v1035 = vadd.f32 0.0, %v1034
      %v1036 = vpop.f32.mrf.mxu0
      %1037 = vmatprep.mubr.f32.mxu0 0.0
      %1038 = vmatmul.mubr.f32.gmra.mxu0 %v853
      %v1039 = vpop.f32.mrf.mxu0
      %v1040 = vadd.f32 0.0, %v1039
      %v1041 = vpop.f32.mrf.mxu0
      %1042 = vmatprep.mubr.f32.mxu0 0.0
      %1043 = vmatmul.mubr.f32.gmra.mxu0 %v856
      %v1044 = vpop.f32.mrf.mxu0
      %v1045 = vadd.f32 0.0, %v1044
      %v1046 = vpop.f32.mrf.mxu0
      %1047 = vdwg.mxu0
      %s1048 = scalar_lea.vmem %s165, 600
      %v1049 = vld [vmem:[%s1048] sm:$0xff]
      %v1050 = vld [vmem:[%s1048 + $0x8] sm:$0xff]
      %v1051 = vld [vmem:[%s1048 + $0x10] sm:$0xff]
      %v1052 = vld [vmem:[%s1048 + $0x18] sm:$0xff]
      %v1053 = vld [vmem:[%s1048 + $0x20] sm:$0xff]
      %v1054 = vld [vmem:[%s1048 + $0x28] sm:$0xff]
      %v1055 = vld [vmem:[%s1048 + $0x30] sm:$0xff]
      %v1056 = vld [vmem:[%s1048 + $0x38] sm:$0xff]
      %v1057 = vld [vmem:[%s1048 + $0x40] sm:$0xff]
      %v1058 = vld [vmem:[%s1048 + $0x48] sm:$0xff]
      %v1059 = vld [vmem:[%s1048 + $0x50] sm:$0xff]
      %v1060 = vld [vmem:[%s1048 + $0x58] sm:$0xff]
      %v1061 = vld [vmem:[%s1048 + $0x60] sm:$0xff]
      %v1062 = vld [vmem:[%s1048 + $0x68] sm:$0xff]
      %v1063 = vld [vmem:[%s1048 + $0x70] sm:$0xff]
      %v1064 = vld [vmem:[%s1048 + $0x78] sm:$0xff]
      %v1065 = vld [vmem:[%s1048 + $0x80] sm:$0xff]
      %v1066 = vld [vmem:[%s1048 + $0x88] sm:$0xff]
      %v1067 = vld [vmem:[%s1048 + $0x90] sm:$0xff]
      %v1068 = vld [vmem:[%s1048 + $0x98] sm:$0xff]
      %v1069 = vld [vmem:[%s1048 + $0xa0] sm:$0xff]
      %v1070 = vld [vmem:[%s1048 + $0xa8] sm:$0xff]
      %v1071 = vld [vmem:[%s1048 + $0xb0] sm:$0xff]
      %v1072 = vld [vmem:[%s1048 + $0xb8] sm:$0xff]
      %v1073 = vld [vmem:[%s1048 + $0xc0] sm:$0xf]
      %v1075 = vsel %vm200, %v1049, 0
      %v1078 = vsel %vm200, %v1050, 0
      %v1081 = vsel %vm200, %v1051, 0
      %v1084 = vsel %vm200, %v1052, 0
      %v1087 = vsel %vm200, %v1053, 0
      %v1090 = vsel %vm200, %v1054, 0
      %v1093 = vsel %vm200, %v1055, 0
      %v1096 = vsel %vm200, %v1056, 0
      %v1099 = vsel %vm200, %v1057, 0
      %v1102 = vsel %vm200, %v1058, 0
      %v1105 = vsel %vm200, %v1059, 0
      %v1108 = vsel %vm200, %v1060, 0
      %v1111 = vsel %vm200, %v1061, 0
      %v1114 = vsel %vm200, %v1062, 0
      %v1117 = vsel %vm200, %v1063, 0
      %v1120 = vsel %vm200, %v1064, 0
      %v1123 = vsel %vm200, %v1065, 0
      %v1126 = vsel %vm200, %v1066, 0
      %v1129 = vsel %vm200, %v1067, 0
      %v1132 = vsel %vm200, %v1068, 0
      %v1135 = vsel %vm200, %v1069, 0
      %v1138 = vsel %vm200, %v1070, 0
      %v1141 = vsel %vm200, %v1071, 0
      %v1144 = vsel %vm200, %v1072, 0
      %v1147 = vsel %vm200, %v1073, 0
      %1149 = vmatprep.subr.mxu0 0.0
      %1150 = vmatpush1.msra.mxu0 0.0
      %1151 = vmatprep.subr.mxu0 0.0
      %1152 = vmatpush1.msra.mxu0 0.0
      %1153 = vmatprep.subr.mxu0 0.0
      %1154 = vmatpush1.msra.mxu0 0.0
      %1155 = vmatprep.subr.mxu0 0.0
      %1156 = vmatpush1.msra.mxu0 0.0
      %1157 = vmatprep.subr.mxu0 0.0
      %1158 = vmatpush1.msra.mxu0 0.0
      %1159 = vmatprep.subr.mxu0 0.0
      %1160 = vmatpush1.msra.mxu0 0.0
      %1161 = vmatprep.subr.mxu0 0.0
      %1162 = vmatpush1.msra.mxu0 0.0
      %1163 = vmatprep.subr.mxu0 0.0
      %1164 = vmatpush1.msra.mxu0 0.0
      %1165 = vmatprep.subr.mxu0 0.0
      %1166 = vmatpush1.msra.mxu0 0.0
      %1167 = vmatprep.subr.mxu0 0.0
      %1168 = vmatpush1.msra.mxu0 0.0
      %1169 = vmatprep.subr.mxu0 0.0
      %1170 = vmatpush1.msra.mxu0 0.0
      %1171 = vmatprep.subr.mxu0 0.0
      %1172 = vmatpush1.msra.mxu0 0.0
      %1173 = vmatprep.subr.mxu0 0.0
      %1174 = vmatpush1.msra.mxu0 %v174
      %1175 = vmatprep.subr.mxu0 0.0
      %1176 = vmatpush1.msra.mxu0 %v173
      %1177 = vmatprep.subr.mxu0 0.0
      %1178 = vmatpush1.msra.mxu0 %v172
      %1179 = vmatprep.subr.mxu0 0.0
      %1180 = vmatpush1.msra.mxu0 %v171
      %1181 = vmatprep.subr.mxu0 0.0
      %1182 = vmatpush2.msra.mxu0 0.0
      %1183 = vmatprep.subr.mxu0 0.0
      %1184 = vmatpush2.msra.mxu0 0.0
      %1185 = vmatprep.subr.mxu0 0.0
      %1186 = vmatpush2.msra.mxu0 0.0
      %1187 = vmatprep.subr.mxu0 0.0
      %1188 = vmatpush2.msra.mxu0 0.0
      %1189 = vmatprep.subr.mxu0 0.0
      %1190 = vmatpush2.msra.mxu0 0.0
      %1191 = vmatprep.subr.mxu0 0.0
      %1192 = vmatpush2.msra.mxu0 0.0
      %1193 = vmatprep.subr.mxu0 0.0
      %1194 = vmatpush2.msra.mxu0 0.0
      %1195 = vmatprep.subr.mxu0 0.0
      %1196 = vmatpush2.msra.mxu0 0.0
      %1197 = vmatprep.subr.mxu0 0.0
      %1198 = vmatpush2.msra.mxu0 0.0
      %1199 = vmatprep.subr.mxu0 0.0
      %1200 = vmatpush2.msra.mxu0 0.0
      %1201 = vmatprep.subr.mxu0 0.0
      %1202 = vmatpush2.msra.mxu0 0.0
      %1203 = vmatprep.subr.mxu0 0.0
      %1204 = vmatpush2.msra.mxu0 0.0
      %1205 = vmatprep.subr.mxu0 0.0
      %1206 = vmatpush2.msra.mxu0 0.0
      %1207 = vmatprep.subr.mxu0 0.0
      %1208 = vmatpush2.msra.mxu0 0.0
      %1209 = vmatprep.subr.mxu0 0.0
      %1210 = vmatpush2.msra.mxu0 0.0
      %1211 = vmatprep.subr.mxu0 0.0
      %1212 = vmatpush2.msra.mxu0 0.0
      %1213 = vmatprep.mubr.f32.mxu0 0.0
      %1214 = vmatmul.mubr.f32.gmra.mxu0 %v1075
      %v1215 = vpop.f32.mrf.mxu0
      %v1216 = vadd.f32 0.0, %v1215
      %v1217 = vpop.f32.mrf.mxu0
      %1218 = vmatprep.mubr.f32.mxu0 0.0
      %1219 = vmatmul.mubr.f32.gmra.mxu0 %v1078
      %v1220 = vpop.f32.mrf.mxu0
      %v1221 = vadd.f32 0.0, %v1220
      %v1222 = vpop.f32.mrf.mxu0
      %1223 = vmatprep.mubr.f32.mxu0 0.0
      %1224 = vmatmul.mubr.f32.gmra.mxu0 %v1081
      %v1225 = vpop.f32.mrf.mxu0
      %v1226 = vadd.f32 0.0, %v1225
      %v1227 = vpop.f32.mrf.mxu0
      %1228 = vmatprep.mubr.f32.mxu0 0.0
      %1229 = vmatmul.mubr.f32.gmra.mxu0 %v1084
      %v1230 = vpop.f32.mrf.mxu0
      %v1231 = vadd.f32 0.0, %v1230
      %v1232 = vpop.f32.mrf.mxu0
      %1233 = vmatprep.mubr.f32.mxu0 0.0
      %1234 = vmatmul.mubr.f32.gmra.mxu0 %v1087
      %v1235 = vpop.f32.mrf.mxu0
      %v1236 = vadd.f32 0.0, %v1235
      %v1237 = vpop.f32.mrf.mxu0
      %1238 = vmatprep.mubr.f32.mxu0 0.0
      %1239 = vmatmul.mubr.f32.gmra.mxu0 %v1090
      %v1240 = vpop.f32.mrf.mxu0
      %v1241 = vadd.f32 0.0, %v1240
      %v1242 = vpop.f32.mrf.mxu0
      %1243 = vmatprep.mubr.f32.mxu0 0.0
      %1244 = vmatmul.mubr.f32.gmra.mxu0 %v1093
      %v1245 = vpop.f32.mrf.mxu0
      %v1246 = vadd.f32 0.0, %v1245
      %v1247 = vpop.f32.mrf.mxu0
      %1248 = vmatprep.mubr.f32.mxu0 0.0
      %1249 = vmatmul.mubr.f32.gmra.mxu0 %v1096
      %v1250 = vpop.f32.mrf.mxu0
      %v1251 = vadd.f32 0.0, %v1250
      %v1252 = vpop.f32.mrf.mxu0
      %1253 = vmatprep.mubr.f32.mxu0 0.0
      %1254 = vmatmul.mubr.f32.gmra.mxu0 %v1099
      %v1255 = vpop.f32.mrf.mxu0
      %v1256 = vadd.f32 0.0, %v1255
      %v1257 = vpop.f32.mrf.mxu0
      %1258 = vmatprep.mubr.f32.mxu0 0.0
      %1259 = vmatmul.mubr.f32.gmra.mxu0 %v1102
      %v1260 = vpop.f32.mrf.mxu0
      %v1261 = vadd.f32 0.0, %v1260
      %v1262 = vpop.f32.mrf.mxu0
      %1263 = vmatprep.mubr.f32.mxu0 0.0
      %1264 = vmatmul.mubr.f32.gmra.mxu0 %v1105
      %v1265 = vpop.f32.mrf.mxu0
      %v1266 = vadd.f32 0.0, %v1265
      %v1267 = vpop.f32.mrf.mxu0
      %1268 = vmatprep.mubr.f32.mxu0 0.0
      %1269 = vmatmul.mubr.f32.gmra.mxu0 %v1108
      %v1270 = vpop.f32.mrf.mxu0
      %v1271 = vadd.f32 0.0, %v1270
      %v1272 = vpop.f32.mrf.mxu0
      %1273 = vmatprep.mubr.f32.mxu0 0.0
      %1274 = vmatmul.mubr.f32.gmra.mxu0 %v1111
      %v1275 = vpop.f32.mrf.mxu0
      %v1276 = vadd.f32 0.0, %v1275
      %v1277 = vpop.f32.mrf.mxu0
      %1278 = vmatprep.mubr.f32.mxu0 0.0
      %1279 = vmatmul.mubr.f32.gmra.mxu0 %v1114
      %v1280 = vpop.f32.mrf.mxu0
      %v1281 = vadd.f32 0.0, %v1280
      %v1282 = vpop.f32.mrf.mxu0
      %1283 = vmatprep.mubr.f32.mxu0 0.0
      %1284 = vmatmul.mubr.f32.gmra.mxu0 %v1117
      %v1285 = vpop.f32.mrf.mxu0
      %v1286 = vadd.f32 0.0, %v1285
      %v1287 = vpop.f32.mrf.mxu0
      %1288 = vmatprep.mubr.f32.mxu0 0.0
      %1289 = vmatmul.mubr.f32.gmra.mxu0 %v1120
      %v1290 = vpop.f32.mrf.mxu0
      %v1291 = vadd.f32 0.0, %v1290
      %v1292 = vpop.f32.mrf.mxu0
      %1293 = vmatprep.mubr.f32.mxu0 0.0
      %1294 = vmatmul.mubr.f32.gmra.mxu0 %v1123
      %v1295 = vpop.f32.mrf.mxu0
      %v1296 = vadd.f32 0.0, %v1295
      %v1297 = vpop.f32.mrf.mxu0
      %1298 = vmatprep.mubr.f32.mxu0 0.0
      %1299 = vmatmul.mubr.f32.gmra.mxu0 %v1126
      %v1300 = vpop.f32.mrf.mxu0
      %v1301 = vadd.f32 0.0, %v1300
      %v1302 = vpop.f32.mrf.mxu0
      %1303 = vmatprep.mubr.f32.mxu0 0.0
      %1304 = vmatmul.mubr.f32.gmra.mxu0 %v1129
      %v1305 = vpop.f32.mrf.mxu0
      %v1306 = vadd.f32 0.0, %v1305
      %v1307 = vpop.f32.mrf.mxu0
      %1308 = vmatprep.mubr.f32.mxu0 0.0
      %1309 = vmatmul.mubr.f32.gmra.mxu0 %v1132
      %v1310 = vpop.f32.mrf.mxu0
      %v1311 = vadd.f32 0.0, %v1310
      %v1312 = vpop.f32.mrf.mxu0
      %1313 = vmatprep.mubr.f32.mxu0 0.0
      %1314 = vmatmul.mubr.f32.gmra.mxu0 %v1135
      %v1315 = vpop.f32.mrf.mxu0
      %v1316 = vadd.f32 0.0, %v1315
      %v1317 = vpop.f32.mrf.mxu0
      %1318 = vmatprep.mubr.f32.mxu0 0.0
      %1319 = vmatmul.mubr.f32.gmra.mxu0 %v1138
      %v1320 = vpop.f32.mrf.mxu0
      %v1321 = vadd.f32 0.0, %v1320
      %v1322 = vpop.f32.mrf.mxu0
      %1323 = vmatprep.mubr.f32.mxu0 0.0
      %1324 = vmatmul.mubr.f32.gmra.mxu0 %v1141
      %v1325 = vpop.f32.mrf.mxu0
      %v1326 = vadd.f32 0.0, %v1325
      %v1327 = vpop.f32.mrf.mxu0
      %1328 = vmatprep.mubr.f32.mxu0 0.0
      %1329 = vmatmul.mubr.f32.gmra.mxu0 %v1144
      %v1330 = vpop.f32.mrf.mxu0
      %v1331 = vadd.f32 0.0, %v1330
      %v1332 = vpop.f32.mrf.mxu0
      %1333 = vmatprep.mubr.f32.mxu0 0.0
      %1334 = vmatmul.mubr.f32.gmra.mxu0 %v1147
      %v1335 = vpop.f32.mrf.mxu0
      %v1336 = vadd.f32 0.0, %v1335
      %v1337 = vpop.f32.mrf.mxu0
      %1338 = vdwg.mxu0
      %v1339 = vmax.f32 %v343, %v634
      %v1340 = vmax.f32 %v348, %v639
      %v1341 = vmax.f32 %v353, %v644
      %v1342 = vmax.f32 %v358, %v649
      %v1343 = vmax.f32 %v363, %v654
      %v1344 = vmax.f32 %v368, %v659
      %v1345 = vmax.f32 %v373, %v664
      %v1346 = vmax.f32 %v378, %v669
      %v1347 = vmax.f32 %v383, %v674
      %v1348 = vmax.f32 %v388, %v679
      %v1349 = vmax.f32 %v393, %v684
      %v1350 = vmax.f32 %v398, %v689
      %v1351 = vmax.f32 %v403, %v694
      %v1352 = vmax.f32 %v408, %v699
      %v1353 = vmax.f32 %v413, %v704
      %v1354 = vmax.f32 %v418, %v709
      %v1355 = vmax.f32 %v423, %v714
      %v1356 = vmax.f32 %v428, %v719
      %v1357 = vmax.f32 %v433, %v724
      %v1358 = vmax.f32 %v438, %v729
      %v1359 = vmax.f32 %v443, %v734
      %v1360 = vmax.f32 %v448, %v739
      %v1361 = vmax.f32 %v453, %v744
      %v1362 = vmax.f32 %v458, %v749
      %v1363 = vmax.f32 %v463, %v754
      %v1364 = vmax.f32 %v925, %v1216
      %v1365 = vmax.f32 %v930, %v1221
      %v1366 = vmax.f32 %v935, %v1226
      %v1367 = vmax.f32 %v940, %v1231
      %v1368 = vmax.f32 %v945, %v1236
      %v1369 = vmax.f32 %v950, %v1241
      %v1370 = vmax.f32 %v955, %v1246
      %v1371 = vmax.f32 %v960, %v1251
      %v1372 = vmax.f32 %v965, %v1256
      %v1373 = vmax.f32 %v970, %v1261
      %v1374 = vmax.f32 %v975, %v1266
      %v1375 = vmax.f32 %v980, %v1271
      %v1376 = vmax.f32 %v985, %v1276
      %v1377 = vmax.f32 %v990, %v1281
      %v1378 = vmax.f32 %v995, %v1286
      %v1379 = vmax.f32 %v1000, %v1291
      %v1380 = vmax.f32 %v1005, %v1296
      %v1381 = vmax.f32 %v1010, %v1301
      %v1382 = vmax.f32 %v1015, %v1306
      %v1383 = vmax.f32 %v1020, %v1311
      %v1384 = vmax.f32 %v1025, %v1316
      %v1385 = vmax.f32 %v1030, %v1321
      %v1386 = vmax.f32 %v1035, %v1326
      %v1387 = vmax.f32 %v1040, %v1331
      %v1388 = vmax.f32 %v1045, %v1336
      %v1389 = vmax.f32 %v1339, %v1364
      %v1390 = vmax.f32 %v1340, %v1365
      %v1391 = vmax.f32 %v1341, %v1366
      %v1392 = vmax.f32 %v1342, %v1367
      %v1393 = vmax.f32 %v1343, %v1368
      %v1394 = vmax.f32 %v1344, %v1369
      %v1395 = vmax.f32 %v1345, %v1370
      %v1396 = vmax.f32 %v1346, %v1371
      %v1397 = vmax.f32 %v1347, %v1372
      %v1398 = vmax.f32 %v1348, %v1373
      %v1399 = vmax.f32 %v1349, %v1374
      %v1400 = vmax.f32 %v1350, %v1375
      %v1401 = vmax.f32 %v1351, %v1376
      %v1402 = vmax.f32 %v1352, %v1377
      %v1403 = vmax.f32 %v1353, %v1378
      %v1404 = vmax.f32 %v1354, %v1379
      %v1405 = vmax.f32 %v1355, %v1380
      %v1406 = vmax.f32 %v1356, %v1381
      %v1407 = vmax.f32 %v1357, %v1382
      %v1408 = vmax.f32 %v1358, %v1383
      %v1409 = vmax.f32 %v1359, %v1384
      %v1410 = vmax.f32 %v1360, %v1385
      %v1411 = vmax.f32 %v1361, %v1386
      %v1412 = vmax.f32 %v1362, %v1387
      %v1413 = vmax.f32 %v1363, %v1388
      %v1414 = vld [vmem:[%s2] sm:$0x1]
      %v1416 = vlaneseq
      %v1417 = vshrl.u32 %v1416, 7
      %v1418 = vsub.s32 0, %v1417
      %v1419 = vrot.slane %v1414, %v1418
      %v1421 = vadd.f32 %v1389, %v1419
      %v1422 = vadd.f32 %v1390, %v1419
      %v1423 = vadd.f32 %v1391, %v1419
      %v1424 = vadd.f32 %v1392, %v1419
      %v1425 = vadd.f32 %v1393, %v1419
      %v1426 = vadd.f32 %v1394, %v1419
      %v1427 = vadd.f32 %v1395, %v1419
      %v1428 = vadd.f32 %v1396, %v1419
      %v1429 = vadd.f32 %v1397, %v1419
      %v1430 = vadd.f32 %v1398, %v1419
      %v1431 = vadd.f32 %v1399, %v1419
      %v1432 = vadd.f32 %v1400, %v1419
      %v1433 = vadd.f32 %v1401, %v1419
      %v1434 = vadd.f32 %v1402, %v1419
      %v1435 = vadd.f32 %v1403, %v1419
      %v1436 = vadd.f32 %v1404, %v1419
      %v1437 = vadd.f32 %v1405, %v1419
      %v1438 = vadd.f32 %v1406, %v1419
      %v1439 = vadd.f32 %v1407, %v1419
      %v1440 = vadd.f32 %v1408, %v1419
      %v1441 = vadd.f32 %v1409, %v1419
      %v1442 = vadd.f32 %v1410, %v1419
      %v1443 = vadd.f32 %v1411, %v1419
      %v1444 = vadd.f32 %v1412, %v1419
      %v1445 = vadd.f32 %v1413, %v1419
      %v1446 = vmax.f32 %v1421, 0.0
      %v1447 = vmax.f32 %v1422, 0.0
      %v1448 = vmax.f32 %v1423, 0.0
      %v1449 = vmax.f32 %v1424, 0.0
      %v1450 = vmax.f32 %v1425, 0.0
      %v1451 = vmax.f32 %v1426, 0.0
      %v1452 = vmax.f32 %v1427, 0.0
      %v1453 = vmax.f32 %v1428, 0.0
      %v1454 = vmax.f32 %v1429, 0.0
      %v1455 = vmax.f32 %v1430, 0.0
      %v1456 = vmax.f32 %v1431, 0.0
      %v1457 = vmax.f32 %v1432, 0.0
      %v1458 = vmax.f32 %v1433, 0.0
      %v1459 = vmax.f32 %v1434, 0.0
      %v1460 = vmax.f32 %v1435, 0.0
      %v1461 = vmax.f32 %v1436, 0.0
      %v1462 = vmax.f32 %v1437, 0.0
      %v1463 = vmax.f32 %v1438, 0.0
      %v1464 = vmax.f32 %v1439, 0.0
      %v1465 = vmax.f32 %v1440, 0.0
      %v1466 = vmax.f32 %v1441, 0.0
      %v1467 = vmax.f32 %v1442, 0.0
      %v1468 = vmax.f32 %v1443, 0.0
      %v1469 = vmax.f32 %v1444, 0.0
      %v1470 = vmax.f32 %v1445, 0.0
      %1471 = vst [vmem:[%s170] sm:$0xff] %v1446
      %1472 = vst [vmem:[%s170 + $0x8] sm:$0xff] %v1447
      %1473 = vst [vmem:[%s170 + $0x10] sm:$0xff] %v1448
      %1474 = vst [vmem:[%s170 + $0x18] sm:$0xff] %v1449
      %1475 = vst [vmem:[%s170 + $0x20] sm:$0xff] %v1450
      %1476 = vst [vmem:[%s170 + $0x28] sm:$0xff] %v1451
      %1477 = vst [vmem:[%s170 + $0x30] sm:$0xff] %v1452
      %1478 = vst [vmem:[%s170 + $0x38] sm:$0xff] %v1453
      %1479 = vst [vmem:[%s170 + $0x40] sm:$0xff] %v1454
      %1480 = vst [vmem:[%s170 + $0x48] sm:$0xff] %v1455
      %1481 = vst [vmem:[%s170 + $0x50] sm:$0xff] %v1456
      %1482 = vst [vmem:[%s170 + $0x58] sm:$0xff] %v1457
      %1483 = vst [vmem:[%s170 + $0x60] sm:$0xff] %v1458
      %1484 = vst [vmem:[%s170 + $0x68] sm:$0xff] %v1459
      %1485 = vst [vmem:[%s170 + $0x70] sm:$0xff] %v1460
      %1486 = vst [vmem:[%s170 + $0x78] sm:$0xff] %v1461
      %1487 = vst [vmem:[%s170 + $0x80] sm:$0xff] %v1462
      %1488 = vst [vmem:[%s170 + $0x88] sm:$0xff] %v1463
      %1489 = vst [vmem:[%s170 + $0x90] sm:$0xff] %v1464
      %1490 = vst [vmem:[%s170 + $0x98] sm:$0xff] %v1465
      %1491 = vst [vmem:[%s170 + $0xa0] sm:$0xff] %v1466
      %1492 = vst [vmem:[%s170 + $0xa8] sm:$0xff] %v1467
      %1493 = vst [vmem:[%s170 + $0xb0] sm:$0xff] %v1468
      %1494 = vst [vmem:[%s170 + $0xb8] sm:$0xff] %v1469
      %1495 = vst [vmem:[%s170 + $0xc0] sm:$0xf] %v1470
      %p1496 = scmp.lt.s32.totalorder %s14, 1
      %s1497 = scalar_select %p1496, %s14, 1
      %s1498 = smul.addr %s1497, 25
      %s1499 = smul.addr %s1498, 8
      %s1500 = scalar_lea.vmem %s3, %s1499
      // Predicated region
      $region33: #{lenet5_forward.3} parent=31 // pred_check
        %p1501 = pneg %p100
      $region34: #{lenet5_forward.3} parent=31 // pred_check_branch
        %1503 = sbr.rel (%p1501) target = $region36
      $region35: #{lenet5_forward.3} parent=31 // pred_region
        _
      $region36: #{lenet5_forward.3} parent=31 // pred_fallthru
        _
    $region32: #{lenet5_forward.3} parent=5 // pred_fallthru
      _
    %p1504 = scmp.le.s32.totalorder 2, %s9
    // Predicated region
    $region37: #{lenet5_forward.3} parent=5 // pred_check
      %p1505 = pneg %p1504
    $region38: #{lenet5_forward.3} parent=5 // pred_check_branch
      %1507 = sbr.rel (%p1505) target = $region40
    $region39: #{lenet5_forward.3} parent=5 // pred_region
      %s1508 = ssub.s32 %s9, 2
      // Predicated region
      $region41: #{lenet5_forward.3} parent=39 // pred_check
        %p1509 = pneg %p106
      $region42: #{lenet5_forward.3} parent=39 // pred_check_branch
        %1511 = sbr.rel (%p1509) target = $region44
      $region43: #{lenet5_forward.3} parent=39 // pred_region
        %p1512 = scmp.lt.s32.totalorder %s15, 1
        %s1513 = scalar_select %p1512, %s15, 1
        %s1514 = smul.addr %s1513, 25
        %s1515 = smul.addr %s1514, 8
        %s1516 = scalar_lea.vmem %s3, %s1515
      $region44: #{lenet5_forward.3} parent=39 // pred_fallthru
        _
    $region40: #{lenet5_forward.3} parent=5 // pred_fallthru
      _
  $region6: #{lenet5_forward.3} parent=0 // loop_footer
    %s13 = sadd.s32 1, %s9
  $region7: #{lenet5_forward.3} parent=0 // loop_footer_branch
    %8 = sbr.rel target = $region3
  $region8: #{lenet5_forward.3} parent=0 // loop_exit
    _

// kernel: lenet5_forward.4
$region0: #{lenet5_forward.4}
  #allocation0 [shape = 'u32[]', space=smem, size = 0x4, offset = 0x4, fixed_abs, tag = 'smem constant byte address 0x4 - core index']
  #allocation1 [shape = 'u32[144,128]{1,0:T(1,128)}', space=vmem, size = 0x12000, scoped, tag = 'internal scratch']
  %s0 = inlined_call_operand.vmem [shape: f32[2,4,25,152], index: 0, kind: input, shape index: {}]
  %s1 = inlined_call_operand.vmem [shape: f32[152,128], index: 1, kind: input, shape index: {}]
  %s2 = inlined_call_operand.vmem [shape: f32[1,128], index: 2, kind: input, shape index: {}]
  %s3 = inlined_call_operand.vmem [shape: f32[152,128], index: 3, kind: input, shape index: {}]
  %s4 = inlined_call_operand.vmem [shape: f32[1,128], index: 4, kind: input, shape index: {}]
  %s5 = inlined_call_operand.vmem [shape: f32[2,25,128], index: 5, kind: output, shape index: {}]
  %s6 = sld [smem:[#allocation0]]
  $region53: #{lenet5_forward.4} parent=0
    _
  %s8 = ssub.s32 1, %s6
  %s9 = scalar_select 0, %s8, %s6
  loop: start=0, step=1, limit=4
  $region2: #{lenet5_forward.4} parent=0 // loop_pre_header
    _
  $region3: #{lenet5_forward.4} parent=0 // loop_header
    %s11 = sphi 0, %s15
    %p12 = scmp.ge.s32.totalorder %s11, 4
    %s21 = sphi 0, %s23
    %s24 = sphi 0, %s21
    %s25 = sphi 0, %s24
    %s41 = sphi 0, %s25
    %s45 = sphi 0, %s45
    %s47 = sphi 0, %s45
    %s48 = sphi 0, %s47
    %s62 = sphi 0, %s48
    %s66 = sphi 0, %s66
    %s68 = sphi 0, %s66
    %s69 = sphi 0, %s68
    %s83 = sphi 0, %s69
    %s87 = sphi 0, %s87
    %s89 = sphi 0, %s87
    %s90 = sphi 0, %s89
    %s104 = sphi 0, %s90
    %s108 = sphi 0, %s108
    %s110 = sphi 0, %s108
    %s111 = sphi 0, %s110
    %s125 = sphi 0, %s111
    %s131 = sphi 0, %s133
    %s134 = sphi 0, %s131
    %s135 = sphi 0, %s134
    %s151 = sphi 0, %s135
  $region4: #{lenet5_forward.4} parent=0 // loop_header_branch
    %14 = sbr.rel (%p12) target = $region8
  $region5: #{lenet5_forward.4} parent=0 // loop_body
    %s16 = ssub.s32 %s11, 1
    %s17 = ssub.s32 %s11, 2
    %s18 = sadd.s32 %s11, 1
    %s19 = ssub.s32 %s11, %s18
    %p20 = scmp.eq.s32.totalorder %s19, 0
    %s22 = sadd.s32 %s21, 1
    %s23 = scalar_select %p20, %s21, %s22
    %p26 = pneg %p20
    %p27 = scmp.eq.s32.totalorder %s11, 1
    %p28 = por %p26, %p27
    %p29 = scmp.ne.s32.totalorder %s21, %s24
    %p30 = scmp.eq.s32.totalorder %s11, 0
    %p31 = por %p29, %p30
    %p32 = scmp.ne.s32.totalorder %s21, %s24
    %p33 = scmp.eq.s32.totalorder %s16, 1
    %p34 = por %p32, %p33
    %p35 = scmp.ne.s32.totalorder %s24, %s25
    %p36 = scmp.eq.s32.totalorder %s16, 0
    %p37 = por %p35, %p36
    %p38 = scmp.ne.s32.totalorder %s24, %s25
    %p39 = scmp.eq.s32.totalorder %s17, 1
    %p40 = por %p38, %p39
    %p42 = scmp.ne.s32.totalorder %s25, %s41
    %p43 = scmp.eq.s32.totalorder %s17, 0
    %p44 = por %p42, %p43
    %s46 = sadd.s32 %s45, 1
    %p49 = scmp.eq.s32.totalorder %s11, 1
    %p50 = scmp.ne.s32.totalorder %s45, %s47
    %p51 = scmp.eq.s32.totalorder %s11, 0
    %p52 = por %p50, %p51
    %p53 = scmp.ne.s32.totalorder %s45, %s47
    %p54 = scmp.eq.s32.totalorder %s16, 1
    %p55 = por %p53, %p54
    %p56 = scmp.ne.s32.totalorder %s47, %s48
    %p57 = scmp.eq.s32.totalorder %s16, 0
    %p58 = por %p56, %p57
    %p59 = scmp.ne.s32.totalorder %s47, %s48
    %p60 = scmp.eq.s32.totalorder %s17, 1
    %p61 = por %p59, %p60
    %p63 = scmp.ne.s32.totalorder %s48, %s62
    %p64 = scmp.eq.s32.totalorder %s17, 0
    %p65 = por %p63, %p64
    %s67 = sadd.s32 %s66, 1
    %p70 = scmp.eq.s32.totalorder %s11, 1
    %p71 = scmp.ne.s32.totalorder %s66, %s68
    %p72 = scmp.eq.s32.totalorder %s11, 0
    %p73 = por %p71, %p72
    %p74 = scmp.ne.s32.totalorder %s66, %s68
    %p75 = scmp.eq.s32.totalorder %s16, 1
    %p76 = por %p74, %p75
    %p77 = scmp.ne.s32.totalorder %s68, %s69
    %p78 = scmp.eq.s32.totalorder %s16, 0
    %p79 = por %p77, %p78
    %p80 = scmp.ne.s32.totalorder %s68, %s69
    %p81 = scmp.eq.s32.totalorder %s17, 1
    %p82 = por %p80, %p81
    %p84 = scmp.ne.s32.totalorder %s69, %s83
    %p85 = scmp.eq.s32.totalorder %s17, 0
    %p86 = por %p84, %p85
    %s88 = sadd.s32 %s87, 1
    %p91 = scmp.eq.s32.totalorder %s11, 1
    %p92 = scmp.ne.s32.totalorder %s87, %s89
    %p93 = scmp.eq.s32.totalorder %s11, 0
    %p94 = por %p92, %p93
    %p95 = scmp.ne.s32.totalorder %s87, %s89
    %p96 = scmp.eq.s32.totalorder %s16, 1
    %p97 = por %p95, %p96
    %p98 = scmp.ne.s32.totalorder %s89, %s90
    %p99 = scmp.eq.s32.totalorder %s16, 0
    %p100 = por %p98, %p99
    %p101 = scmp.ne.s32.totalorder %s89, %s90
    %p102 = scmp.eq.s32.totalorder %s17, 1
    %p103 = por %p101, %p102
    %p105 = scmp.ne.s32.totalorder %s90, %s104
    %p106 = scmp.eq.s32.totalorder %s17, 0
    %p107 = por %p105, %p106
    %s109 = sadd.s32 %s108, 1
    %p112 = scmp.eq.s32.totalorder %s11, 1
    %p113 = scmp.ne.s32.totalorder %s108, %s110
    %p114 = scmp.eq.s32.totalorder %s11, 0
    %p115 = por %p113, %p114
    %p116 = scmp.ne.s32.totalorder %s108, %s110
    %p117 = scmp.eq.s32.totalorder %s16, 1
    %p118 = por %p116, %p117
    %p119 = scmp.ne.s32.totalorder %s110, %s111
    %p120 = scmp.eq.s32.totalorder %s16, 0
    %p121 = por %p119, %p120
    %p122 = scmp.ne.s32.totalorder %s110, %s111
    %p123 = scmp.eq.s32.totalorder %s17, 1
    %p124 = por %p122, %p123
    %p126 = scmp.ne.s32.totalorder %s111, %s125
    %p127 = scmp.eq.s32.totalorder %s17, 0
    %p128 = por %p126, %p127
    %s129 = ssub.s32 %s11, %s18
    %p130 = scmp.eq.s32.totalorder %s129, 0
    %s132 = sadd.s32 %s131, 1
    %s133 = scalar_select %p130, %s131, %s132
    %p136 = pneg %p130
    %p137 = scmp.eq.s32.totalorder %s11, 1
    %p138 = por %p136, %p137
    %p139 = scmp.ne.s32.totalorder %s131, %s134
    %p140 = scmp.eq.s32.totalorder %s11, 0
    %p141 = por %p139, %p140
    %p142 = scmp.ne.s32.totalorder %s131, %s134
    %p143 = scmp.eq.s32.totalorder %s16, 1
    %p144 = por %p142, %p143
    %p145 = scmp.ne.s32.totalorder %s134, %s135
    %p146 = scmp.eq.s32.totalorder %s16, 0
    %p147 = por %p145, %p146
    %p148 = scmp.ne.s32.totalorder %s134, %s135
    %p149 = scmp.eq.s32.totalorder %s17, 1
    %p150 = por %p148, %p149
    %p152 = scmp.ne.s32.totalorder %s135, %s151
    %p153 = scmp.eq.s32.totalorder %s17, 0
    %p154 = por %p152, %p153
    %p155 = scmp.le.s32.totalorder 1, %s11
    %p156 = scmp.lt.s32.totalorder %s11, 3
    %p157 = pnand %p155, %p156
    %p158 = pneg %p157
    // Predicated region
    $region9: #{lenet5_forward.4} parent=5 // pred_check
      _
    $region10: #{lenet5_forward.4} parent=5 // pred_check_branch
      %160 = sbr.rel (%p157) target = $region12
    $region11: #{lenet5_forward.4} parent=5 // pred_region
      %s161 = ssub.s32 %s11, 1
      // Predicated region
      $region13: #{lenet5_forward.4} parent=11 // pred_check
        %p162 = pneg %p58
      $region14: #{lenet5_forward.4} parent=11 // pred_check_branch
        %164 = sbr.rel (%p162) target = $region16
      $region15: #{lenet5_forward.4} parent=11 // pred_region
        _
      $region16: #{lenet5_forward.4} parent=11 // pred_fallthru
        _
      // Predicated region
      $region17: #{lenet5_forward.4} parent=11 // pred_check
        %p165 = pneg %p79
      $region18: #{lenet5_forward.4} parent=11 // pred_check_branch
        %167 = sbr.rel (%p165) target = $region20
      $region19: #{lenet5_forward.4} parent=11 // pred_region
        _
      $region20: #{lenet5_forward.4} parent=11 // pred_fallthru
        _
      // Predicated region
      $region21: #{lenet5_forward.4} parent=11 // pred_check
        %p168 = pneg %p100
      $region22: #{lenet5_forward.4} parent=11 // pred_check_branch
        %170 = sbr.rel (%p168) target = $region24
      $region23: #{lenet5_forward.4} parent=11 // pred_region
        _
      $region24: #{lenet5_forward.4} parent=11 // pred_fallthru
        _
      // Predicated region
      $region25: #{lenet5_forward.4} parent=11 // pred_check
        %p171 = pneg %p121
      $region26: #{lenet5_forward.4} parent=11 // pred_check_branch
        %173 = sbr.rel (%p171) target = $region28
      $region27: #{lenet5_forward.4} parent=11 // pred_region
        _
      $region28: #{lenet5_forward.4} parent=11 // pred_fallthru
        _
    $region12: #{lenet5_forward.4} parent=5 // pred_fallthru
      _
    %p174 = scmp.lt.s32.totalorder %s11, 2
    // Predicated region
    $region29: #{lenet5_forward.4} parent=5 // pred_check
      %p175 = pneg %p174
    $region30: #{lenet5_forward.4} parent=5 // pred_check_branch
      %177 = sbr.rel (%p175) target = $region32
    $region31: #{lenet5_forward.4} parent=5 // pred_region
      // Predicated region
      $region33: #{lenet5_forward.4} parent=31 // pred_check
        %p178 = pneg %p31
      $region34: #{lenet5_forward.4} parent=31 // pred_check_branch
        %180 = sbr.rel (%p178) target = $region36
      $region35: #{lenet5_forward.4} parent=31 // pred_region
        %p181 = scmp.lt.s32.totalorder %s11, 1
        %s182 = scalar_select %p181, %s11, 1
        %s183 = smul.addr %s182, 32
        %s184 = smul.addr %s183, 8
        %s185 = scalar_lea.vmem %s0, %s184
      $region36: #{lenet5_forward.4} parent=31 // pred_fallthru
        _
    $region32: #{lenet5_forward.4} parent=5 // pred_fallthru
      _
    %p186 = scmp.le.s32.totalorder 1, %s11
    %p187 = scmp.lt.s32.totalorder %s11, 3
    %p188 = pnand %p186, %p187
    %p189 = pneg %p188
    // Predicated region
    $region37: #{lenet5_forward.4} parent=5 // pred_check
      _
    $region38: #{lenet5_forward.4} parent=5 // pred_check_branch
      %191 = sbr.rel (%p188) target = $region40
    $region39: #{lenet5_forward.4} parent=5 // pred_region
      %s192 = ssub.s32 %s11, 1
      %p193 = scmp.lt.s32.totalorder %s16, 1
      %s194 = scalar_select %p193, %s16, 1
      %s195 = smul.addr %s194, 32
      %s196 = smul.addr %s195, 8
      %s197 = scalar_lea.vmem %s0, %s196
      %p198 = pneg %p37
      %p199 = pneg %p34
      %p200 = pneg %p58
      %p201 = pneg %p55
      %p202 = pneg %p79
      %p203 = pneg %p76
      %p204 = pneg %p100
      %p205 = pneg %p97
      %p206 = pneg %p121
      %p207 = pneg %p118
      %p208 = pneg %p147
      %p209 = pneg %p144
      %p210 = scmp.lt.s32.totalorder %s16, 1
      %s211 = scalar_select %p210, %s16, 1
      %s212 = smul.addr %s211, 4
      %s213 = smul.addr %s212, 8
      %s214 = scalar_lea.vmem %s5, %s213
      %p215 = scmp.lt.s32.totalorder %s16, 1
      %s216 = scalar_select %p215, %s16, 1
      %s217 = smul.addr %s216, 32
      %s218 = smul.addr %s217, 8
      %s219 = scalar_lea.vmem %s0, %s218
      %p220 = scmp.lt.s32.totalorder %s16, 1
      %s221 = scalar_select %p220, %s16, 1
      %s222 = smul.addr %s221, 4
      %s223 = smul.addr %s222, 8
      %s224 = scalar_lea.vmem %s5, %s223
      %v225 = vld [vmem:[%s1] sm:$0xff]
      %v226 = vld [vmem:[%s1 + $0x8] sm:$0xff]
      %v227 = vld [vmem:[%s1 + $0x10] sm:$0xff]
      %v228 = vld [vmem:[%s1 + $0x18] sm:$0xff]
      %v229 = vld [vmem:[%s1 + $0x20] sm:$0xff]
      %v230 = vld [vmem:[%s1 + $0x28] sm:$0xff]
      %v231 = vld [vmem:[%s1 + $0x30] sm:$0xff]
      %v232 = vld [vmem:[%s1 + $0x38] sm:$0xff]
      %v233 = vld [vmem:[%s1 + $0x40] sm:$0xff]
      %v234 = vld [vmem:[%s1 + $0x48] sm:$0xff]
      %v235 = vld [vmem:[%s1 + $0x50] sm:$0xff]
      %v236 = vld [vmem:[%s1 + $0x58] sm:$0xff]
      %v237 = vld [vmem:[%s1 + $0x60] sm:$0xff]
      %v238 = vld [vmem:[%s1 + $0x68] sm:$0xff]
      %v239 = vld [vmem:[%s1 + $0x70] sm:$0xff]
      %v240 = vld [vmem:[%s1 + $0x78] sm:$0xff]
      %v241 = vld [vmem:[%s1 + $0x80] sm:$0xff]
      %v242 = vld [vmem:[%s1 + $0x88] sm:$0xff]
      %v243 = vld [vmem:[%s1 + $0x90] sm:$0xff]
      %v244 = vld [vmem:[%s2] sm:$0x1]
      %v245 = vld [vmem:[%s219] sm:$0xff]
      %v246 = vld [vmem:[%s219 + $0x8] sm:$0xff]
      %v247 = vld [vmem:[%s219 + $0x10] sm:$0xff]
      %v248 = vld [vmem:[%s219 + $0x18] sm:$0xff]
      %v249 = vld [vmem:[%s219 + $0x20] sm:$0xff]
      %v250 = vld [vmem:[%s219 + $0x28] sm:$0xff]
      %v251 = vld [vmem:[%s219 + $0x30] sm:$0x1]
      %v252 = vld [vmem:[%s219 + $0x38] sm:$0x1]
      %vm253 = vcmask 195584
      %v255 = vsel %vm253, %v246, 0
      %v258 = vsel %vm253, %v248, 0
      %v261 = vsel %vm253, %v250, 0
      %v264 = vsel %vm253, %v252, 0
      %266 = vmatprep.subr.mxu0 0.0
      %267 = vmatpush1.msra.mxu0 %v240
      %268 = vmatprep.subr.mxu0 0.0
      %269 = vmatpush1.msra.mxu0 %v239
      %270 = vmatprep.subr.mxu0 0.0
      %271 = vmatpush1.msra.mxu0 %v238
      %272 = vmatprep.subr.mxu0 0.0
      %273 = vmatpush1.msra.mxu0 %v237
      %274 = vmatprep.subr.mxu0 0.0
      %275 = vmatpush1.msra.mxu0 %v236
      %276 = vmatprep.subr.mxu0 0.0
      %277 = vmatpush1.msra.mxu0 %v235
      %278 = vmatprep.subr.mxu0 0.0
      %279 = vmatpush1.msra.mxu0 %v234
      %280 = vmatprep.subr.mxu0 0.0
      %281 = vmatpush1.msra.mxu0 %v233
      %282 = vmatprep.subr.mxu0 0.0
      %283 = vmatpush1.msra.mxu0 %v232
      %284 = vmatprep.subr.mxu0 0.0
      %285 = vmatpush1.msra.mxu0 %v231
      %286 = vmatprep.subr.mxu0 0.0
      %287 = vmatpush1.msra.mxu0 %v230
      %288 = vmatprep.subr.mxu0 0.0
      %289 = vmatpush1.msra.mxu0 %v229
      %290 = vmatprep.subr.mxu0 0.0
      %291 = vmatpush1.msra.mxu0 %v228
      %292 = vmatprep.subr.mxu0 0.0
      %293 = vmatpush1.msra.mxu0 %v227
      %294 = vmatprep.subr.mxu0 0.0
      %295 = vmatpush1.msra.mxu0 %v226
      %296 = vmatprep.subr.mxu0 0.0
      %297 = vmatpush1.msra.mxu0 %v225
      %298 = vmatprep.subr.mxu0 0.0
      %299 = vmatpush2.msra.mxu0 0.0
      %300 = vmatprep.subr.mxu0 0.0
      %301 = vmatpush2.msra.mxu0 0.0
      %302 = vmatprep.subr.mxu0 0.0
      %303 = vmatpush2.msra.mxu0 0.0
      %304 = vmatprep.subr.mxu0 0.0
      %305 = vmatpush2.msra.mxu0 0.0
      %306 = vmatprep.subr.mxu0 0.0
      %307 = vmatpush2.msra.mxu0 0.0
      %308 = vmatprep.subr.mxu0 0.0
      %309 = vmatpush2.msra.mxu0 0.0
      %310 = vmatprep.subr.mxu0 0.0
      %311 = vmatpush2.msra.mxu0 0.0
      %312 = vmatprep.subr.mxu0 0.0
      %313 = vmatpush2.msra.mxu0 0.0
      %314 = vmatprep.subr.mxu0 0.0
      %315 = vmatpush2.msra.mxu0 0.0
      %316 = vmatprep.subr.mxu0 0.0
      %317 = vmatpush2.msra.mxu0 0.0
      %318 = vmatprep.subr.mxu0 0.0
      %319 = vmatpush2.msra.mxu0 0.0
      %320 = vmatprep.subr.mxu0 0.0
      %321 = vmatpush2.msra.mxu0 0.0
      %322 = vmatprep.subr.mxu0 0.0
      %323 = vmatpush2.msra.mxu0 0.0
      %324 = vmatprep.subr.mxu0 0.0
      %325 = vmatpush2.msra.mxu0 %v243
      %326 = vmatprep.subr.mxu0 0.0
      %327 = vmatpush2.msra.mxu0 %v242
      %328 = vmatprep.subr.mxu0 0.0
      %329 = vmatpush2.msra.mxu0 %v241
      %330 = vmatprep.mubr.f32.mxu0 %v255
      %331 = vmatmul.mubr.f32.gmra.mxu0 %v245
      %v332 = vpop.f32.mrf.mxu0
      %v333 = vadd.f32 0.0, %v332
      %v334 = vpop.f32.mrf.mxu0
      %335 = vmatprep.mubr.f32.mxu0 %v258
      %336 = vmatmul.mubr.f32.gmra.mxu0 %v247
      %v337 = vpop.f32.mrf.mxu0
      %v338 = vadd.f32 0.0, %v337
      %v339 = vpop.f32.mrf.mxu0
      %340 = vmatprep.mubr.f32.mxu0 %v261
      %341 = vmatmul.mubr.f32.gmra.mxu0 %v249
      %v342 = vpop.f32.mrf.mxu0
      %v343 = vadd.f32 0.0, %v342
      %v344 = vpop.f32.mrf.mxu0
      %345 = vmatprep.mubr.f32.mxu0 %v264
      %346 = vmatmul.mubr.f32.gmra.mxu0 %v251
      %v347 = vpop.f32.mrf.mxu0
      %v348 = vadd.f32 0.0, %v347
      %v349 = vpop.f32.mrf.mxu0
      %350 = vdwg.mxu0
      %s351 = scalar_lea.vmem %s219, 64
      %v352 = vld [vmem:[%s351] sm:$0xff]
      %v353 = vld [vmem:[%s351 + $0x8] sm:$0xff]
      %v354 = vld [vmem:[%s351 + $0x10] sm:$0xff]
      %v355 = vld [vmem:[%s351 + $0x18] sm:$0xff]
      %v356 = vld [vmem:[%s351 + $0x20] sm:$0xff]
      %v357 = vld [vmem:[%s351 + $0x28] sm:$0xff]
      %v358 = vld [vmem:[%s351 + $0x30] sm:$0x1]
      %v359 = vld [vmem:[%s351 + $0x38] sm:$0x1]
      %v361 = vsel %vm253, %v353, 0
      %v364 = vsel %vm253, %v355, 0
      %v367 = vsel %vm253, %v357, 0
      %v370 = vsel %vm253, %v359, 0
      %372 = vmatprep.subr.mxu0 0.0
      %373 = vmatpush1.msra.mxu0 %v240
      %374 = vmatprep.subr.mxu0 0.0
      %375 = vmatpush1.msra.mxu0 %v239
      %376 = vmatprep.subr.mxu0 0.0
      %377 = vmatpush1.msra.mxu0 %v238
      %378 = vmatprep.subr.mxu0 0.0
      %379 = vmatpush1.msra.mxu0 %v237
      %380 = vmatprep.subr.mxu0 0.0
      %381 = vmatpush1.msra.mxu0 %v236
      %382 = vmatprep.subr.mxu0 0.0
      %383 = vmatpush1.msra.mxu0 %v235
      %384 = vmatprep.subr.mxu0 0.0
      %385 = vmatpush1.msra.mxu0 %v234
      %386 = vmatprep.subr.mxu0 0.0
      %387 = vmatpush1.msra.mxu0 %v233
      %388 = vmatprep.subr.mxu0 0.0
      %389 = vmatpush1.msra.mxu0 %v232
      %390 = vmatprep.subr.mxu0 0.0
      %391 = vmatpush1.msra.mxu0 %v231
      %392 = vmatprep.subr.mxu0 0.0
      %393 = vmatpush1.msra.mxu0 %v230
      %394 = vmatprep.subr.mxu0 0.0
      %395 = vmatpush1.msra.mxu0 %v229
      %396 = vmatprep.subr.mxu0 0.0
      %397 = vmatpush1.msra.mxu0 %v228
      %398 = vmatprep.subr.mxu0 0.0
      %399 = vmatpush1.msra.mxu0 %v227
      %400 = vmatprep.subr.mxu0 0.0
      %401 = vmatpush1.msra.mxu0 %v226
      %402 = vmatprep.subr.mxu0 0.0
      %403 = vmatpush1.msra.mxu0 %v225
      %404 = vmatprep.subr.mxu0 0.0
      %405 = vmatpush2.msra.mxu0 0.0
      %406 = vmatprep.subr.mxu0 0.0
      %407 = vmatpush2.msra.mxu0 0.0
      %408 = vmatprep.subr.mxu0 0.0
      %409 = vmatpush2.msra.mxu0 0.0
      %410 = vmatprep.subr.mxu0 0.0
      %411 = vmatpush2.msra.mxu0 0.0
      %412 = vmatprep.subr.mxu0 0.0
      %413 = vmatpush2.msra.mxu0 0.0
      %414 = vmatprep.subr.mxu0 0.0
      %415 = vmatpush2.msra.mxu0 0.0
      %416 = vmatprep.subr.mxu0 0.0
      %417 = vmatpush2.msra.mxu0 0.0
      %418 = vmatprep.subr.mxu0 0.0
      %419 = vmatpush2.msra.mxu0 0.0
      %420 = vmatprep.subr.mxu0 0.0
      %421 = vmatpush2.msra.mxu0 0.0
      %422 = vmatprep.subr.mxu0 0.0
      %423 = vmatpush2.msra.mxu0 0.0
      %424 = vmatprep.subr.mxu0 0.0
      %425 = vmatpush2.msra.mxu0 0.0
      %426 = vmatprep.subr.mxu0 0.0
      %427 = vmatpush2.msra.mxu0 0.0
      %428 = vmatprep.subr.mxu0 0.0
      %429 = vmatpush2.msra.mxu0 0.0
      %430 = vmatprep.subr.mxu0 0.0
      %431 = vmatpush2.msra.mxu0 %v243
      %432 = vmatprep.subr.mxu0 0.0
      %433 = vmatpush2.msra.mxu0 %v242
      %434 = vmatprep.subr.mxu0 0.0
      %435 = vmatpush2.msra.mxu0 %v241
      %436 = vmatprep.mubr.f32.mxu0 %v361
      %437 = vmatmul.mubr.f32.gmra.mxu0 %v352
      %v438 = vpop.f32.mrf.mxu0
      %v439 = vadd.f32 0.0, %v438
      %v440 = vpop.f32.mrf.mxu0
      %441 = vmatprep.mubr.f32.mxu0 %v364
      %442 = vmatmul.mubr.f32.gmra.mxu0 %v354
      %v443 = vpop.f32.mrf.mxu0
      %v444 = vadd.f32 0.0, %v443
      %v445 = vpop.f32.mrf.mxu0
      %446 = vmatprep.mubr.f32.mxu0 %v367
      %447 = vmatmul.mubr.f32.gmra.mxu0 %v356
      %v448 = vpop.f32.mrf.mxu0
      %v449 = vadd.f32 0.0, %v448
      %v450 = vpop.f32.mrf.mxu0
      %451 = vmatprep.mubr.f32.mxu0 %v370
      %452 = vmatmul.mubr.f32.gmra.mxu0 %v358
      %v453 = vpop.f32.mrf.mxu0
      %v454 = vadd.f32 0.0, %v453
      %v455 = vpop.f32.mrf.mxu0
      %456 = vdwg.mxu0
      %s457 = scalar_lea.vmem %s219, 128
      %v458 = vld [vmem:[%s457] sm:$0xff]
      %v459 = vld [vmem:[%s457 + $0x8] sm:$0xff]
      %v460 = vld [vmem:[%s457 + $0x10] sm:$0xff]
      %v461 = vld [vmem:[%s457 + $0x18] sm:$0xff]
      %v462 = vld [vmem:[%s457 + $0x20] sm:$0xff]
      %v463 = vld [vmem:[%s457 + $0x28] sm:$0xff]
      %v464 = vld [vmem:[%s457 + $0x30] sm:$0x1]
      %v465 = vld [vmem:[%s457 + $0x38] sm:$0x1]
      %v467 = vsel %vm253, %v459, 0
      %v470 = vsel %vm253, %v461, 0
      %v473 = vsel %vm253, %v463, 0
      %v476 = vsel %vm253, %v465, 0
      %478 = vmatprep.subr.mxu0 0.0
      %479 = vmatpush1.msra.mxu0 %v240
      %480 = vmatprep.subr.mxu0 0.0
      %481 = vmatpush1.msra.mxu0 %v239
      %482 = vmatprep.subr.mxu0 0.0
      %483 = vmatpush1.msra.mxu0 %v238
      %484 = vmatprep.subr.mxu0 0.0
      %485 = vmatpush1.msra.mxu0 %v237
      %486 = vmatprep.subr.mxu0 0.0
      %487 = vmatpush1.msra.mxu0 %v236
      %488 = vmatprep.subr.mxu0 0.0
      %489 = vmatpush1.msra.mxu0 %v235
      %490 = vmatprep.subr.mxu0 0.0
      %491 = vmatpush1.msra.mxu0 %v234
      %492 = vmatprep.subr.mxu0 0.0
      %493 = vmatpush1.msra.mxu0 %v233
      %494 = vmatprep.subr.mxu0 0.0
      %495 = vmatpush1.msra.mxu0 %v232
      %496 = vmatprep.subr.mxu0 0.0
      %497 = vmatpush1.msra.mxu0 %v231
      %498 = vmatprep.subr.mxu0 0.0
      %499 = vmatpush1.msra.mxu0 %v230
      %500 = vmatprep.subr.mxu0 0.0
      %501 = vmatpush1.msra.mxu0 %v229
      %502 = vmatprep.subr.mxu0 0.0
      %503 = vmatpush1.msra.mxu0 %v228
      %504 = vmatprep.subr.mxu0 0.0
      %505 = vmatpush1.msra.mxu0 %v227
      %506 = vmatprep.subr.mxu0 0.0
      %507 = vmatpush1.msra.mxu0 %v226
      %508 = vmatprep.subr.mxu0 0.0
      %509 = vmatpush1.msra.mxu0 %v225
      %510 = vmatprep.subr.mxu0 0.0
      %511 = vmatpush2.msra.mxu0 0.0
      %512 = vmatprep.subr.mxu0 0.0
      %513 = vmatpush2.msra.mxu0 0.0
      %514 = vmatprep.subr.mxu0 0.0
      %515 = vmatpush2.msra.mxu0 0.0
      %516 = vmatprep.subr.mxu0 0.0
      %517 = vmatpush2.msra.mxu0 0.0
      %518 = vmatprep.subr.mxu0 0.0
      %519 = vmatpush2.msra.mxu0 0.0
      %520 = vmatprep.subr.mxu0 0.0
      %521 = vmatpush2.msra.mxu0 0.0
      %522 = vmatprep.subr.mxu0 0.0
      %523 = vmatpush2.msra.mxu0 0.0
      %524 = vmatprep.subr.mxu0 0.0
      %525 = vmatpush2.msra.mxu0 0.0
      %526 = vmatprep.subr.mxu0 0.0
      %527 = vmatpush2.msra.mxu0 0.0
      %528 = vmatprep.subr.mxu0 0.0
      %529 = vmatpush2.msra.mxu0 0.0
      %530 = vmatprep.subr.mxu0 0.0
      %531 = vmatpush2.msra.mxu0 0.0
      %532 = vmatprep.subr.mxu0 0.0
      %533 = vmatpush2.msra.mxu0 0.0
      %534 = vmatprep.subr.mxu0 0.0
      %535 = vmatpush2.msra.mxu0 0.0
      %536 = vmatprep.subr.mxu0 0.0
      %537 = vmatpush2.msra.mxu0 %v243
      %538 = vmatprep.subr.mxu0 0.0
      %539 = vmatpush2.msra.mxu0 %v242
      %540 = vmatprep.subr.mxu0 0.0
      %541 = vmatpush2.msra.mxu0 %v241
      %542 = vmatprep.mubr.f32.mxu0 %v467
      %543 = vmatmul.mubr.f32.gmra.mxu0 %v458
      %v544 = vpop.f32.mrf.mxu0
      %v545 = vadd.f32 0.0, %v544
      %v546 = vpop.f32.mrf.mxu0
      %547 = vmatprep.mubr.f32.mxu0 %v470
      %548 = vmatmul.mubr.f32.gmra.mxu0 %v460
      %v549 = vpop.f32.mrf.mxu0
      %v550 = vadd.f32 0.0, %v549
      %v551 = vpop.f32.mrf.mxu0
      %552 = vmatprep.mubr.f32.mxu0 %v473
      %553 = vmatmul.mubr.f32.gmra.mxu0 %v462
      %v554 = vpop.f32.mrf.mxu0
      %v555 = vadd.f32 0.0, %v554
      %v556 = vpop.f32.mrf.mxu0
      %557 = vmatprep.mubr.f32.mxu0 %v476
      %558 = vmatmul.mubr.f32.gmra.mxu0 %v464
      %v559 = vpop.f32.mrf.mxu0
      %v560 = vadd.f32 0.0, %v559
      %v561 = vpop.f32.mrf.mxu0
      %562 = vdwg.mxu0
      %s563 = scalar_lea.vmem %s219, 192
      %v564 = vld [vmem:[%s563] sm:$0xff]
      %v565 = vld [vmem:[%s563 + $0x8] sm:$0xff]
      %v566 = vld [vmem:[%s563 + $0x10] sm:$0xff]
      %v567 = vld [vmem:[%s563 + $0x18] sm:$0xff]
      %v568 = vld [vmem:[%s563 + $0x20] sm:$0xff]
      %v569 = vld [vmem:[%s563 + $0x28] sm:$0xff]
      %v570 = vld [vmem:[%s563 + $0x30] sm:$0x1]
      %v571 = vld [vmem:[%s563 + $0x38] sm:$0x1]
      %v573 = vsel %vm253, %v565, 0
      %v576 = vsel %vm253, %v567, 0
      %v579 = vsel %vm253, %v569, 0
      %v582 = vsel %vm253, %v571, 0
      %584 = vmatprep.subr.mxu0 0.0
      %585 = vmatpush1.msra.mxu0 %v240
      %586 = vmatprep.subr.mxu0 0.0
      %587 = vmatpush1.msra.mxu0 %v239
      %588 = vmatprep.subr.mxu0 0.0
      %589 = vmatpush1.msra.mxu0 %v238
      %590 = vmatprep.subr.mxu0 0.0
      %591 = vmatpush1.msra.mxu0 %v237
      %592 = vmatprep.subr.mxu0 0.0
      %593 = vmatpush1.msra.mxu0 %v236
      %594 = vmatprep.subr.mxu0 0.0
      %595 = vmatpush1.msra.mxu0 %v235
      %596 = vmatprep.subr.mxu0 0.0
      %597 = vmatpush1.msra.mxu0 %v234
      %598 = vmatprep.subr.mxu0 0.0
      %599 = vmatpush1.msra.mxu0 %v233
      %600 = vmatprep.subr.mxu0 0.0
      %601 = vmatpush1.msra.mxu0 %v232
      %602 = vmatprep.subr.mxu0 0.0
      %603 = vmatpush1.msra.mxu0 %v231
      %604 = vmatprep.subr.mxu0 0.0
      %605 = vmatpush1.msra.mxu0 %v230
      %606 = vmatprep.subr.mxu0 0.0
      %607 = vmatpush1.msra.mxu0 %v229
      %608 = vmatprep.subr.mxu0 0.0
      %609 = vmatpush1.msra.mxu0 %v228
      %610 = vmatprep.subr.mxu0 0.0
      %611 = vmatpush1.msra.mxu0 %v227
      %612 = vmatprep.subr.mxu0 0.0
      %613 = vmatpush1.msra.mxu0 %v226
      %614 = vmatprep.subr.mxu0 0.0
      %615 = vmatpush1.msra.mxu0 %v225
      %616 = vmatprep.subr.mxu0 0.0
      %617 = vmatpush2.msra.mxu0 0.0
      %618 = vmatprep.subr.mxu0 0.0
      %619 = vmatpush2.msra.mxu0 0.0
      %620 = vmatprep.subr.mxu0 0.0
      %621 = vmatpush2.msra.mxu0 0.0
      %622 = vmatprep.subr.mxu0 0.0
      %623 = vmatpush2.msra.mxu0 0.0
      %624 = vmatprep.subr.mxu0 0.0
      %625 = vmatpush2.msra.mxu0 0.0
      %626 = vmatprep.subr.mxu0 0.0
      %627 = vmatpush2.msra.mxu0 0.0
      %628 = vmatprep.subr.mxu0 0.0
      %629 = vmatpush2.msra.mxu0 0.0
      %630 = vmatprep.subr.mxu0 0.0
      %631 = vmatpush2.msra.mxu0 0.0
      %632 = vmatprep.subr.mxu0 0.0
      %633 = vmatpush2.msra.mxu0 0.0
      %634 = vmatprep.subr.mxu0 0.0
      %635 = vmatpush2.msra.mxu0 0.0
      %636 = vmatprep.subr.mxu0 0.0
      %637 = vmatpush2.msra.mxu0 0.0
      %638 = vmatprep.subr.mxu0 0.0
      %639 = vmatpush2.msra.mxu0 0.0
      %640 = vmatprep.subr.mxu0 0.0
      %641 = vmatpush2.msra.mxu0 0.0
      %642 = vmatprep.subr.mxu0 0.0
      %643 = vmatpush2.msra.mxu0 %v243
      %644 = vmatprep.subr.mxu0 0.0
      %645 = vmatpush2.msra.mxu0 %v242
      %646 = vmatprep.subr.mxu0 0.0
      %647 = vmatpush2.msra.mxu0 %v241
      %648 = vmatprep.mubr.f32.mxu0 %v573
      %649 = vmatmul.mubr.f32.gmra.mxu0 %v564
      %v650 = vpop.f32.mrf.mxu0
      %v651 = vadd.f32 0.0, %v650
      %v652 = vpop.f32.mrf.mxu0
      %653 = vmatprep.mubr.f32.mxu0 %v576
      %654 = vmatmul.mubr.f32.gmra.mxu0 %v566
      %v655 = vpop.f32.mrf.mxu0
      %v656 = vadd.f32 0.0, %v655
      %v657 = vpop.f32.mrf.mxu0
      %658 = vmatprep.mubr.f32.mxu0 %v579
      %659 = vmatmul.mubr.f32.gmra.mxu0 %v568
      %v660 = vpop.f32.mrf.mxu0
      %v661 = vadd.f32 0.0, %v660
      %v662 = vpop.f32.mrf.mxu0
      %663 = vmatprep.mubr.f32.mxu0 %v582
      %664 = vmatmul.mubr.f32.gmra.mxu0 %v570
      %v665 = vpop.f32.mrf.mxu0
      %v666 = vadd.f32 0.0, %v665
      %v667 = vpop.f32.mrf.mxu0
      %668 = vdwg.mxu0
      %v669 = vmax.f32 %v333, %v439
      %v670 = vmax.f32 %v338, %v444
      %v671 = vmax.f32 %v343, %v449
      %v672 = vmax.f32 %v348, %v454
      %v673 = vmax.f32 %v545, %v651
      %v674 = vmax.f32 %v550, %v656
      %v675 = vmax.f32 %v555, %v661
      %v676 = vmax.f32 %v560, %v666
      %v677 = vmax.f32 %v669, %v673
      %v678 = vmax.f32 %v670, %v674
      %v679 = vmax.f32 %v671, %v675
      %v680 = vmax.f32 %v672, %v676
      %v682 = vlaneseq
      %v683 = vshrl.u32 %v682, 7
      %v684 = vsub.s32 0, %v683
      %v685 = vrot.slane %v244, %v684
      %v687 = vadd.f32 %v677, %v685
      %v688 = vadd.f32 %v678, %v685
      %v689 = vadd.f32 %v679, %v685
      %v690 = vadd.f32 %v680, %v685
      %v691 = vmax.f32 %v687, 0.0
      %v692 = vmax.f32 %v688, 0.0
      %v693 = vmax.f32 %v689, 0.0
      %v694 = vmax.f32 %v690, 0.0
      %v695 = vld [vmem:[%s3] sm:$0xff]
      %v696 = vld [vmem:[%s3 + $0x8] sm:$0xff]
      %v697 = vld [vmem:[%s3 + $0x10] sm:$0xff]
      %v698 = vld [vmem:[%s3 + $0x18] sm:$0xff]
      %v699 = vld [vmem:[%s3 + $0x20] sm:$0xff]
      %v700 = vld [vmem:[%s3 + $0x28] sm:$0xff]
      %v701 = vld [vmem:[%s3 + $0x30] sm:$0xff]
      %v702 = vld [vmem:[%s3 + $0x38] sm:$0xff]
      %v703 = vld [vmem:[%s3 + $0x40] sm:$0xff]
      %v704 = vld [vmem:[%s3 + $0x48] sm:$0xff]
      %v705 = vld [vmem:[%s3 + $0x50] sm:$0xff]
      %v706 = vld [vmem:[%s3 + $0x58] sm:$0xff]
      %v707 = vld [vmem:[%s3 + $0x60] sm:$0xff]
      %v708 = vld [vmem:[%s3 + $0x68] sm:$0xff]
      %v709 = vld [vmem:[%s3 + $0x70] sm:$0xff]
      %v710 = vld [vmem:[%s3 + $0x78] sm:$0xff]
      %v711 = vld [vmem:[%s3 + $0x80] sm:$0xff]
      %v712 = vld [vmem:[%s3 + $0x88] sm:$0xff]
      %v713 = vld [vmem:[%s3 + $0x90] sm:$0xff]
      %v714 = vld [vmem:[%s4] sm:$0x1]
      %715 = vmatprep.subr.mxu0 0.0
      %716 = vmatpush1.msra.mxu0 %v710
      %717 = vmatprep.subr.mxu0 0.0
      %718 = vmatpush1.msra.mxu0 %v709
      %719 = vmatprep.subr.mxu0 0.0
      %720 = vmatpush1.msra.mxu0 %v708
      %721 = vmatprep.subr.mxu0 0.0
      %722 = vmatpush1.msra.mxu0 %v707
      %723 = vmatprep.subr.mxu0 0.0
      %724 = vmatpush1.msra.mxu0 %v706
      %725 = vmatprep.subr.mxu0 0.0
      %726 = vmatpush1.msra.mxu0 %v705
      %727 = vmatprep.subr.mxu0 0.0
      %728 = vmatpush1.msra.mxu0 %v704
      %729 = vmatprep.subr.mxu0 0.0
      %730 = vmatpush1.msra.mxu0 %v703
      %731 = vmatprep.subr.mxu0 0.0
      %732 = vmatpush1.msra.mxu0 %v702
      %733 = vmatprep.subr.mxu0 0.0
      %734 = vmatpush1.msra.mxu0 %v701
      %735 = vmatprep.subr.mxu0 0.0
      %736 = vmatpush1.msra.mxu0 %v700
      %737 = vmatprep.subr.mxu0 0.0
      %738 = vmatpush1.msra.mxu0 %v699
      %739 = vmatprep.subr.mxu0 0.0
      %740 = vmatpush1.msra.mxu0 %v698
      %741 = vmatprep.subr.mxu0 0.0
      %742 = vmatpush1.msra.mxu0 %v697
      %743 = vmatprep.subr.mxu0 0.0
      %744 = vmatpush1.msra.mxu0 %v696
      %745 = vmatprep.subr.mxu0 0.0
      %746 = vmatpush1.msra.mxu0 %v695
      %747 = vmatprep.subr.mxu0 0.0
      %748 = vmatpush2.msra.mxu0 0.0
      %749 = vmatprep.subr.mxu0 0.0
      %750 = vmatpush2.msra.mxu0 0.0
      %751 = vmatprep.subr.mxu0 0.0
      %752 = vmatpush2.msra.mxu0 0.0
      %753 = vmatprep.subr.mxu0 0.0
      %754 = vmatpush2.msra.mxu0 0.0
      %755 = vmatprep.subr.mxu0 0.0
      %756 = vmatpush2.msra.mxu0 0.0
      %757 = vmatprep.subr.mxu0 0.0
      %758 = vmatpush2.msra.mxu0 0.0
      %759 = vmatprep.subr.mxu0 0.0
      %760 = vmatpush2.msra.mxu0 0.0
      %761 = vmatprep.subr.mxu0 0.0
      %762 = vmatpush2.msra.mxu0 0.0
      %763 = vmatprep.subr.mxu0 0.0
      %764 = vmatpush2.msra.mxu0 0.0
      %765 = vmatprep.subr.mxu0 0.0
      %766 = vmatpush2.msra.mxu0 0.0
      %767 = vmatprep.subr.mxu0 0.0
      %768 = vmatpush2.msra.mxu0 0.0
      %769 = vmatprep.subr.mxu0 0.0
      %770 = vmatpush2.msra.mxu0 0.0
      %771 = vmatprep.subr.mxu0 0.0
      %772 = vmatpush2.msra.mxu0 0.0
      %773 = vmatprep.subr.mxu0 0.0
      %774 = vmatpush2.msra.mxu0 %v713
      %775 = vmatprep.subr.mxu0 0.0
      %776 = vmatpush2.msra.mxu0 %v712
      %777 = vmatprep.subr.mxu0 0.0
      %778 = vmatpush2.msra.mxu0 %v711
      %779 = vmatprep.mubr.f32.mxu0 %v255
      %780 = vmatmul.mubr.f32.gmra.mxu0 %v245
      %v781 = vpop.f32.mrf.mxu0
      %v782 = vadd.f32 0.0, %v781
      %v783 = vpop.f32.mrf.mxu0
      %784 = vmatprep.mubr.f32.mxu0 %v258
      %785 = vmatmul.mubr.f32.gmra.mxu0 %v247
      %v786 = vpop.f32.mrf.mxu0
      %v787 = vadd.f32 0.0, %v786
      %v788 = vpop.f32.mrf.mxu0
      %789 = vmatprep.mubr.f32.mxu0 %v261
      %790 = vmatmul.mubr.f32.gmra.mxu0 %v249
      %v791 = vpop.f32.mrf.mxu0
      %v792 = vadd.f32 0.0, %v791
      %v793 = vpop.f32.mrf.mxu0
      %794 = vmatprep.mubr.f32.mxu0 %v264
      %795 = vmatmul.mubr.f32.gmra.mxu0 %v251
      %v796 = vpop.f32.mrf.mxu0
      %v797 = vadd.f32 0.0, %v796
      %v798 = vpop.f32.mrf.mxu0
      %799 = vdwg.mxu0
      %800 = vmatprep.subr.mxu0 0.0
      %801 = vmatpush1.msra.mxu0 %v710
      %802 = vmatprep.subr.mxu0 0.0
      %803 = vmatpush1.msra.mxu0 %v709
      %804 = vmatprep.subr.mxu0 0.0
      %805 = vmatpush1.msra.mxu0 %v708
      %806 = vmatprep.subr.mxu0 0.0
      %807 = vmatpush1.msra.mxu0 %v707
      %808 = vmatprep.subr.mxu0 0.0
      %809 = vmatpush1.msra.mxu0 %v706
      %810 = vmatprep.subr.mxu0 0.0
      %811 = vmatpush1.msra.mxu0 %v705
      %812 = vmatprep.subr.mxu0 0.0
      %813 = vmatpush1.msra.mxu0 %v704
      %814 = vmatprep.subr.mxu0 0.0
      %815 = vmatpush1.msra.mxu0 %v703
      %816 = vmatprep.subr.mxu0 0.0
      %817 = vmatpush1.msra.mxu0 %v702
      %818 = vmatprep.subr.mxu0 0.0
      %819 = vmatpush1.msra.mxu0 %v701
      %820 = vmatprep.subr.mxu0 0.0
      %821 = vmatpush1.msra.mxu0 %v700
      %822 = vmatprep.subr.mxu0 0.0
      %823 = vmatpush1.msra.mxu0 %v699
      %824 = vmatprep.subr.mxu0 0.0
      %825 = vmatpush1.msra.mxu0 %v698
      %826 = vmatprep.subr.mxu0 0.0
      %827 = vmatpush1.msra.mxu0 %v697
      %828 = vmatprep.subr.mxu0 0.0
      %829 = vmatpush1.msra.mxu0 %v696
      %830 = vmatprep.subr.mxu0 0.0
      %831 = vmatpush1.msra.mxu0 %v695
      %832 = vmatprep.subr.mxu0 0.0
      %833 = vmatpush2.msra.mxu0 0.0
      %834 = vmatprep.subr.mxu0 0.0
      %835 = vmatpush2.msra.mxu0 0.0
      %836 = vmatprep.subr.mxu0 0.0
      %837 = vmatpush2.msra.mxu0 0.0
      %838 = vmatprep.subr.mxu0 0.0
      %839 = vmatpush2.msra.mxu0 0.0
      %840 = vmatprep.subr.mxu0 0.0
      %841 = vmatpush2.msra.mxu0 0.0
      %842 = vmatprep.subr.mxu0 0.0
      %843 = vmatpush2.msra.mxu0 0.0
      %844 = vmatprep.subr.mxu0 0.0
      %845 = vmatpush2.msra.mxu0 0.0
      %846 = vmatprep.subr.mxu0 0.0
      %847 = vmatpush2.msra.mxu0 0.0
      %848 = vmatprep.subr.mxu0 0.0
      %849 = vmatpush2.msra.mxu0 0.0
      %850 = vmatprep.subr.mxu0 0.0
      %851 = vmatpush2.msra.mxu0 0.0
      %852 = vmatprep.subr.mxu0 0.0
      %853 = vmatpush2.msra.mxu0 0.0
      %854 = vmatprep.subr.mxu0 0.0
      %855 = vmatpush2.msra.mxu0 0.0
      %856 = vmatprep.subr.mxu0 0.0
      %857 = vmatpush2.msra.mxu0 0.0
      %858 = vmatprep.subr.mxu0 0.0
      %859 = vmatpush2.msra.mxu0 %v713
      %860 = vmatprep.subr.mxu0 0.0
      %861 = vmatpush2.msra.mxu0 %v712
      %862 = vmatprep.subr.mxu0 0.0
      %863 = vmatpush2.msra.mxu0 %v711
      %864 = vmatprep.mubr.f32.mxu0 %v361
      %865 = vmatmul.mubr.f32.gmra.mxu0 %v352
      %v866 = vpop.f32.mrf.mxu0
      %v867 = vadd.f32 0.0, %v866
      %v868 = vpop.f32.mrf.mxu0
      %869 = vmatprep.mubr.f32.mxu0 %v364
      %870 = vmatmul.mubr.f32.gmra.mxu0 %v354
      %v871 = vpop.f32.mrf.mxu0
      %v872 = vadd.f32 0.0, %v871
      %v873 = vpop.f32.mrf.mxu0
      %874 = vmatprep.mubr.f32.mxu0 %v367
      %875 = vmatmul.mubr.f32.gmra.mxu0 %v356
      %v876 = vpop.f32.mrf.mxu0
      %v877 = vadd.f32 0.0, %v876
      %v878 = vpop.f32.mrf.mxu0
      %879 = vmatprep.mubr.f32.mxu0 %v370
      %880 = vmatmul.mubr.f32.gmra.mxu0 %v358
      %v881 = vpop.f32.mrf.mxu0
      %v882 = vadd.f32 0.0, %v881
      %v883 = vpop.f32.mrf.mxu0
      %884 = vdwg.mxu0
      %885 = vmatprep.subr.mxu0 0.0
      %886 = vmatpush1.msra.mxu0 %v710
      %887 = vmatprep.subr.mxu0 0.0
      %888 = vmatpush1.msra.mxu0 %v709
      %889 = vmatprep.subr.mxu0 0.0
      %890 = vmatpush1.msra.mxu0 %v708
      %891 = vmatprep.subr.mxu0 0.0
      %892 = vmatpush1.msra.mxu0 %v707
      %893 = vmatprep.subr.mxu0 0.0
      %894 = vmatpush1.msra.mxu0 %v706
      %895 = vmatprep.subr.mxu0 0.0
      %896 = vmatpush1.msra.mxu0 %v705
      %897 = vmatprep.subr.mxu0 0.0
      %898 = vmatpush1.msra.mxu0 %v704
      %899 = vmatprep.subr.mxu0 0.0
      %900 = vmatpush1.msra.mxu0 %v703
      %901 = vmatprep.subr.mxu0 0.0
      %902 = vmatpush1.msra.mxu0 %v702
      %903 = vmatprep.subr.mxu0 0.0
      %904 = vmatpush1.msra.mxu0 %v701
      %905 = vmatprep.subr.mxu0 0.0
      %906 = vmatpush1.msra.mxu0 %v700
      %907 = vmatprep.subr.mxu0 0.0
      %908 = vmatpush1.msra.mxu0 %v699
      %909 = vmatprep.subr.mxu0 0.0
      %910 = vmatpush1.msra.mxu0 %v698
      %911 = vmatprep.subr.mxu0 0.0
      %912 = vmatpush1.msra.mxu0 %v697
      %913 = vmatprep.subr.mxu0 0.0
      %914 = vmatpush1.msra.mxu0 %v696
      %915 = vmatprep.subr.mxu0 0.0
      %916 = vmatpush1.msra.mxu0 %v695
      %917 = vmatprep.subr.mxu0 0.0
      %918 = vmatpush2.msra.mxu0 0.0
      %919 = vmatprep.subr.mxu0 0.0
      %920 = vmatpush2.msra.mxu0 0.0
      %921 = vmatprep.subr.mxu0 0.0
      %922 = vmatpush2.msra.mxu0 0.0
      %923 = vmatprep.subr.mxu0 0.0
      %924 = vmatpush2.msra.mxu0 0.0
      %925 = vmatprep.subr.mxu0 0.0
      %926 = vmatpush2.msra.mxu0 0.0
      %927 = vmatprep.subr.mxu0 0.0
      %928 = vmatpush2.msra.mxu0 0.0
      %929 = vmatprep.subr.mxu0 0.0
      %930 = vmatpush2.msra.mxu0 0.0
      %931 = vmatprep.subr.mxu0 0.0
      %932 = vmatpush2.msra.mxu0 0.0
      %933 = vmatprep.subr.mxu0 0.0
      %934 = vmatpush2.msra.mxu0 0.0
      %935 = vmatprep.subr.mxu0 0.0
      %936 = vmatpush2.msra.mxu0 0.0
      %937 = vmatprep.subr.mxu0 0.0
      %938 = vmatpush2.msra.mxu0 0.0
      %939 = vmatprep.subr.mxu0 0.0
      %940 = vmatpush2.msra.mxu0 0.0
      %941 = vmatprep.subr.mxu0 0.0
      %942 = vmatpush2.msra.mxu0 0.0
      %943 = vmatprep.subr.mxu0 0.0
      %944 = vmatpush2.msra.mxu0 %v713
      %945 = vmatprep.subr.mxu0 0.0
      %946 = vmatpush2.msra.mxu0 %v712
      %947 = vmatprep.subr.mxu0 0.0
      %948 = vmatpush2.msra.mxu0 %v711
      %949 = vmatprep.mubr.f32.mxu0 %v467
      %950 = vmatmul.mubr.f32.gmra.mxu0 %v458
      %v951 = vpop.f32.mrf.mxu0
      %v952 = vadd.f32 0.0, %v951
      %v953 = vpop.f32.mrf.mxu0
      %954 = vmatprep.mubr.f32.mxu0 %v470
      %955 = vmatmul.mubr.f32.gmra.mxu0 %v460
      %v956 = vpop.f32.mrf.mxu0
      %v957 = vadd.f32 0.0, %v956
      %v958 = vpop.f32.mrf.mxu0
      %959 = vmatprep.mubr.f32.mxu0 %v473
      %960 = vmatmul.mubr.f32.gmra.mxu0 %v462
      %v961 = vpop.f32.mrf.mxu0
      %v962 = vadd.f32 0.0, %v961
      %v963 = vpop.f32.mrf.mxu0
      %964 = vmatprep.mubr.f32.mxu0 %v476
      %965 = vmatmul.mubr.f32.gmra.mxu0 %v464
      %v966 = vpop.f32.mrf.mxu0
      %v967 = vadd.f32 0.0, %v966
      %v968 = vpop.f32.mrf.mxu0
      %969 = vdwg.mxu0
      %970 = vmatprep.subr.mxu0 0.0
      %971 = vmatpush1.msra.mxu0 %v710
      %972 = vmatprep.subr.mxu0 0.0
      %973 = vmatpush1.msra.mxu0 %v709
      %974 = vmatprep.subr.mxu0 0.0
      %975 = vmatpush1.msra.mxu0 %v708
      %976 = vmatprep.subr.mxu0 0.0
      %977 = vmatpush1.msra.mxu0 %v707
      %978 = vmatprep.subr.mxu0 0.0
      %979 = vmatpush1.msra.mxu0 %v706
      %980 = vmatprep.subr.mxu0 0.0
      %981 = vmatpush1.msra.mxu0 %v705
      %982 = vmatprep.subr.mxu0 0.0
      %983 = vmatpush1.msra.mxu0 %v704
      %984 = vmatprep.subr.mxu0 0.0
      %985 = vmatpush1.msra.mxu0 %v703
      %986 = vmatprep.subr.mxu0 0.0
      %987 = vmatpush1.msra.mxu0 %v702
      %988 = vmatprep.subr.mxu0 0.0
      %989 = vmatpush1.msra.mxu0 %v701
      %990 = vmatprep.subr.mxu0 0.0
      %991 = vmatpush1.msra.mxu0 %v700
      %992 = vmatprep.subr.mxu0 0.0
      %993 = vmatpush1.msra.mxu0 %v699
      %994 = vmatprep.subr.mxu0 0.0
      %995 = vmatpush1.msra.mxu0 %v698
      %996 = vmatprep.subr.mxu0 0.0
      %997 = vmatpush1.msra.mxu0 %v697
      %998 = vmatprep.subr.mxu0 0.0
      %999 = vmatpush1.msra.mxu0 %v696
      %1000 = vmatprep.subr.mxu0 0.0
      %1001 = vmatpush1.msra.mxu0 %v695
      %1002 = vmatprep.subr.mxu0 0.0
      %1003 = vmatpush2.msra.mxu0 0.0
      %1004 = vmatprep.subr.mxu0 0.0
      %1005 = vmatpush2.msra.mxu0 0.0
      %1006 = vmatprep.subr.mxu0 0.0
      %1007 = vmatpush2.msra.mxu0 0.0
      %1008 = vmatprep.subr.mxu0 0.0
      %1009 = vmatpush2.msra.mxu0 0.0
      %1010 = vmatprep.subr.mxu0 0.0
      %1011 = vmatpush2.msra.mxu0 0.0
      %1012 = vmatprep.subr.mxu0 0.0
      %1013 = vmatpush2.msra.mxu0 0.0
      %1014 = vmatprep.subr.mxu0 0.0
      %1015 = vmatpush2.msra.mxu0 0.0
      %1016 = vmatprep.subr.mxu0 0.0
      %1017 = vmatpush2.msra.mxu0 0.0
      %1018 = vmatprep.subr.mxu0 0.0
      %1019 = vmatpush2.msra.mxu0 0.0
      %1020 = vmatprep.subr.mxu0 0.0
      %1021 = vmatpush2.msra.mxu0 0.0
      %1022 = vmatprep.subr.mxu0 0.0
      %1023 = vmatpush2.msra.mxu0 0.0
      %1024 = vmatprep.subr.mxu0 0.0
      %1025 = vmatpush2.msra.mxu0 0.0
      %1026 = vmatprep.subr.mxu0 0.0
      %1027 = vmatpush2.msra.mxu0 0.0
      %1028 = vmatprep.subr.mxu0 0.0
      %1029 = vmatpush2.msra.mxu0 %v713
      %1030 = vmatprep.subr.mxu0 0.0
      %1031 = vmatpush2.msra.mxu0 %v712
      %1032 = vmatprep.subr.mxu0 0.0
      %1033 = vmatpush2.msra.mxu0 %v711
      %1034 = vmatprep.mubr.f32.mxu0 %v573
      %1035 = vmatmul.mubr.f32.gmra.mxu0 %v564
      %v1036 = vpop.f32.mrf.mxu0
      %v1037 = vadd.f32 0.0, %v1036
      %v1038 = vpop.f32.mrf.mxu0
      %1039 = vmatprep.mubr.f32.mxu0 %v576
      %1040 = vmatmul.mubr.f32.gmra.mxu0 %v566
      %v1041 = vpop.f32.mrf.mxu0
      %v1042 = vadd.f32 0.0, %v1041
      %v1043 = vpop.f32.mrf.mxu0
      %1044 = vmatprep.mubr.f32.mxu0 %v579
      %1045 = vmatmul.mubr.f32.gmra.mxu0 %v568
      %v1046 = vpop.f32.mrf.mxu0
      %v1047 = vadd.f32 0.0, %v1046
      %v1048 = vpop.f32.mrf.mxu0
      %1049 = vmatprep.mubr.f32.mxu0 %v582
      %1050 = vmatmul.mubr.f32.gmra.mxu0 %v570
      %v1051 = vpop.f32.mrf.mxu0
      %v1052 = vadd.f32 0.0, %v1051
      %v1053 = vpop.f32.mrf.mxu0
      %1054 = vdwg.mxu0
      %v1055 = vmax.f32 %v782, %v867
      %v1056 = vmax.f32 %v787, %v872
      %v1057 = vmax.f32 %v792, %v877
      %v1058 = vmax.f32 %v797, %v882
      %v1059 = vmax.f32 %v952, %v1037
      %v1060 = vmax.f32 %v957, %v1042
      %v1061 = vmax.f32 %v962, %v1047
      %v1062 = vmax.f32 %v967, %v1052
      %v1063 = vmax.f32 %v1055, %v1059
      %v1064 = vmax.f32 %v1056, %v1060
      %v1065 = vmax.f32 %v1057, %v1061
      %v1066 = vmax.f32 %v1058, %v1062
      %v1068 = vlaneseq
      %v1069 = vshrl.u32 %v1068, 7
      %v1070 = vsub.s32 0, %v1069
      %v1071 = vrot.slane %v714, %v1070
      %v1073 = vadd.f32 %v1063, %v1071
      %v1074 = vadd.f32 %v1064, %v1071
      %v1075 = vadd.f32 %v1065, %v1071
      %v1076 = vadd.f32 %v1066, %v1071
      %v1077 = vmax.f32 %v1073, 0.0
      %v1078 = vmax.f32 %v1074, 0.0
      %v1079 = vmax.f32 %v1075, 0.0
      %v1080 = vmax.f32 %v1076, 0.0
      %v1081 = vadd.f32 %v691, %v1077
      %v1082 = vadd.f32 %v692, %v1078
      %v1083 = vadd.f32 %v693, %v1079
      %v1084 = vadd.f32 %v694, %v1080
      %1085 = vst [vmem:[%s224] sm:$0xff] %v1081
      %1086 = vst [vmem:[%s224 + $0x8] sm:$0xff] %v1082
      %1087 = vst [vmem:[%s224 + $0x10] sm:$0xff] %v1083
      %1088 = vst [vmem:[%s224 + $0x18] sm:$0x1] %v1084
      %p1089 = scmp.lt.s32.totalorder %s16, 1
      %s1090 = scalar_select %p1089, %s16, 1
      %s1091 = smul.addr %s1090, 4
      %s1092 = smul.addr %s1091, 8
      %s1093 = scalar_lea.vmem %s5, %s1092
      // Predicated region
      $region41: #{lenet5_forward.4} parent=39 // pred_check
        %p1094 = pneg %p144
      $region42: #{lenet5_forward.4} parent=39 // pred_check_branch
        %1096 = sbr.rel (%p1094) target = $region44
      $region43: #{lenet5_forward.4} parent=39 // pred_region
        _
      $region44: #{lenet5_forward.4} parent=39 // pred_fallthru
        _
    $region40: #{lenet5_forward.4} parent=5 // pred_fallthru
      _
    %p1097 = scmp.le.s32.totalorder 2, %s11
    // Predicated region
    $region45: #{lenet5_forward.4} parent=5 // pred_check
      %p1098 = pneg %p1097
    $region46: #{lenet5_forward.4} parent=5 // pred_check_branch
      %1100 = sbr.rel (%p1098) target = $region48
    $region47: #{lenet5_forward.4} parent=5 // pred_region
      %s1101 = ssub.s32 %s11, 2
      // Predicated region
      $region49: #{lenet5_forward.4} parent=47 // pred_check
        %p1102 = pneg %p150
      $region50: #{lenet5_forward.4} parent=47 // pred_check_branch
        %1104 = sbr.rel (%p1102) target = $region52
      $region51: #{lenet5_forward.4} parent=47 // pred_region
        %p1105 = scmp.lt.s32.totalorder %s17, 1
        %s1106 = scalar_select %p1105, %s17, 1
        %s1107 = smul.addr %s1106, 4
        %s1108 = smul.addr %s1107, 8
        %s1109 = scalar_lea.vmem %s5, %s1108
      $region52: #{lenet5_forward.4} parent=47 // pred_fallthru
        _
    $region48: #{lenet5_forward.4} parent=5 // pred_fallthru
      _
  $region6: #{lenet5_forward.4} parent=0 // loop_footer
    %s15 = sadd.s32 1, %s11
  $region7: #{lenet5_forward.4} parent=0 // loop_footer_branch
    %10 = sbr.rel target = $region3
  $region8: #{lenet5_forward.4} parent=0 // loop_exit
    _

// kernel: lenet5_forward.5
$region0: #{lenet5_forward.5}
  #allocation0 [shape = 'u32[]', space=smem, size = 0x4, offset = 0x4, fixed_abs, tag = 'smem constant byte address 0x4 - core index']
  #allocation1 [shape = 'u32[144,128]{1,0:T(1,128)}', space=vmem, size = 0x12000, scoped, tag = 'internal scratch']
  %s0 = inlined_call_operand.vmem [shape: f32[2,400], index: 0, kind: input, shape index: {}]
  %s1 = inlined_call_operand.vmem [shape: f32[400,128], index: 1, kind: input, shape index: {}]
  %s2 = inlined_call_operand.vmem [shape: f32[1,128], index: 2, kind: input, shape index: {}]
  %s3 = inlined_call_operand.vmem [shape: f32[128,128], index: 3, kind: input, shape index: {}]
  %s4 = inlined_call_operand.vmem [shape: f32[1,128], index: 4, kind: input, shape index: {}]
  %s5 = inlined_call_operand.vmem [shape: f32[128,10], index: 5, kind: input, shape index: {}]
  %s6 = inlined_call_operand.vmem [shape: f32[1,10], index: 6, kind: input, shape index: {}]
  %s7 = inlined_call_operand.hbm [shape: f32[2,10], index: 7, kind: output, shape index: {}]
  %s8 = sld [smem:[#allocation0]]
  $region38: #{lenet5_forward.5} parent=0
    _
  %s10 = ssub.s32 1, %s8
  %s11 = scalar_select 0, %s10, %s8
  $region1: #{lenet5_forward.5} parent=0
    #allocation2 [shape = 'u8[1024]{0}', space=vmem, size = 0x400, scoped, tag = 'output window, operand 0, single buffered']
    #allocation3 [shape = 's32[1]{0}', space=sflag, size = 0x4, scoped, tag = 'scoped memory for lenet5_forward.5']
    %12 = vsyncpa [#allocation3], 0
    // Predicated region
    $region2: #{lenet5_forward.5} parent=1 // pred_check
      _
    $region3: #{lenet5_forward.5} parent=1 // pred_check_branch
      %14 = sbr.rel (0) target = $region5
    $region4: #{lenet5_forward.5} parent=1 // pred_region
      _
    $region5: #{lenet5_forward.5} parent=1 // pred_fallthru
      _
    // Predicated region
    $region6: #{lenet5_forward.5} parent=1 // pred_check
      _
    $region7: #{lenet5_forward.5} parent=1 // pred_check_branch
      %16 = sbr.rel (0) target = $region9
    $region8: #{lenet5_forward.5} parent=1 // pred_region
      _
    $region9: #{lenet5_forward.5} parent=1 // pred_fallthru
      _
    // Predicated region
    $region10: #{lenet5_forward.5} parent=1 // pred_check
      _
    $region11: #{lenet5_forward.5} parent=1 // pred_check_branch
      %18 = sbr.rel (0) target = $region13
    $region12: #{lenet5_forward.5} parent=1 // pred_region
      _
    $region13: #{lenet5_forward.5} parent=1 // pred_fallthru
      _
    // Predicated region
    $region14: #{lenet5_forward.5} parent=1 // pred_check
      _
    $region15: #{lenet5_forward.5} parent=1 // pred_check_branch
      %20 = sbr.rel (0) target = $region17
    $region16: #{lenet5_forward.5} parent=1 // pred_region
      _
    $region17: #{lenet5_forward.5} parent=1 // pred_fallthru
      _
    // Predicated region
    $region18: #{lenet5_forward.5} parent=1 // pred_check
      _
    $region19: #{lenet5_forward.5} parent=1 // pred_check_branch
      %22 = sbr.rel (0) target = $region21
    $region20: #{lenet5_forward.5} parent=1 // pred_region
      _
    $region21: #{lenet5_forward.5} parent=1 // pred_fallthru
      _
    // Predicated region
    $region22: #{lenet5_forward.5} parent=1 // pred_check
      _
    $region23: #{lenet5_forward.5} parent=1 // pred_check_branch
      %24 = sbr.rel (0) target = $region25
    $region24: #{lenet5_forward.5} parent=1 // pred_region
      _
    $region25: #{lenet5_forward.5} parent=1 // pred_fallthru
      _
    // Predicated region
    $region26: #{lenet5_forward.5} parent=1 // pred_check
      _
    $region27: #{lenet5_forward.5} parent=1 // pred_check_branch
      %26 = sbr.rel (0) target = $region29
    $region28: #{lenet5_forward.5} parent=1 // pred_region
      _
    $region29: #{lenet5_forward.5} parent=1 // pred_fallthru
      _
    %v27 = vld [vmem:[%s0] sm:$0xff]
    %v28 = vld [vmem:[%s1] sm:$0xff]
    %v29 = vld [vmem:[%s1 + $0x8] sm:$0xff]
    %v30 = vld [vmem:[%s1 + $0x10] sm:$0xff]
    %v31 = vld [vmem:[%s1 + $0x18] sm:$0xff]
    %v32 = vld [vmem:[%s1 + $0x20] sm:$0xff]
    %v33 = vld [vmem:[%s1 + $0x28] sm:$0xff]
    %v34 = vld [vmem:[%s1 + $0x30] sm:$0xff]
    %v35 = vld [vmem:[%s1 + $0x38] sm:$0xff]
    %v36 = vld [vmem:[%s1 + $0x40] sm:$0xff]
    %v37 = vld [vmem:[%s1 + $0x48] sm:$0xff]
    %v38 = vld [vmem:[%s1 + $0x50] sm:$0xff]
    %v39 = vld [vmem:[%s1 + $0x58] sm:$0xff]
    %v40 = vld [vmem:[%s1 + $0x60] sm:$0xff]
    %v41 = vld [vmem:[%s1 + $0x68] sm:$0xff]
    %v42 = vld [vmem:[%s1 + $0x70] sm:$0xff]
    %v43 = vld [vmem:[%s1 + $0x78] sm:$0xff]
    %v44 = vld [vmem:[%s1 + $0x80] sm:$0xff]
    %v45 = vld [vmem:[%s1 + $0x88] sm:$0xff]
    %v46 = vld [vmem:[%s1 + $0x90] sm:$0xff]
    %v47 = vld [vmem:[%s1 + $0x98] sm:$0xff]
    %v48 = vld [vmem:[%s1 + $0xa0] sm:$0xff]
    %v49 = vld [vmem:[%s1 + $0xa8] sm:$0xff]
    %v50 = vld [vmem:[%s1 + $0xb0] sm:$0xff]
    %v51 = vld [vmem:[%s1 + $0xb8] sm:$0xff]
    %v52 = vld [vmem:[%s1 + $0xc0] sm:$0xff]
    %v53 = vld [vmem:[%s1 + $0xc8] sm:$0xff]
    %v54 = vld [vmem:[%s1 + $0xd0] sm:$0xff]
    %v55 = vld [vmem:[%s1 + $0xd8] sm:$0xff]
    %v56 = vld [vmem:[%s1 + $0xe0] sm:$0xff]
    %v57 = vld [vmem:[%s1 + $0xe8] sm:$0xff]
    %v58 = vld [vmem:[%s1 + $0xf0] sm:$0xff]
    %v59 = vld [vmem:[%s1 + $0xf8] sm:$0xff]
    %v60 = vld [vmem:[%s1 + $0x100] sm:$0xff]
    %v61 = vld [vmem:[%s1 + $0x108] sm:$0xff]
    %v62 = vld [vmem:[%s1 + $0x110] sm:$0xff]
    %v63 = vld [vmem:[%s1 + $0x118] sm:$0xff]
    %v64 = vld [vmem:[%s1 + $0x120] sm:$0xff]
    %v65 = vld [vmem:[%s1 + $0x128] sm:$0xff]
    %v66 = vld [vmem:[%s1 + $0x130] sm:$0xff]
    %v67 = vld [vmem:[%s1 + $0x138] sm:$0xff]
    %v68 = vld [vmem:[%s1 + $0x140] sm:$0xff]
    %v69 = vld [vmem:[%s1 + $0x148] sm:$0xff]
    %v70 = vld [vmem:[%s1 + $0x150] sm:$0xff]
    %v71 = vld [vmem:[%s1 + $0x158] sm:$0xff]
    %v72 = vld [vmem:[%s1 + $0x160] sm:$0xff]
    %v73 = vld [vmem:[%s1 + $0x168] sm:$0xff]
    %v74 = vld [vmem:[%s1 + $0x170] sm:$0xff]
    %v75 = vld [vmem:[%s1 + $0x178] sm:$0xff]
    %v76 = vld [vmem:[%s1 + $0x180] sm:$0xff]
    %v77 = vld [vmem:[%s1 + $0x188] sm:$0xff]
    %v78 = vld [vmem:[%s2] sm:$0x1]
    %v80 = vlaneseq
    %v81 = vshrl.u32 %v80, 7
    %v82 = vsub.s32 0, %v81
    %v83 = vrot.slane %v78, %v82
    %v86 = vcombine.high %v27, %v27
    %v88 = vunpack.c.l.s4 1983009808
    %v89 = vunpack.c.0.s8 %v88
    %v90 = vlaneseq
    %v91 = vshrl.u32 %v90, 7
    %v92 = vsub.s32 %v89, %v91
    %v93 = vrot.slane %v27, %v92
    %v95 = vunpack.c.l.s4 1983009808
    %v96 = vunpack.c.0.s8 %v95
    %v97 = vlaneseq
    %v98 = vshrl.u32 %v97, 7
    %v99 = vsub.s32 %v96, %v98
    %v100 = vrot.slane %v86, %v99
    %v101 = vcombine.high %v93, %v93
    %v102 = vcombine.high %v100, %v100
    %vm106 = vcmask 130048
    %v107 = vsel %vm106, %v102, 0
    %109 = vmatprep.subr.mxu0 0.0
    %110 = vmatpush1.msra.mxu0 %v43
    %111 = vmatprep.subr.mxu0 0.0
    %112 = vmatpush1.msra.mxu0 %v42
    %113 = vmatprep.subr.mxu0 0.0
    %114 = vmatpush1.msra.mxu0 %v41
    %115 = vmatprep.subr.mxu0 0.0
    %116 = vmatpush1.msra.mxu0 %v40
    %117 = vmatprep.subr.mxu0 0.0
    %118 = vmatpush1.msra.mxu0 %v39
    %119 = vmatprep.subr.mxu0 0.0
    %120 = vmatpush1.msra.mxu0 %v38
    %121 = vmatprep.subr.mxu0 0.0
    %122 = vmatpush1.msra.mxu0 %v37
    %123 = vmatprep.subr.mxu0 0.0
    %124 = vmatpush1.msra.mxu0 %v36
    %125 = vmatprep.subr.mxu0 0.0
    %126 = vmatpush1.msra.mxu0 %v35
    %127 = vmatprep.subr.mxu0 0.0
    %128 = vmatpush1.msra.mxu0 %v34
    %129 = vmatprep.subr.mxu0 0.0
    %130 = vmatpush1.msra.mxu0 %v33
    %131 = vmatprep.subr.mxu0 0.0
    %132 = vmatpush1.msra.mxu0 %v32
    %133 = vmatprep.subr.mxu0 0.0
    %134 = vmatpush1.msra.mxu0 %v31
    %135 = vmatprep.subr.mxu0 0.0
    %136 = vmatpush1.msra.mxu0 %v30
    %137 = vmatprep.subr.mxu0 0.0
    %138 = vmatpush1.msra.mxu0 %v29
    %139 = vmatprep.subr.mxu0 0.0
    %140 = vmatpush1.msra.mxu0 %v28
    %141 = vmatprep.subr.mxu0 0.0
    %142 = vmatpush2.msra.mxu0 %v59
    %143 = vmatprep.subr.mxu0 0.0
    %144 = vmatpush2.msra.mxu0 %v58
    %145 = vmatprep.subr.mxu0 0.0
    %146 = vmatpush2.msra.mxu0 %v57
    %147 = vmatprep.subr.mxu0 0.0
    %148 = vmatpush2.msra.mxu0 %v56
    %149 = vmatprep.subr.mxu0 0.0
    %150 = vmatpush2.msra.mxu0 %v55
    %151 = vmatprep.subr.mxu0 0.0
    %152 = vmatpush2.msra.mxu0 %v54
    %153 = vmatprep.subr.mxu0 0.0
    %154 = vmatpush2.msra.mxu0 %v53
    %155 = vmatprep.subr.mxu0 0.0
    %156 = vmatpush2.msra.mxu0 %v52
    %157 = vmatprep.subr.mxu0 0.0
    %158 = vmatpush2.msra.mxu0 %v51
    %159 = vmatprep.subr.mxu0 0.0
    %160 = vmatpush2.msra.mxu0 %v50
    %161 = vmatprep.subr.mxu0 0.0
    %162 = vmatpush2.msra.mxu0 %v49
    %163 = vmatprep.subr.mxu0 0.0
    %164 = vmatpush2.msra.mxu0 %v48
    %165 = vmatprep.subr.mxu0 0.0
    %166 = vmatpush2.msra.mxu0 %v47
    %167 = vmatprep.subr.mxu0 0.0
    %168 = vmatpush2.msra.mxu0 %v46
    %169 = vmatprep.subr.mxu0 0.0
    %170 = vmatpush2.msra.mxu0 %v45
    %171 = vmatprep.subr.mxu0 0.0
    %172 = vmatpush2.msra.mxu0 %v44
    %173 = vmatprep.mubr.f32.mxu0 %v101
    %174 = vmatmul.mubr.f32.gmra.mxu0 %v93
    %v175 = vpop.f32.mrf.mxu0
    %v176 = vadd.f32 %v83, %v175
    %v177 = vpop.f32.mrf.mxu0
    %178 = vdwg.mxu0
    %179 = vmatprep.subr.mxu0 0.0
    %180 = vmatpush1.msra.mxu0 %v75
    %181 = vmatprep.subr.mxu0 0.0
    %182 = vmatpush1.msra.mxu0 %v74
    %183 = vmatprep.subr.mxu0 0.0
    %184 = vmatpush1.msra.mxu0 %v73
    %185 = vmatprep.subr.mxu0 0.0
    %186 = vmatpush1.msra.mxu0 %v72
    %187 = vmatprep.subr.mxu0 0.0
    %188 = vmatpush1.msra.mxu0 %v71
    %189 = vmatprep.subr.mxu0 0.0
    %190 = vmatpush1.msra.mxu0 %v70
    %191 = vmatprep.subr.mxu0 0.0
    %192 = vmatpush1.msra.mxu0 %v69
    %193 = vmatprep.subr.mxu0 0.0
    %194 = vmatpush1.msra.mxu0 %v68
    %195 = vmatprep.subr.mxu0 0.0
    %196 = vmatpush1.msra.mxu0 %v67
    %197 = vmatprep.subr.mxu0 0.0
    %198 = vmatpush1.msra.mxu0 %v66
    %199 = vmatprep.subr.mxu0 0.0
    %200 = vmatpush1.msra.mxu0 %v65
    %201 = vmatprep.subr.mxu0 0.0
    %202 = vmatpush1.msra.mxu0 %v64
    %203 = vmatprep.subr.mxu0 0.0
    %204 = vmatpush1.msra.mxu0 %v63
    %205 = vmatprep.subr.mxu0 0.0
    %206 = vmatpush1.msra.mxu0 %v62
    %207 = vmatprep.subr.mxu0 0.0
    %208 = vmatpush1.msra.mxu0 %v61
    %209 = vmatprep.subr.mxu0 0.0
    %210 = vmatpush1.msra.mxu0 %v60
    %211 = vmatprep.subr.mxu0 0.0
    %212 = vmatpush2.msra.mxu0 0.0
    %213 = vmatprep.subr.mxu0 0.0
    %214 = vmatpush2.msra.mxu0 0.0
    %215 = vmatprep.subr.mxu0 0.0
    %216 = vmatpush2.msra.mxu0 0.0
    %217 = vmatprep.subr.mxu0 0.0
    %218 = vmatpush2.msra.mxu0 0.0
    %219 = vmatprep.subr.mxu0 0.0
    %220 = vmatpush2.msra.mxu0 0.0
    %221 = vmatprep.subr.mxu0 0.0
    %222 = vmatpush2.msra.mxu0 0.0
    %223 = vmatprep.subr.mxu0 0.0
    %224 = vmatpush2.msra.mxu0 0.0
    %225 = vmatprep.subr.mxu0 0.0
    %226 = vmatpush2.msra.mxu0 0.0
    %227 = vmatprep.subr.mxu0 0.0
    %228 = vmatpush2.msra.mxu0 0.0
    %229 = vmatprep.subr.mxu0 0.0
    %230 = vmatpush2.msra.mxu0 0.0
    %231 = vmatprep.subr.mxu0 0.0
    %232 = vmatpush2.msra.mxu0 0.0
    %233 = vmatprep.subr.mxu0 0.0
    %234 = vmatpush2.msra.mxu0 0.0
    %235 = vmatprep.subr.mxu0 0.0
    %236 = vmatpush2.msra.mxu0 0.0
    %237 = vmatprep.subr.mxu0 0.0
    %238 = vmatpush2.msra.mxu0 0.0
    %239 = vmatprep.subr.mxu0 0.0
    %240 = vmatpush2.msra.mxu0 %v77
    %241 = vmatprep.subr.mxu0 0.0
    %242 = vmatpush2.msra.mxu0 %v76
    %243 = vmatprep.mubr.f32.mxu0 %v107
    %244 = vmatmul.mubr.f32.gmra.mxu0 %v100
    %v245 = vpop.f32.mrf.mxu0
    %v246 = vadd.f32 %v176, %v245
    %v247 = vpop.f32.mrf.mxu0
    %248 = vdwg.mxu0
    %v249 = vmax.f32 %v246, 0.0
    %v250 = vld [vmem:[%s3] sm:$0xff]
    %v251 = vld [vmem:[%s3 + $0x8] sm:$0xff]
    %v252 = vld [vmem:[%s3 + $0x10] sm:$0xff]
    %v253 = vld [vmem:[%s3 + $0x18] sm:$0xff]
    %v254 = vld [vmem:[%s3 + $0x20] sm:$0xff]
    %v255 = vld [vmem:[%s3 + $0x28] sm:$0xff]
    %v256 = vld [vmem:[%s3 + $0x30] sm:$0xff]
    %v257 = vld [vmem:[%s3 + $0x38] sm:$0xff]
    %v258 = vld [vmem:[%s3 + $0x40] sm:$0xff]
    %v259 = vld [vmem:[%s3 + $0x48] sm:$0xff]
    %v260 = vld [vmem:[%s3 + $0x50] sm:$0xff]
    %v261 = vld [vmem:[%s3 + $0x58] sm:$0xff]
    %v262 = vld [vmem:[%s3 + $0x60] sm:$0xff]
    %v263 = vld [vmem:[%s3 + $0x68] sm:$0xff]
    %v264 = vld [vmem:[%s3 + $0x70] sm:$0xff]
    %v265 = vld [vmem:[%s3 + $0x78] sm:$0xff]
    %v266 = vld [vmem:[%s4] sm:$0x1]
    %v268 = vlaneseq
    %v269 = vshrl.u32 %v268, 7
    %v270 = vsub.s32 0, %v269
    %v271 = vrot.slane %v266, %v270
    %273 = vmatprep.subr.mxu0 0.0
    %274 = vmatpush1.msra.mxu0 %v265
    %275 = vmatprep.subr.mxu0 0.0
    %276 = vmatpush1.msra.mxu0 %v264
    %277 = vmatprep.subr.mxu0 0.0
    %278 = vmatpush1.msra.mxu0 %v263
    %279 = vmatprep.subr.mxu0 0.0
    %280 = vmatpush1.msra.mxu0 %v262
    %281 = vmatprep.subr.mxu0 0.0
    %282 = vmatpush1.msra.mxu0 %v261
    %283 = vmatprep.subr.mxu0 0.0
    %284 = vmatpush1.msra.mxu0 %v260
    %285 = vmatprep.subr.mxu0 0.0
    %286 = vmatpush1.msra.mxu0 %v259
    %287 = vmatprep.subr.mxu0 0.0
    %288 = vmatpush1.msra.mxu0 %v258
    %289 = vmatprep.subr.mxu0 0.0
    %290 = vmatpush1.msra.mxu0 %v257
    %291 = vmatprep.subr.mxu0 0.0
    %292 = vmatpush1.msra.mxu0 %v256
    %293 = vmatprep.subr.mxu0 0.0
    %294 = vmatpush1.msra.mxu0 %v255
    %295 = vmatprep.subr.mxu0 0.0
    %296 = vmatpush1.msra.mxu0 %v254
    %297 = vmatprep.subr.mxu0 0.0
    %298 = vmatpush1.msra.mxu0 %v253
    %299 = vmatprep.subr.mxu0 0.0
    %300 = vmatpush1.msra.mxu0 %v252
    %301 = vmatprep.subr.mxu0 0.0
    %302 = vmatpush1.msra.mxu0 %v251
    %303 = vmatprep.subr.mxu0 0.0
    %304 = vmatpush1.msra.mxu0 %v250
    %305 = vmatprep.subr.mxu0 0.0
    %306 = vmatpush2.msra.mxu0 0.0
    %307 = vmatprep.subr.mxu0 0.0
    %308 = vmatpush2.msra.mxu0 0.0
    %309 = vmatprep.subr.mxu0 0.0
    %310 = vmatpush2.msra.mxu0 0.0
    %311 = vmatprep.subr.mxu0 0.0
    %312 = vmatpush2.msra.mxu0 0.0
    %313 = vmatprep.subr.mxu0 0.0
    %314 = vmatpush2.msra.mxu0 0.0
    %315 = vmatprep.subr.mxu0 0.0
    %316 = vmatpush2.msra.mxu0 0.0
    %317 = vmatprep.subr.mxu0 0.0
    %318 = vmatpush2.msra.mxu0 0.0
    %319 = vmatprep.subr.mxu0 0.0
    %320 = vmatpush2.msra.mxu0 0.0
    %321 = vmatprep.subr.mxu0 0.0
    %322 = vmatpush2.msra.mxu0 0.0
    %323 = vmatprep.subr.mxu0 0.0
    %324 = vmatpush2.msra.mxu0 0.0
    %325 = vmatprep.subr.mxu0 0.0
    %326 = vmatpush2.msra.mxu0 0.0
    %327 = vmatprep.subr.mxu0 0.0
    %328 = vmatpush2.msra.mxu0 0.0
    %329 = vmatprep.subr.mxu0 0.0
    %330 = vmatpush2.msra.mxu0 0.0
    %331 = vmatprep.subr.mxu0 0.0
    %332 = vmatpush2.msra.mxu0 0.0
    %333 = vmatprep.subr.mxu0 0.0
    %334 = vmatpush2.msra.mxu0 0.0
    %335 = vmatprep.subr.mxu0 0.0
    %336 = vmatpush2.msra.mxu0 0.0
    %337 = vmatprep.mubr.f32.mxu0 0.0
    %338 = vmatmul.mubr.f32.gmra.mxu0 %v249
    %v339 = vpop.f32.mrf.mxu0
    %v340 = vadd.f32 %v271, %v339
    %v341 = vpop.f32.mrf.mxu0
    %342 = vdwg.mxu0
    %v343 = vmax.f32 %v340, 0.0
    %v344 = vld [vmem:[%s5] sm:$0xff]
    %v345 = vld [vmem:[%s5 + $0x8] sm:$0xff]
    %v346 = vld [vmem:[%s5 + $0x10] sm:$0xff]
    %v347 = vld [vmem:[%s5 + $0x18] sm:$0xff]
    %v348 = vld [vmem:[%s5 + $0x20] sm:$0xff]
    %v349 = vld [vmem:[%s5 + $0x28] sm:$0xff]
    %v350 = vld [vmem:[%s5 + $0x30] sm:$0xff]
    %v351 = vld [vmem:[%s5 + $0x38] sm:$0xff]
    %v352 = vld [vmem:[%s5 + $0x40] sm:$0xff]
    %v353 = vld [vmem:[%s5 + $0x48] sm:$0xff]
    %v354 = vld [vmem:[%s5 + $0x50] sm:$0xff]
    %v355 = vld [vmem:[%s5 + $0x58] sm:$0xff]
    %v356 = vld [vmem:[%s5 + $0x60] sm:$0xff]
    %v357 = vld [vmem:[%s5 + $0x68] sm:$0xff]
    %v358 = vld [vmem:[%s5 + $0x70] sm:$0xff]
    %v359 = vld [vmem:[%s5 + $0x78] sm:$0xff]
    %v360 = vld [vmem:[%s6] sm:$0x1]
    %v362 = vlaneseq
    %v363 = vshrl.u32 %v362, 7
    %v364 = vsub.s32 0, %v363
    %v365 = vrot.slane %v360, %v364
    %367 = vmatprep.subr.mxu0 0.0
    %368 = vmatpush1.msra.mxu0 %v359
    %369 = vmatprep.subr.mxu0 0.0
    %370 = vmatpush1.msra.mxu0 %v358
    %371 = vmatprep.subr.mxu0 0.0
    %372 = vmatpush1.msra.mxu0 %v357
    %373 = vmatprep.subr.mxu0 0.0
    %374 = vmatpush1.msra.mxu0 %v356
    %375 = vmatprep.subr.mxu0 0.0
    %376 = vmatpush1.msra.mxu0 %v355
    %377 = vmatprep.subr.mxu0 0.0
    %378 = vmatpush1.msra.mxu0 %v354
    %379 = vmatprep.subr.mxu0 0.0
    %380 = vmatpush1.msra.mxu0 %v353
    %381 = vmatprep.subr.mxu0 0.0
    %382 = vmatpush1.msra.mxu0 %v352
    %383 = vmatprep.subr.mxu0 0.0
    %384 = vmatpush1.msra.mxu0 %v351
    %385 = vmatprep.subr.mxu0 0.0
    %386 = vmatpush1.msra.mxu0 %v350
    %387 = vmatprep.subr.mxu0 0.0
    %388 = vmatpush1.msra.mxu0 %v349
    %389 = vmatprep.subr.mxu0 0.0
    %390 = vmatpush1.msra.mxu0 %v348
    %391 = vmatprep.subr.mxu0 0.0
    %392 = vmatpush1.msra.mxu0 %v347
    %393 = vmatprep.subr.mxu0 0.0
    %394 = vmatpush1.msra.mxu0 %v346
    %395 = vmatprep.subr.mxu0 0.0
    %396 = vmatpush1.msra.mxu0 %v345
    %397 = vmatprep.subr.mxu0 0.0
    %398 = vmatpush1.msra.mxu0 %v344
    %399 = vmatprep.subr.mxu0 0.0
    %400 = vmatpush2.msra.mxu0 0.0
    %401 = vmatprep.subr.mxu0 0.0
    %402 = vmatpush2.msra.mxu0 0.0
    %403 = vmatprep.subr.mxu0 0.0
    %404 = vmatpush2.msra.mxu0 0.0
    %405 = vmatprep.subr.mxu0 0.0
    %406 = vmatpush2.msra.mxu0 0.0
    %407 = vmatprep.subr.mxu0 0.0
    %408 = vmatpush2.msra.mxu0 0.0
    %409 = vmatprep.subr.mxu0 0.0
    %410 = vmatpush2.msra.mxu0 0.0
    %411 = vmatprep.subr.mxu0 0.0
    %412 = vmatpush2.msra.mxu0 0.0
    %413 = vmatprep.subr.mxu0 0.0
    %414 = vmatpush2.msra.mxu0 0.0
    %415 = vmatprep.subr.mxu0 0.0
    %416 = vmatpush2.msra.mxu0 0.0
    %417 = vmatprep.subr.mxu0 0.0
    %418 = vmatpush2.msra.mxu0 0.0
    %419 = vmatprep.subr.mxu0 0.0
    %420 = vmatpush2.msra.mxu0 0.0
    %421 = vmatprep.subr.mxu0 0.0
    %422 = vmatpush2.msra.mxu0 0.0
    %423 = vmatprep.subr.mxu0 0.0
    %424 = vmatpush2.msra.mxu0 0.0
    %425 = vmatprep.subr.mxu0 0.0
    %426 = vmatpush2.msra.mxu0 0.0
    %427 = vmatprep.subr.mxu0 0.0
    %428 = vmatpush2.msra.mxu0 0.0
    %429 = vmatprep.subr.mxu0 0.0
    %430 = vmatpush2.msra.mxu0 0.0
    %431 = vmatprep.mubr.f32.mxu0 0.0
    %432 = vmatmul.mubr.f32.gmra.mxu0 %v343
    %v433 = vpop.f32.mrf.mxu0
    %v434 = vadd.f32 %v365, %v433
    %v435 = vpop.f32.mrf.mxu0
    %436 = vdwg.mxu0
    %vm437 = vcmask 74752
    %v438 = vsel %vm437, %v434, -inf
    %439 = vmax.xlane.f32.xlu0 %v438
    %v440 = vpop.xlane.xlu0 %439
    %v441 = vsub.f32 %v434, %v440
    %v442 = vmul.f32 %v441, 1.442695
    %v443 = vpow.pop %v442
    %v444 = vsel %vm437, %v443, 0.0
    %445 = vadd.xlane.f32.xlu0 %v444
    %v446 = vpop.xlane.xlu0 %445
    %v447 = vlog2.pop %v446
    %v448 = vmul.f32 %v447, 0.6931472
    %v449 = vadd.f32 %v448, %v440
    %v450 = vsub.f32 %v434, %v449
    %451 = vst.msk [vmem:[#allocation2] sm:$0x3] %vm437, %v450
    // Predicated region
    $region30: #{lenet5_forward.5} parent=1 // pred_check
      _
    $region31: #{lenet5_forward.5} parent=1 // pred_check_branch
      %453 = sbr.rel (0) target = $region33
    $region32: #{lenet5_forward.5} parent=1 // pred_region
      %s455 = ssub.s32 32, 32
      %456 = vsyncadd [#allocation3], %s455
      %s458 = sshll.u32 [#allocation2], 4
      %s459 = int_to_ptr.vmem [resolvable:$true] %s458
      %461 = dma.vmem_to_hbm [thread:$0]  %s459, 32, %s7, [#allocation3]
    $region33: #{lenet5_forward.5} parent=1 // pred_fallthru
      _
    // Predicated region
    $region34: #{lenet5_forward.5} parent=1 // pred_check
      _
    $region35: #{lenet5_forward.5} parent=1 // pred_check_branch
      %463 = sbr.rel (0) target = $region37
    $region36: #{lenet5_forward.5} parent=1 // pred_region
      %464 = dma.done [#allocation3], 32
    $region37: #{lenet5_forward.5} parent=1 // pred_fallthru
      _
    %465 = vsyncpa [#allocation3], 1

</llo_original>
